<compile_context>
chip_gen: v6e
topology: v6e:2x2x1
jax: 0.10.0
libtpu: 0.0.40
codegen_flags: <defaults>
</compile_context>

<pallas_src>
import math

import jax
import jax.numpy as jnp
from jax.experimental import pallas as pl
from jax.experimental.pallas import tpu as pltpu


K_CONV = 10   # every conv in the model uses kernel size 10 (incl. the fused conv1*conv2)
POOL_K = 3    # MaxPool1d(kernel=3, stride=3)
AVG_K = 10    # AvgPool2d(10, stride=(8*C0, 1)) -> mean over channels 0..9 x 10 time steps

# pltpu.roll rotation direction, resolved once on-device by probe_roll_direction():
#   +1 -> jnp.roll semantics (positive shift moves data to higher lane indices)
#   -1 -> opposite direction
#   None -> roll not probed/unavailable: fall back to slice+concat lane rotation.
_ROLL_SIGN = None


def probe_roll_direction():
    """One-time tiny device probe to pin down pltpu.roll's rotation direction."""
    global _ROLL_SIGN
    try:
        def _k(x_ref, o_ref):
            o_ref[...] = pltpu.roll(x_ref[...], 1, axis=1)

        x = jnp.broadcast_to(jnp.arange(128, dtype=jnp.float32), (8, 128))
        y = jax.device_get(
            pl.pallas_call(_k, out_shape=jax.ShapeDtypeStruct((8, 128), jnp.float32))(x))
        if float(y[0, 0]) == 127.0 and float(y[0, 1]) == 0.0:
            _ROLL_SIGN = 1          # jnp.roll-like
        elif float(y[0, 0]) == 1.0 and float(y[0, 127]) == 0.0:
            _ROLL_SIGN = -1
        else:
            _ROLL_SIGN = None
    except Exception:
        _ROLL_SIGN = None


def _lane_shift_left(x, k):
    """Full-width lane rotation: result[:, i] = x[:, (i + k) % W] (XLU path via roll)."""
    if k == 0:
        return x
    w = x.shape[-1]
    if _ROLL_SIGN == 1:
        return pltpu.roll(x, w - k, axis=1)
    if _ROLL_SIGN == -1:
        return pltpu.roll(x, k, axis=1)
    # Fallback (roll unavailable/unprobed): equivalent rotation from slices + concat.
    return jnp.concatenate([x[:, k:], x[:, :k]], axis=1)


# ----------------------------------------------------------------------------
# Fused Pallas kernel (one grid step == Bg batch elements, everything in VMEM)
# ----------------------------------------------------------------------------
def _deep_model_kernel(x_ref,
                       w1_ref, b1_ref,
                       w2_ref, b2_ref, sel2_ref,
                       w3_ref, b3_ref, sel3_ref,
                       w4_ref, b4_ref, sel4_ref,
                       avg_c_ref, band_ref,
                       o_ref,
                       col_ref):
    """Fully fused DeepModel forward for Bg lane-merged batch elements."""

    def conv_bn_elu(act, w_ref, b_ref):
        # act: (C_in, W) f32, W = Bg * (128-padded segment).  Valid Conv1d via im2col:
        # K rolled full-width copies stacked along sublanes (unmasked stores), then ONE
        # MXU matmul with contraction depth K*C_in.  Columns beyond each segment's valid
        # range are garbage but finite and are never selected downstream.
        c_in, w_lanes = act.shape
        for k in range(K_CONV):                                   # static, unrolled
            col_ref[k * c_in:(k + 1) * c_in, 0:w_lanes] = _lane_shift_left(act, k)
        col = col_ref[0:K_CONV * c_in, 0:w_lanes]
        y = jnp.dot(w_ref[...], col, preferred_element_type=jnp.float32) + b_ref[...]
        # ELU(alpha=1).  exp(y)-1 instead of expm1: worst-case f32 error ~1e-7 for y<0.
        # TODO(synk): switch to jnp.expm1 once its Mosaic lowering is confirmed everywhere.
        return jnp.where(y > 0.0, y, jnp.exp(y) - 1.0)

    def maxpool3(y, sel_ref):
        # MaxPool1d(3,3): 3-way rolled max, then exact 0/1 selector matmul that both
        # picks every 3rd valid column and compacts into the next stage's 128-padded
        # segments (invalid columns come out exactly 0).  Both operands bf16 -> one
        # native MXU pass; the selector is exact so only the values are bf16-rounded.
        m = jnp.maximum(jnp.maximum(y, _lane_shift_left(y, 1)), _lane_shift_left(y, 2))
        return jnp.dot(m.astype(jnp.bfloat16), sel_ref[...],
                       preferred_element_type=jnp.float32)

    y = conv_bn_elu(x_ref[0], w1_ref, b1_ref)                     # fused conv1+conv2+bn1+elu
    y = maxpool3(conv_bn_elu(y, w2_ref, b2_ref), sel2_ref)        # conv_pool2
    y = maxpool3(conv_bn_elu(y, w3_ref, b3_ref), sel3_ref)        # conv_pool3
    y = maxpool3(conv_bn_elu(y, w4_ref, b4_ref), sel4_ref)        # conv_pool4

    # AvgPool2d(10, stride=(8*C0, 1)): exact 0/1 channel-sum (rows 1..7 are zero pad so
    # M is a full sublane tile) + exact 0/1 banded 10-wide time-window sum, both on the
    # MXU in bf16; single f32 scale by 1/100 at the end.  Output block is lane-dense.
    row = jnp.dot(avg_c_ref[...], y.astype(jnp.bfloat16), preferred_element_type=jnp.float32)
    out = jnp.dot(row.astype(jnp.bfloat16), band_ref[...], preferred_element_type=jnp.float32)
    o_ref[0] = out * (1.0 / (AVG_K * AVG_K))


# ----------------------------------------------------------------------------
# Wrapper: parameter folding, lane-segment layout, pallas_call plumbing
# ----------------------------------------------------------------------------
def _seg_pad(n):
    return -(-n // 128) * 128


def _num_batch_groups(batch):
    # v7x has 2 TensorCores/chip: keep a 2-way "parallel" grid so both cores get work.
    # Single-TC chips (v5e/v6e): fold the whole batch into ONE grid step (one fused pass).
    try:
        kind = jax.devices()[0].device_kind.lower()
    except Exception:
        kind = ""
    two_tc = ("v7" in kind) or ("7x" in kind)
    return 2 if (two_tc and batch % 2 == 0 and batch >= 2) else 1


def deep_model_forward(x, p, input_channels, init_channels):
    """x: (B, IC, T) f32 -> (B, L_out) f32, matching DeepModel.forward (eval-mode BN)."""
    IC, C0 = input_channels, init_channels
    B, _, T = x.shape
    eps = 1e-5

    G = _num_batch_groups(B)          # grid size (trace-time constant)
    Bg = B // G                       # batch elements merged per grid step

    # Stage 1: per-input-channel conv1 followed by conv2 over the (channel, C0) plane is
    # exactly one Conv1d with effective weights (tiny weight-space contraction = glue).
    Weff = jnp.einsum('oih,hk->oik', p['conv2_w'][..., 0], p['conv1_w'][:, 0, :])  # (C0, IC, K)
    beff = jnp.einsum('oih,h->o', p['conv2_w'][..., 0], p['conv1_b']) + p['conv2_b']

    # Zero-pad input channels up to a multiple of 8 so im2col sublane writes are aligned.
    ICp = -(-IC // 8) * 8
    Weff = jnp.pad(Weff, ((0, 0), (0, ICp - IC), (0, 0)))

    # Lane geometry: each batch element owns a 128-padded lane segment per stage.
    Lp0 = _seg_pad(T)
    L1 = T - K_CONV + 1                                   # stage-1 valid len (no pool)
    assert L1 >= K_CONV, "sequence too short for the conv stack"
    L2c = L1 - K_CONV + 1
    assert L2c >= POOL_K
    L2 = (L2c - POOL_K) // POOL_K + 1
    Lp2 = _seg_pad(L2)
    assert L2 >= K_CONV
    L3c = L2 - K_CONV + 1
    assert L3c >= POOL_K
    L3 = (L3c - POOL_K) // POOL_K + 1
    Lp3 = _seg_pad(L3)
    assert L3 >= K_CONV
    L4c = L3 - K_CONV + 1
    assert L4c >= POOL_K
    L4 = (L4c - POOL_K) // POOL_K + 1
    Lp4 = _seg_pad(L4)
    C4 = 8 * C0
    assert L4 >= AVG_K and C4 >= AVG_K, "final feature map too small for AvgPool2d(10)"
    L_out = L4 - AVG_K + 1

    # Pad (channels, time) with zeros and merge Bg batch elements side by side along lanes.
    x_p = jnp.pad(x.astype(jnp.float32), ((0, 0), (0, ICp - IC), (0, Lp0 - T)))
    x_m = x_p.reshape(G, Bg, ICp, Lp0).transpose(0, 2, 1, 3).reshape(G, ICp, Bg * Lp0)

    # BN(eval) scale folded straight into the im2col-flattened conv weights (f32; the MXU
    # accumulates in f32); only a per-channel shift remains in-kernel.
    def fold(w, b, g, beta, mean, var):
        C_out, C_in, Kw = w.shape
        scale = g / jnp.sqrt(var + eps)
        shift = (scale * (b - mean) + beta).reshape(C_out, 1).astype(jnp.float32)
        w_flat = (jnp.transpose(w, (0, 2, 1)).reshape(C_out, Kw * C_in)
                  * scale.reshape(C_out, 1)).astype(jnp.float32)
        return w_flat, shift

    w1, b1 = fold(Weff, beff, p['bn1_gamma'], p['bn1_beta'], p['bn1_mean'], p['bn1_var'])
    w2, b2 = fold(p['cp2_w'], p['cp2_b'], p['cp2_gamma'], p['cp2_beta'],
                  p['cp2_mean'], p['cp2_var'])
    w3, b3 = fold(p['cp3_w'], p['cp3_b'], p['cp3_gamma'], p['cp3_beta'],
                  p['cp3_mean'], p['cp3_var'])
    w4, b4 = fold(p['cp4_w'], p['cp4_b'], p['cp4_gamma'], p['cp4_beta'],
                  p['cp4_mean'], p['cp4_var'])

    # Exact 0/1 bf16 selectors: stride-3 column pick + compaction into the next stage's
    # 128-padded, per-batch-element lane segments (block-diagonal over the Bg segments).
    def pool_selector(lp_in, lp_out, l_pool):
        qi = jax.lax.broadcasted_iota(jnp.int32, (Bg * lp_in, Bg * lp_out), 0)
        ri = jax.lax.broadcasted_iota(jnp.int32, (Bg * lp_in, Bg * lp_out), 1)
        same_seg = (qi // lp_in) == (ri // lp_out)
        oq, orr = qi % lp_in, ri % lp_out
        sel = same_seg & (orr < l_pool) & (oq == POOL_K * orr)
        return sel.astype(jnp.bfloat16)

    sel2 = pool_selector(Lp0, Lp2, L2)
    sel3 = pool_selector(Lp2, Lp3, L3)
    sel4 = pool_selector(Lp3, Lp4, L4)

    # Exact 0/1 epilogue operands (scale 1/100 is applied once, in f32, in the kernel):
    # row 0 of avg_c sums channels 0..9 (rows 1..7 zero pad); band sums each 10-wide
    # time window inside every batch segment.
    avg_c = jnp.zeros((8, C4), jnp.float32).at[0, :AVG_K].set(1.0).astype(jnp.bfloat16)
    qi = jax.lax.broadcasted_iota(jnp.int32, (Bg * Lp4, Bg * Lp4), 0)
    ri = jax.lax.broadcasted_iota(jnp.int32, (Bg * Lp4, Bg * Lp4), 1)
    same_seg = (qi // Lp4) == (ri // Lp4)
    oq, orr = qi % Lp4, ri % Lp4
    band = (same_seg & (orr < L_out) & (oq >= orr) & (oq < orr + AVG_K)).astype(jnp.bfloat16)

    operands = [x_m,
                w1, b1,
                w2, b2, sel2,
                w3, b3, sel3,
                w4, b4, sel4,
                avg_c, band]

    def _const_spec(a):
        # Full-array block, constant index -> stays VMEM-resident across grid steps.
        return pl.BlockSpec(a.shape, lambda g: (0,) * a.ndim)

    in_specs = [pl.BlockSpec((1, ICp, Bg * Lp0), lambda g: (g, 0, 0))]
    in_specs += [_const_spec(a) for a in operands[1:]]

    # Shared im2col scratch: big enough for the widest stage (rows) and widest lane width.
    col_rows = K_CONV * max(ICp, C0, 2 * C0, 4 * C0)
    col_cols = Bg * max(Lp0, Lp2, Lp3)

    out3 = pl.pallas_call(
        _deep_model_kernel,
        out_shape=jax.ShapeDtypeStruct((G, 8, Bg * Lp4), jnp.float32),
        grid_spec=pltpu.PrefetchScalarGridSpec(
            num_scalar_prefetch=0,
            grid=(G,),                                            # 1 step (v5e/v6e) or 2 (v7x)
            in_specs=in_specs,
            out_specs=pl.BlockSpec((1, 8, Bg * Lp4), lambda g: (g, 0, 0)),
            scratch_shapes=[pltpu.VMEM((col_rows, col_cols), jnp.float32)],
        ),
        compiler_params=pltpu.CompilerParams(dimension_semantics=("parallel",)),
    )(*operands)

    # Row 0 of each group holds the per-segment results; un-merge segments -> (B, L_out).
    return out3[:, 0, :].reshape(B, Lp4)[:, :L_out]


# ----------------------------------------------------------------------------
# Parameter setup (plain-JAX glue)
# ----------------------------------------------------------------------------
def init_params(key, input_channels, init_channels):
    IC, C0 = input_channels, init_channels
    ks = jax.random.split(key, 32)
    ki = iter(range(32))

    def uconv(k, shape, fan_in):
        b = 1.0 / math.sqrt(fan_in)
        return jax.random.uniform(k, shape, jnp.float32, -b, b)

    def bn_params(kg, kb, km, kv, c):
        return (1.0 + 0.1 * jax.random.normal(kg, (c,), jnp.float32),   # gamma
                0.1 * jax.random.normal(kb, (c,), jnp.float32),         # beta
                0.1 * jax.random.normal(km, (c,), jnp.float32),         # running_mean
                jnp.abs(1.0 + 0.1 * jax.random.normal(kv, (c,), jnp.float32)))  # running_var

    p = {}
    p['conv1_w'] = uconv(ks[next(ki)], (C0, 1, 10), 1 * 10)
    p['conv1_b'] = uconv(ks[next(ki)], (C0,), 1 * 10)
    p['conv2_w'] = uconv(ks[next(ki)], (C0, IC, C0, 1), IC * C0 * 1)
    p['conv2_b'] = uconv(ks[next(ki)], (C0,), IC * C0 * 1)
    p['bn1_gamma'], p['bn1_beta'], p['bn1_mean'], p['bn1_var'] = bn_params(
        ks[next(ki)], ks[next(ki)], ks[next(ki)], ks[next(ki)], C0)

    chans = {2: (C0, 2 * C0), 3: (2 * C0, 4 * C0), 4: (4 * C0, 8 * C0)}
    for s, (cin, cout) in chans.items():
        p[f'cp{s}_w'] = uconv(ks[next(ki)], (cout, cin, 10), cin * 10)
        p[f'cp{s}_b'] = uconv(ks[next(ki)], (cout,), cin * 10)
        (p[f'cp{s}_gamma'], p[f'cp{s}_beta'],
         p[f'cp{s}_mean'], p[f'cp{s}_var']) = bn_params(
            ks[next(ki)], ks[next(ki)], ks[next(ki)], ks[next(ki)], cout)
    return p


# ----------------------------------------------------------------------------
# Pure-JAX reference (mirrors the PyTorch forward, eval-mode BN)
# ----------------------------------------------------------------------------
def reference_forward(x, p, input_channels, init_channels):
    HP = jax.lax.Precision.HIGHEST

    def conv1d(z, w, b):
        y = jax.lax.conv_general_dilated(z, w, (1,), 'VALID',
                                         dimension_numbers=('NCH', 'OIH', 'NCH'),
                                         precision=HP)
        return y + b[None, :, None]

    def bn(z, g, bb, m, v):
        return g[None, :, None] * (z - m[None, :, None]) / jnp.sqrt(v[None, :, None] + 1e-5) \
               + bb[None, :, None]

    def elu(z):
        return jnp.where(z > 0, z, jnp.expm1(z))

    def maxpool3(z):
        B, C, L = z.shape
        Lp = (L - 3) // 3 + 1
        return jnp.max(z[:, :, :3 * Lp].reshape(B, C, Lp, 3), axis=-1)

    outs = [conv1d(x[:, i:i + 1, :], p['conv1_w'], p['conv1_b'])[:, None]
            for i in range(input_channels)]
    xc = jnp.concatenate(outs, axis=1)                                   # (B, IC, C0, L1)
    y = jax.lax.conv_general_dilated(xc, p['conv2_w'], (1, 1), 'VALID',
                                     dimension_numbers=('NCHW', 'OIHW', 'NCHW'),
                                     precision=HP)
    y = y + p['conv2_b'][None, :, None, None]
    y = y[:, :, 0, :]
    y = elu(bn(y, p['bn1_gamma'], p['bn1_beta'], p['bn1_mean'], p['bn1_var']))

    for s in (2, 3, 4):
        y = conv1d(y, p[f'cp{s}_w'], p[f'cp{s}_b'])
        y = elu(bn(y, p[f'cp{s}_gamma'], p[f'cp{s}_beta'], p[f'cp{s}_mean'], p[f'cp{s}_var']))
        y = maxpool3(y)

    B, CH, L = y.shape
    Lo = L - 9
    out = jnp.stack([jnp.mean(y[:, :10, t:t + 10], axis=(1, 2)) for t in range(Lo)], axis=1)
    return out


# ----------------------------------------------------------------------------
if __name__ == "__main__":
    # Small shapes consistent with the module (length must survive 4 valid convs with
    # kernel 10, three 3x-downsamples, and the final 10-wide avg window).
    B, IC, C0, T = 2, 3, 8, 400   # input_channels=3, init_channels=8, seq len=400

    key = jax.random.PRNGKey(0)
    kx, kp = jax.random.split(key)
    x = jax.random.normal(kx, (B, IC, T), jnp.float32)
    params = init_params(kp, IC, C0)

    probe_roll_direction()        # resolve pltpu.roll direction once, before tracing

    fwd = jax.jit(deep_model_forward, static_argnums=(2, 3))
    out = jax.block_until_ready(fwd(x, params, IC, C0))

    ref = reference_forward(x, params, IC, C0)
    assert out.shape == ref.shape, (out.shape, ref.shape)
    err = float(jnp.max(jnp.abs(out - ref)))
    scl = float(jnp.max(jnp.abs(ref)))
    assert err <= 2e-2 * max(1.0, scl), f"mismatch: err={err}, scale={scl}"

    print("KERNEL_OK")
</pallas_src>

<mosaic_0001>
module attributes {stable_mosaic.version = 11 : i64} {
  func.func @_k(%arg0: memref<8x128xf32, #tpu.memory_space<vmem>>, %arg1: memref<8x128xf32, #tpu.memory_space<vmem>>) attributes {dimension_semantics = [], scalar_prefetch = 0 : i64, scratch_operands = 0 : i64, tpu.core_type = #tpu.core_type<tc>} {
    %c0 = arith.constant 0 : index
    %c0_0 = arith.constant 0 : index
    %0 = vector.load %arg0[%c0, %c0_0] : memref<8x128xf32, #tpu.memory_space<vmem>>, vector<8x128xf32>
    %c1_i32 = arith.constant 1 : i32
    %1 = tpu.dynamic_rotate %0 by %c1_i32 dim 1 : vector<8x128xf32>, i32 -> vector<8x128xf32>
    %c0_1 = arith.constant 0 : index
    %c0_2 = arith.constant 0 : index
    %2 = vector.load %arg1[%c0_1, %c0_2] : memref<8x128xf32, #tpu.memory_space<vmem>>, vector<8x128xf32>
    tpu.vector_store %arg1[%c0_1, %c0_2], %1 {strides = array<i32>} : memref<8x128xf32, #tpu.memory_space<vmem>>, vector<8x128xf32>,
    return
  }
}

module attributes {stable_mosaic.version = 11 : i64} {
  func.func @_deep_model_kernel(%arg0: i32, %arg1: memref<1x8x1024xf32, #tpu.memory_space<vmem>>, %arg2: memref<8x80xf32, #tpu.memory_space<vmem>>, %arg3: memref<8x1xf32, #tpu.memory_space<vmem>>, %arg4: memref<16x80xf32, #tpu.memory_space<vmem>>, %arg5: memref<16x1xf32, #tpu.memory_space<vmem>>, %arg6: memref<1024x256xbf16, #tpu.memory_space<vmem>>, %arg7: memref<32x160xf32, #tpu.memory_space<vmem>>, %arg8: memref<32x1xf32, #tpu.memory_space<vmem>>, %arg9: memref<256x256xbf16, #tpu.memory_space<vmem>>, %arg10: memref<64x320xf32, #tpu.memory_space<vmem>>, %arg11: memref<64x1xf32, #tpu.memory_space<vmem>>, %arg12: memref<256x256xbf16, #tpu.memory_space<vmem>>, %arg13: memref<8x64xbf16, #tpu.memory_space<vmem>>, %arg14: memref<256x256xbf16, #tpu.memory_space<vmem>>, %arg15: memref<1x8x256xf32, #tpu.memory_space<vmem>>, %arg16: memref<320x1024xf32, #tpu.memory_space<vmem>>) attributes {dimension_semantics = [#tpu.dimension_semantics<parallel>], iteration_bounds = array<i64: 1>, scalar_prefetch = 0 : i64, scratch_operands = 1 : i64, tpu.core_type = #tpu.core_type<tc>, window_params = [{transform_indices = @transform_0, window_bounds = array<i64: 1, 8, 1024>}, {pipeline_mode = #tpu.pipeline_mode<synchronous>, transform_indices = @transform_1, window_bounds = array<i64: 8, 80>}, {pipeline_mode = #tpu.pipeline_mode<synchronous>, transform_indices = @transform_2, window_bounds = array<i64: 8, 1>}, {pipeline_mode = #tpu.pipeline_mode<synchronous>, transform_indices = @transform_3, window_bounds = array<i64: 16, 80>}, {pipeline_mode = #tpu.pipeline_mode<synchronous>, transform_indices = @transform_4, window_bounds = array<i64: 16, 1>}, {pipeline_mode = #tpu.pipeline_mode<synchronous>, transform_indices = @transform_5, window_bounds = array<i64: 1024, 256>}, {pipeline_mode = #tpu.pipeline_mode<synchronous>, transform_indices = @transform_6, window_bounds = array<i64: 32, 160>}, {pipeline_mode = #tpu.pipeline_mode<synchronous>, transform_indices = @transform_7, window_bounds = array<i64: 32, 1>}, {pipeline_mode = #tpu.pipeline_mode<synchronous>, transform_indices = @transform_8, window_bounds = array<i64: 256, 256>}, {pipeline_mode = #tpu.pipeline_mode<synchronous>, transform_indices = @transform_9, window_bounds = array<i64: 64, 320>}, {pipeline_mode = #tpu.pipeline_mode<synchronous>, transform_indices = @transform_10, window_bounds = array<i64: 64, 1>}, {pipeline_mode = #tpu.pipeline_mode<synchronous>, transform_indices = @transform_11, window_bounds = array<i64: 256, 256>}, {pipeline_mode = #tpu.pipeline_mode<synchronous>, transform_indices = @transform_12, window_bounds = array<i64: 8, 64>}, {pipeline_mode = #tpu.pipeline_mode<synchronous>, transform_indices = @transform_13, window_bounds = array<i64: 256, 256>}, {transform_indices = @transform_14, window_bounds = array<i64: 1, 8, 256>}]} {
    %c0 = arith.constant 0 : index
    %c0_0 = arith.constant 0 : index
    %c0_1 = arith.constant 0 : index
    %0 = vector.load %arg1[%c0, %c0_0, %c0_1] : memref<1x8x1024xf32, #tpu.memory_space<vmem>>, vector<1x8x1024xf32>
    %1 = vector.shape_cast %0 : vector<1x8x1024xf32> to vector<8x1024xf32>
    %c0_2 = arith.constant 0 : index
    %c0_3 = arith.constant 0 : index
    %2 = vector.load %arg16[%c0_2, %c0_3] : memref<320x1024xf32, #tpu.memory_space<vmem>>, vector<8x1024xf32>
    tpu.vector_store %arg16[%c0_2, %c0_3], %1 {strides = array<i32>} : memref<320x1024xf32, #tpu.memory_space<vmem>>, vector<8x1024xf32>,
    %3 = vector.extract_strided_slice %1 {offsets = [0, 1], sizes = [8, 1023], strides = [1, 1]} : vector<8x1024xf32> to vector<8x1023xf32>
    %4 = vector.extract_strided_slice %1 {offsets = [0, 0], sizes = [8, 1], strides = [1, 1]} : vector<8x1024xf32> to vector<8x1xf32>
    %5 = tpu.concatenate %3, %4 in 1 : vector<8x1023xf32>, vector<8x1xf32> -> vector<8x1024xf32>
    %c8 = arith.constant 8 : index
    %c0_4 = arith.constant 0 : index
    %6 = vector.load %arg16[%c8, %c0_4] : memref<320x1024xf32, #tpu.memory_space<vmem>>, vector<8x1024xf32>
    tpu.vector_store %arg16[%c8, %c0_4], %5 {strides = array<i32>} : memref<320x1024xf32, #tpu.memory_space<vmem>>, vector<8x1024xf32>,
    %7 = vector.extract_strided_slice %1 {offsets = [0, 2], sizes = [8, 1022], strides = [1, 1]} : vector<8x1024xf32> to vector<8x1022xf32>
    %8 = vector.extract_strided_slice %1 {offsets = [0, 0], sizes = [8, 2], strides = [1, 1]} : vector<8x1024xf32> to vector<8x2xf32>
    %9 = tpu.concatenate %7, %8 in 1 : vector<8x1022xf32>, vector<8x2xf32> -> vector<8x1024xf32>
    %c16 = arith.constant 16 : index
    %c0_5 = arith.constant 0 : index
    %10 = vector.load %arg16[%c16, %c0_5] : memref<320x1024xf32, #tpu.memory_space<vmem>>, vector<8x1024xf32>
    tpu.vector_store %arg16[%c16, %c0_5], %9 {strides = array<i32>} : memref<320x1024xf32, #tpu.memory_space<vmem>>, vector<8x1024xf32>,
    %11 = vector.extract_strided_slice %1 {offsets = [0, 3], sizes = [8, 1021], strides = [1, 1]} : vector<8x1024xf32> to vector<8x1021xf32>
    %12 = vector.extract_strided_slice %1 {offsets = [0, 0], sizes = [8, 3], strides = [1, 1]} : vector<8x1024xf32> to vector<8x3xf32>
    %13 = tpu.concatenate %11, %12 in 1 : vector<8x1021xf32>, vector<8x3xf32> -> vector<8x1024xf32>
    %c24 = arith.constant 24 : index
    %c0_6 = arith.constant 0 : index
    %14 = vector.load %arg16[%c24, %c0_6] : memref<320x1024xf32, #tpu.memory_space<vmem>>, vector<8x1024xf32>
    tpu.vector_store %arg16[%c24, %c0_6], %13 {strides = array<i32>} : memref<320x1024xf32, #tpu.memory_space<vmem>>, vector<8x1024xf32>,
    %15 = vector.extract_strided_slice %1 {offsets = [0, 4], sizes = [8, 1020], strides = [1, 1]} : vector<8x1024xf32> to vector<8x1020xf32>
    %16 = vector.extract_strided_slice %1 {offsets = [0, 0], sizes = [8, 4], strides = [1, 1]} : vector<8x1024xf32> to vector<8x4xf32>
    %17 = tpu.concatenate %15, %16 in 1 : vector<8x1020xf32>, vector<8x4xf32> -> vector<8x1024xf32>
    %c32 = arith.constant 32 : index
    %c0_7 = arith.constant 0 : index
    %18 = vector.load %arg16[%c32, %c0_7] : memref<320x1024xf32, #tpu.memory_space<vmem>>, vector<8x1024xf32>
    tpu.vector_store %arg16[%c32, %c0_7], %17 {strides = array<i32>} : memref<320x1024xf32, #tpu.memory_space<vmem>>, vector<8x1024xf32>,
    %19 = vector.extract_strided_slice %1 {offsets = [0, 5], sizes = [8, 1019], strides = [1, 1]} : vector<8x1024xf32> to vector<8x1019xf32>
    %20 = vector.extract_strided_slice %1 {offsets = [0, 0], sizes = [8, 5], strides = [1, 1]} : vector<8x1024xf32> to vector<8x5xf32>
    %21 = tpu.concatenate %19, %20 in 1 : vector<8x1019xf32>, vector<8x5xf32> -> vector<8x1024xf32>
    %c40 = arith.constant 40 : index
    %c0_8 = arith.constant 0 : index
    %22 = vector.load %arg16[%c40, %c0_8] : memref<320x1024xf32, #tpu.memory_space<vmem>>, vector<8x1024xf32>
    tpu.vector_store %arg16[%c40, %c0_8], %21 {strides = array<i32>} : memref<320x1024xf32, #tpu.memory_space<vmem>>, vector<8x1024xf32>,
    %23 = vector.extract_strided_slice %1 {offsets = [0, 6], sizes = [8, 1018], strides = [1, 1]} : vector<8x1024xf32> to vector<8x1018xf32>
    %24 = vector.extract_strided_slice %1 {offsets = [0, 0], sizes = [8, 6], strides = [1, 1]} : vector<8x1024xf32> to vector<8x6xf32>
    %25 = tpu.concatenate %23, %24 in 1 : vector<8x1018xf32>, vector<8x6xf32> -> vector<8x1024xf32>
    %c48 = arith.constant 48 : index
    %c0_9 = arith.constant 0 : index
    %26 = vector.load %arg16[%c48, %c0_9] : memref<320x1024xf32, #tpu.memory_space<vmem>>, vector<8x1024xf32>
    tpu.vector_store %arg16[%c48, %c0_9], %25 {strides = array<i32>} : memref<320x1024xf32, #tpu.memory_space<vmem>>, vector<8x1024xf32>,
    %27 = vector.extract_strided_slice %1 {offsets = [0, 7], sizes = [8, 1017], strides = [1, 1]} : vector<8x1024xf32> to vector<8x1017xf32>
    %28 = vector.extract_strided_slice %1 {offsets = [0, 0], sizes = [8, 7], strides = [1, 1]} : vector<8x1024xf32> to vector<8x7xf32>
    %29 = tpu.concatenate %27, %28 in 1 : vector<8x1017xf32>, vector<8x7xf32> -> vector<8x1024xf32>
    %c56 = arith.constant 56 : index
    %c0_10 = arith.constant 0 : index
    %30 = vector.load %arg16[%c56, %c0_10] : memref<320x1024xf32, #tpu.memory_space<vmem>>, vector<8x1024xf32>
    tpu.vector_store %arg16[%c56, %c0_10], %29 {strides = array<i32>} : memref<320x1024xf32, #tpu.memory_space<vmem>>, vector<8x1024xf32>,
    %31 = vector.extract_strided_slice %1 {offsets = [0, 8], sizes = [8, 1016], strides = [1, 1]} : vector<8x1024xf32> to vector<8x1016xf32>
    %32 = vector.extract_strided_slice %1 {offsets = [0, 0], sizes = [8, 8], strides = [1, 1]} : vector<8x1024xf32> to vector<8x8xf32>
    %33 = tpu.concatenate %31, %32 in 1 : vector<8x1016xf32>, vector<8x8xf32> -> vector<8x1024xf32>
    %c64 = arith.constant 64 : index
    %c0_11 = arith.constant 0 : index
    %34 = vector.load %arg16[%c64, %c0_11] : memref<320x1024xf32, #tpu.memory_space<vmem>>, vector<8x1024xf32>
    tpu.vector_store %arg16[%c64, %c0_11], %33 {strides = array<i32>} : memref<320x1024xf32, #tpu.memory_space<vmem>>, vector<8x1024xf32>,
    %35 = vector.extract_strided_slice %1 {offsets = [0, 9], sizes = [8, 1015], strides = [1, 1]} : vector<8x1024xf32> to vector<8x1015xf32>
    %36 = vector.extract_strided_slice %1 {offsets = [0, 0], sizes = [8, 9], strides = [1, 1]} : vector<8x1024xf32> to vector<8x9xf32>
    %37 = tpu.concatenate %35, %36 in 1 : vector<8x1015xf32>, vector<8x9xf32> -> vector<8x1024xf32>
    %c72 = arith.constant 72 : index
    %c0_12 = arith.constant 0 : index
    %38 = vector.load %arg16[%c72, %c0_12] : memref<320x1024xf32, #tpu.memory_space<vmem>>, vector<8x1024xf32>
    tpu.vector_store %arg16[%c72, %c0_12], %37 {strides = array<i32>} : memref<320x1024xf32, #tpu.memory_space<vmem>>, vector<8x1024xf32>,
    %c0_13 = arith.constant 0 : index
    %c0_14 = arith.constant 0 : index
    %39 = vector.load %arg16[%c0_13, %c0_14] : memref<320x1024xf32, #tpu.memory_space<vmem>>, vector<80x1024xf32>
    %c0_15 = arith.constant 0 : index
    %c0_16 = arith.constant 0 : index
    %40 = vector.load %arg2[%c0_15, %c0_16] : memref<8x80xf32, #tpu.memory_space<vmem>>, vector<8x80xf32>
    %cst = arith.constant dense<0.000000e+00> : vector<8x1024xf32>
    %41 = tpu.matmul %40, %39, %cst {dimension_numbers = #tpu.dot_dimension_numbers<[1], [0], [0], [1], [0, 0, 1, 1], [], []>} : vector<8x80xf32>, vector<80x1024xf32>, vector<8x1024xf32> -> vector<8x1024xf32>
    %c0_17 = arith.constant 0 : index
    %c0_18 = arith.constant 0 : index
    %42 = vector.load %arg3[%c0_17, %c0_18] : memref<8x1xf32, #tpu.memory_space<vmem>>, vector<8x1xf32>
    %43 = vector.broadcast %42 : vector<8x1xf32> to vector<8x1024xf32>
    %44 = arith.addf %41, %43 : vector<8x1024xf32>
    %cst_19 = arith.constant 0.000000e+00 : f32
    %45 = vector.broadcast %cst_19 : f32 to vector<8x1024xf32>
    %46 = arith.cmpf ogt, %44, %45 : vector<8x1024xf32>
    %47 = math.exp %44 : vector<8x1024xf32>
    %cst_20 = arith.constant 1.000000e+00 : f32
    %48 = vector.broadcast %cst_20 : f32 to vector<8x1024xf32>
    %49 = arith.subf %47, %48 : vector<8x1024xf32>
    %50 = arith.select %46, %44, %49 : vector<8x1024xi1>, vector<8x1024xf32>
    %c0_21 = arith.constant 0 : index
    %c0_22 = arith.constant 0 : index
    %51 = vector.load %arg16[%c0_21, %c0_22] : memref<320x1024xf32, #tpu.memory_space<vmem>>, vector<8x1024xf32>
    tpu.vector_store %arg16[%c0_21, %c0_22], %50 {strides = array<i32>} : memref<320x1024xf32, #tpu.memory_space<vmem>>, vector<8x1024xf32>,
    %52 = vector.extract_strided_slice %50 {offsets = [0, 1], sizes = [8, 1023], strides = [1, 1]} : vector<8x1024xf32> to vector<8x1023xf32>
    %53 = vector.extract_strided_slice %50 {offsets = [0, 0], sizes = [8, 1], strides = [1, 1]} : vector<8x1024xf32> to vector<8x1xf32>
    %54 = tpu.concatenate %52, %53 in 1 : vector<8x1023xf32>, vector<8x1xf32> -> vector<8x1024xf32>
    %c8_23 = arith.constant 8 : index
    %c0_24 = arith.constant 0 : index
    %55 = vector.load %arg16[%c8_23, %c0_24] : memref<320x1024xf32, #tpu.memory_space<vmem>>, vector<8x1024xf32>
    tpu.vector_store %arg16[%c8_23, %c0_24], %54 {strides = array<i32>} : memref<320x1024xf32, #tpu.memory_space<vmem>>, vector<8x1024xf32>,
    %56 = vector.extract_strided_slice %50 {offsets = [0, 2], sizes = [8, 1022], strides = [1, 1]} : vector<8x1024xf32> to vector<8x1022xf32>
    %57 = vector.extract_strided_slice %50 {offsets = [0, 0], sizes = [8, 2], strides = [1, 1]} : vector<8x1024xf32> to vector<8x2xf32>
    %58 = tpu.concatenate %56, %57 in 1 : vector<8x1022xf32>, vector<8x2xf32> -> vector<8x1024xf32>
    %c16_25 = arith.constant 16 : index
    %c0_26 = arith.constant 0 : index
    %59 = vector.load %arg16[%c16_25, %c0_26] : memref<320x1024xf32, #tpu.memory_space<vmem>>, vector<8x1024xf32>
    tpu.vector_store %arg16[%c16_25, %c0_26], %58 {strides = array<i32>} : memref<320x1024xf32, #tpu.memory_space<vmem>>, vector<8x1024xf32>,
    %60 = vector.extract_strided_slice %50 {offsets = [0, 3], sizes = [8, 1021], strides = [1, 1]} : vector<8x1024xf32> to vector<8x1021xf32>
    %61 = vector.extract_strided_slice %50 {offsets = [0, 0], sizes = [8, 3], strides = [1, 1]} : vector<8x1024xf32> to vector<8x3xf32>
    %62 = tpu.concatenate %60, %61 in 1 : vector<8x1021xf32>, vector<8x3xf32> -> vector<8x1024xf32>
    %c24_27 = arith.constant 24 : index
    %c0_28 = arith.constant 0 : index
    %63 = vector.load %arg16[%c24_27, %c0_28] : memref<320x1024xf32, #tpu.memory_space<vmem>>, vector<8x1024xf32>
    tpu.vector_store %arg16[%c24_27, %c0_28], %62 {strides = array<i32>} : memref<320x1024xf32, #tpu.memory_space<vmem>>, vector<8x1024xf32>,
    %64 = vector.extract_strided_slice %50 {offsets = [0, 4], sizes = [8, 1020], strides = [1, 1]} : vector<8x1024xf32> to vector<8x1020xf32>
    %65 = vector.extract_strided_slice %50 {offsets = [0, 0], sizes = [8, 4], strides = [1, 1]} : vector<8x1024xf32> to vector<8x4xf32>
    %66 = tpu.concatenate %64, %65 in 1 : vector<8x1020xf32>, vector<8x4xf32> -> vector<8x1024xf32>
    %c32_29 = arith.constant 32 : index
    %c0_30 = arith.constant 0 : index
    %67 = vector.load %arg16[%c32_29, %c0_30] : memref<320x1024xf32, #tpu.memory_space<vmem>>, vector<8x1024xf32>
    tpu.vector_store %arg16[%c32_29, %c0_30], %66 {strides = array<i32>} : memref<320x1024xf32, #tpu.memory_space<vmem>>, vector<8x1024xf32>,
    %68 = vector.extract_strided_slice %50 {offsets = [0, 5], sizes = [8, 1019], strides = [1, 1]} : vector<8x1024xf32> to vector<8x1019xf32>
    %69 = vector.extract_strided_slice %50 {offsets = [0, 0], sizes = [8, 5], strides = [1, 1]} : vector<8x1024xf32> to vector<8x5xf32>
    %70 = tpu.concatenate %68, %69 in 1 : vector<8x1019xf32>, vector<8x5xf32> -> vector<8x1024xf32>
    %c40_31 = arith.constant 40 : index
    %c0_32 = arith.constant 0 : index
    %71 = vector.load %arg16[%c40_31, %c0_32] : memref<320x1024xf32, #tpu.memory_space<vmem>>, vector<8x1024xf32>
    tpu.vector_store %arg16[%c40_31, %c0_32], %70 {strides = array<i32>} : memref<320x1024xf32, #tpu.memory_space<vmem>>, vector<8x1024xf32>,
    %72 = vector.extract_strided_slice %50 {offsets = [0, 6], sizes = [8, 1018], strides = [1, 1]} : vector<8x1024xf32> to vector<8x1018xf32>
    %73 = vector.extract_strided_slice %50 {offsets = [0, 0], sizes = [8, 6], strides = [1, 1]} : vector<8x1024xf32> to vector<8x6xf32>
    %74 = tpu.concatenate %72, %73 in 1 : vector<8x1018xf32>, vector<8x6xf32> -> vector<8x1024xf32>
    %c48_33 = arith.constant 48 : index
    %c0_34 = arith.constant 0 : index
    %75 = vector.load %arg16[%c48_33, %c0_34] : memref<320x1024xf32, #tpu.memory_space<vmem>>, vector<8x1024xf32>
    tpu.vector_store %arg16[%c48_33, %c0_34], %74 {strides = array<i32>} : memref<320x1024xf32, #tpu.memory_space<vmem>>, vector<8x1024xf32>,
    %76 = vector.extract_strided_slice %50 {offsets = [0, 7], sizes = [8, 1017], strides = [1, 1]} : vector<8x1024xf32> to vector<8x1017xf32>
    %77 = vector.extract_strided_slice %50 {offsets = [0, 0], sizes = [8, 7], strides = [1, 1]} : vector<8x1024xf32> to vector<8x7xf32>
    %78 = tpu.concatenate %76, %77 in 1 : vector<8x1017xf32>, vector<8x7xf32> -> vector<8x1024xf32>
    %c56_35 = arith.constant 56 : index
    %c0_36 = arith.constant 0 : index
    %79 = vector.load %arg16[%c56_35, %c0_36] : memref<320x1024xf32, #tpu.memory_space<vmem>>, vector<8x1024xf32>
    tpu.vector_store %arg16[%c56_35, %c0_36], %78 {strides = array<i32>} : memref<320x1024xf32, #tpu.memory_space<vmem>>, vector<8x1024xf32>,
    %80 = vector.extract_strided_slice %50 {offsets = [0, 8], sizes = [8, 1016], strides = [1, 1]} : vector<8x1024xf32> to vector<8x1016xf32>
    %81 = vector.extract_strided_slice %50 {offsets = [0, 0], sizes = [8, 8], strides = [1, 1]} : vector<8x1024xf32> to vector<8x8xf32>
    %82 = tpu.concatenate %80, %81 in 1 : vector<8x1016xf32>, vector<8x8xf32> -> vector<8x1024xf32>
    %c64_37 = arith.constant 64 : index
    %c0_38 = arith.constant 0 : index
    %83 = vector.load %arg16[%c64_37, %c0_38] : memref<320x1024xf32, #tpu.memory_space<vmem>>, vector<8x1024xf32>
    tpu.vector_store %arg16[%c64_37, %c0_38], %82 {strides = array<i32>} : memref<320x1024xf32, #tpu.memory_space<vmem>>, vector<8x1024xf32>,
    %84 = vector.extract_strided_slice %50 {offsets = [0, 9], sizes = [8, 1015], strides = [1, 1]} : vector<8x1024xf32> to vector<8x1015xf32>
    %85 = vector.extract_strided_slice %50 {offsets = [0, 0], sizes = [8, 9], strides = [1, 1]} : vector<8x1024xf32> to vector<8x9xf32>
    %86 = tpu.concatenate %84, %85 in 1 : vector<8x1015xf32>, vector<8x9xf32> -> vector<8x1024xf32>
    %c72_39 = arith.constant 72 : index
    %c0_40 = arith.constant 0 : index
    %87 = vector.load %arg16[%c72_39, %c0_40] : memref<320x1024xf32, #tpu.memory_space<vmem>>, vector<8x1024xf32>
    tpu.vector_store %arg16[%c72_39, %c0_40], %86 {strides = array<i32>} : memref<320x1024xf32, #tpu.memory_space<vmem>>, vector<8x1024xf32>,
    %c0_41 = arith.constant 0 : index
    %c0_42 = arith.constant 0 : index
    %88 = vector.load %arg16[%c0_41, %c0_42] : memref<320x1024xf32, #tpu.memory_space<vmem>>, vector<80x1024xf32>
    %c0_43 = arith.constant 0 : index
    %c0_44 = arith.constant 0 : index
    %89 = vector.load %arg4[%c0_43, %c0_44] : memref<16x80xf32, #tpu.memory_space<vmem>>, vector<16x80xf32>
    %cst_45 = arith.constant dense<0.000000e+00> : vector<16x1024xf32>
    %90 = tpu.matmul %89, %88, %cst_45 {dimension_numbers = #tpu.dot_dimension_numbers<[1], [0], [0], [1], [0, 0, 1, 1], [], []>} : vector<16x80xf32>, vector<80x1024xf32>, vector<16x1024xf32> -> vector<16x1024xf32>
    %c0_46 = arith.constant 0 : index
    %c0_47 = arith.constant 0 : index
    %91 = vector.load %arg5[%c0_46, %c0_47] : memref<16x1xf32, #tpu.memory_space<vmem>>, vector<16x1xf32>
    %92 = vector.broadcast %91 : vector<16x1xf32> to vector<16x1024xf32>
    %93 = arith.addf %90, %92 : vector<16x1024xf32>
    %cst_48 = arith.constant 0.000000e+00 : f32
    %94 = vector.broadcast %cst_48 : f32 to vector<16x1024xf32>
    %95 = arith.cmpf ogt, %93, %94 : vector<16x1024xf32>
    %96 = math.exp %93 : vector<16x1024xf32>
    %cst_49 = arith.constant 1.000000e+00 : f32
    %97 = vector.broadcast %cst_49 : f32 to vector<16x1024xf32>
    %98 = arith.subf %96, %97 : vector<16x1024xf32>
    %99 = arith.select %95, %93, %98 : vector<16x1024xi1>, vector<16x1024xf32>
    %100 = vector.extract_strided_slice %99 {offsets = [0, 1], sizes = [16, 1023], strides = [1, 1]} : vector<16x1024xf32> to vector<16x1023xf32>
    %101 = vector.extract_strided_slice %99 {offsets = [0, 0], sizes = [16, 1], strides = [1, 1]} : vector<16x1024xf32> to vector<16x1xf32>
    %102 = tpu.concatenate %100, %101 in 1 : vector<16x1023xf32>, vector<16x1xf32> -> vector<16x1024xf32>
    %103 = arith.maximumf %99, %102 : vector<16x1024xf32>
    %104 = vector.extract_strided_slice %99 {offsets = [0, 2], sizes = [16, 1022], strides = [1, 1]} : vector<16x1024xf32> to vector<16x1022xf32>
    %105 = vector.extract_strided_slice %99 {offsets = [0, 0], sizes = [16, 2], strides = [1, 1]} : vector<16x1024xf32> to vector<16x2xf32>
    %106 = tpu.concatenate %104, %105 in 1 : vector<16x1022xf32>, vector<16x2xf32> -> vector<16x1024xf32>
    %107 = arith.maximumf %103, %106 : vector<16x1024xf32>
    %108 = arith.truncf %107 : vector<16x1024xf32> to vector<16x1024xbf16>
    %c0_50 = arith.constant 0 : index
    %c0_51 = arith.constant 0 : index
    %109 = vector.load %arg6[%c0_50, %c0_51] : memref<1024x256xbf16, #tpu.memory_space<vmem>>, vector<1024x256xbf16>
    %cst_52 = arith.constant dense<0.000000e+00> : vector<16x256xf32>
    %110 = tpu.matmul %108, %109, %cst_52 {dimension_numbers = #tpu.dot_dimension_numbers<[1], [0], [0], [1], [0, 0, 1, 1], [], []>} : vector<16x1024xbf16>, vector<1024x256xbf16>, vector<16x256xf32> -> vector<16x256xf32>
    %c0_53 = arith.constant 0 : index
    %c0_54 = arith.constant 0 : index
    %111 = vector.load %arg16[%c0_53, %c0_54] : memref<320x1024xf32, #tpu.memory_space<vmem>>, vector<16x256xf32>
    tpu.vector_store %arg16[%c0_53, %c0_54], %110 {strides = array<i32>} : memref<320x1024xf32, #tpu.memory_space<vmem>>, vector<16x256xf32>,
    %112 = vector.extract_strided_slice %110 {offsets = [0, 1], sizes = [16, 255], strides = [1, 1]} : vector<16x256xf32> to vector<16x255xf32>
    %113 = vector.extract_strided_slice %110 {offsets = [0, 0], sizes = [16, 1], strides = [1, 1]} : vector<16x256xf32> to vector<16x1xf32>
    %114 = tpu.concatenate %112, %113 in 1 : vector<16x255xf32>, vector<16x1xf32> -> vector<16x256xf32>
    %c16_55 = arith.constant 16 : index
    %c0_56 = arith.constant 0 : index
    %115 = vector.load %arg16[%c16_55, %c0_56] : memref<320x1024xf32, #tpu.memory_space<vmem>>, vector<16x256xf32>
    tpu.vector_store %arg16[%c16_55, %c0_56], %114 {strides = array<i32>} : memref<320x1024xf32, #tpu.memory_space<vmem>>, vector<16x256xf32>,
    %116 = vector.extract_strided_slice %110 {offsets = [0, 2], sizes = [16, 254], strides = [1, 1]} : vector<16x256xf32> to vector<16x254xf32>
    %117 = vector.extract_strided_slice %110 {offsets = [0, 0], sizes = [16, 2], strides = [1, 1]} : vector<16x256xf32> to vector<16x2xf32>
    %118 = tpu.concatenate %116, %117 in 1 : vector<16x254xf32>, vector<16x2xf32> -> vector<16x256xf32>
    %c32_57 = arith.constant 32 : index
    %c0_58 = arith.constant 0 : index
    %119 = vector.load %arg16[%c32_57, %c0_58] : memref<320x1024xf32, #tpu.memory_space<vmem>>, vector<16x256xf32>
    tpu.vector_store %arg16[%c32_57, %c0_58], %118 {strides = array<i32>} : memref<320x1024xf32, #tpu.memory_space<vmem>>, vector<16x256xf32>,
    %120 = vector.extract_strided_slice %110 {offsets = [0, 3], sizes = [16, 253], strides = [1, 1]} : vector<16x256xf32> to vector<16x253xf32>
    %121 = vector.extract_strided_slice %110 {offsets = [0, 0], sizes = [16, 3], strides = [1, 1]} : vector<16x256xf32> to vector<16x3xf32>
    %122 = tpu.concatenate %120, %121 in 1 : vector<16x253xf32>, vector<16x3xf32> -> vector<16x256xf32>
    %c48_59 = arith.constant 48 : index
    %c0_60 = arith.constant 0 : index
    %123 = vector.load %arg16[%c48_59, %c0_60] : memref<320x1024xf32, #tpu.memory_space<vmem>>, vector<16x256xf32>
    tpu.vector_store %arg16[%c48_59, %c0_60], %122 {strides = array<i32>} : memref<320x1024xf32, #tpu.memory_space<vmem>>, vector<16x256xf32>,
    %124 = vector.extract_strided_slice %110 {offsets = [0, 4], sizes = [16, 252], strides = [1, 1]} : vector<16x256xf32> to vector<16x252xf32>
    %125 = vector.extract_strided_slice %110 {offsets = [0, 0], sizes = [16, 4], strides = [1, 1]} : vector<16x256xf32> to vector<16x4xf32>
    %126 = tpu.concatenate %124, %125 in 1 : vector<16x252xf32>, vector<16x4xf32> -> vector<16x256xf32>
    %c64_61 = arith.constant 64 : index
    %c0_62 = arith.constant 0 : index
    %127 = vector.load %arg16[%c64_61, %c0_62] : memref<320x1024xf32, #tpu.memory_space<vmem>>, vector<16x256xf32>
    tpu.vector_store %arg16[%c64_61, %c0_62], %126 {strides = array<i32>} : memref<320x1024xf32, #tpu.memory_space<vmem>>, vector<16x256xf32>,
    %128 = vector.extract_strided_slice %110 {offsets = [0, 5], sizes = [16, 251], strides = [1, 1]} : vector<16x256xf32> to vector<16x251xf32>
    %129 = vector.extract_strided_slice %110 {offsets = [0, 0], sizes = [16, 5], strides = [1, 1]} : vector<16x256xf32> to vector<16x5xf32>
    %130 = tpu.concatenate %128, %129 in 1 : vector<16x251xf32>, vector<16x5xf32> -> vector<16x256xf32>
    %c80 = arith.constant 80 : index
    %c0_63 = arith.constant 0 : index
    %131 = vector.load %arg16[%c80, %c0_63] : memref<320x1024xf32, #tpu.memory_space<vmem>>, vector<16x256xf32>
    tpu.vector_store %arg16[%c80, %c0_63], %130 {strides = array<i32>} : memref<320x1024xf32, #tpu.memory_space<vmem>>, vector<16x256xf32>,
    %132 = vector.extract_strided_slice %110 {offsets = [0, 6], sizes = [16, 250], strides = [1, 1]} : vector<16x256xf32> to vector<16x250xf32>
    %133 = vector.extract_strided_slice %110 {offsets = [0, 0], sizes = [16, 6], strides = [1, 1]} : vector<16x256xf32> to vector<16x6xf32>
    %134 = tpu.concatenate %132, %133 in 1 : vector<16x250xf32>, vector<16x6xf32> -> vector<16x256xf32>
    %c96 = arith.constant 96 : index
    %c0_64 = arith.constant 0 : index
    %135 = vector.load %arg16[%c96, %c0_64] : memref<320x1024xf32, #tpu.memory_space<vmem>>, vector<16x256xf32>
    tpu.vector_store %arg16[%c96, %c0_64], %134 {strides = array<i32>} : memref<320x1024xf32, #tpu.memory_space<vmem>>, vector<16x256xf32>,
    %136 = vector.extract_strided_slice %110 {offsets = [0, 7], sizes = [16, 249], strides = [1, 1]} : vector<16x256xf32> to vector<16x249xf32>
    %137 = vector.extract_strided_slice %110 {offsets = [0, 0], sizes = [16, 7], strides = [1, 1]} : vector<16x256xf32> to vector<16x7xf32>
    %138 = tpu.concatenate %136, %137 in 1 : vector<16x249xf32>, vector<16x7xf32> -> vector<16x256xf32>
    %c112 = arith.constant 112 : index
    %c0_65 = arith.constant 0 : index
    %139 = vector.load %arg16[%c112, %c0_65] : memref<320x1024xf32, #tpu.memory_space<vmem>>, vector<16x256xf32>
    tpu.vector_store %arg16[%c112, %c0_65], %138 {strides = array<i32>} : memref<320x1024xf32, #tpu.memory_space<vmem>>, vector<16x256xf32>,
    %140 = vector.extract_strided_slice %110 {offsets = [0, 8], sizes = [16, 248], strides = [1, 1]} : vector<16x256xf32> to vector<16x248xf32>
    %141 = vector.extract_strided_slice %110 {offsets = [0, 0], sizes = [16, 8], strides = [1, 1]} : vector<16x256xf32> to vector<16x8xf32>
    %142 = tpu.concatenate %140, %141 in 1 : vector<16x248xf32>, vector<16x8xf32> -> vector<16x256xf32>
    %c128 = arith.constant 128 : index
    %c0_66 = arith.constant 0 : index
    %143 = vector.load %arg16[%c128, %c0_66] : memref<320x1024xf32, #tpu.memory_space<vmem>>, vector<16x256xf32>
    tpu.vector_store %arg16[%c128, %c0_66], %142 {strides = array<i32>} : memref<320x1024xf32, #tpu.memory_space<vmem>>, vector<16x256xf32>,
    %144 = vector.extract_strided_slice %110 {offsets = [0, 9], sizes = [16, 247], strides = [1, 1]} : vector<16x256xf32> to vector<16x247xf32>
    %145 = vector.extract_strided_slice %110 {offsets = [0, 0], sizes = [16, 9], strides = [1, 1]} : vector<16x256xf32> to vector<16x9xf32>
    %146 = tpu.concatenate %144, %145 in 1 : vector<16x247xf32>, vector<16x9xf32> -> vector<16x256xf32>
    %c144 = arith.constant 144 : index
    %c0_67 = arith.constant 0 : index
    %147 = vector.load %arg16[%c144, %c0_67] : memref<320x1024xf32, #tpu.memory_space<vmem>>, vector<16x256xf32>
    tpu.vector_store %arg16[%c144, %c0_67], %146 {strides = array<i32>} : memref<320x1024xf32, #tpu.memory_space<vmem>>, vector<16x256xf32>,
    %c0_68 = arith.constant 0 : index
    %c0_69 = arith.constant 0 : index
    %148 = vector.load %arg16[%c0_68, %c0_69] : memref<320x1024xf32, #tpu.memory_space<vmem>>, vector<160x256xf32>
    %c0_70 = arith.constant 0 : index
    %c0_71 = arith.constant 0 : index
    %149 = vector.load %arg7[%c0_70, %c0_71] : memref<32x160xf32, #tpu.memory_space<vmem>>, vector<32x160xf32>
    %cst_72 = arith.constant dense<0.000000e+00> : vector<32x256xf32>
    %150 = tpu.matmul %149, %148, %cst_72 {dimension_numbers = #tpu.dot_dimension_numbers<[1], [0], [0], [1], [0, 0, 1, 1], [], []>} : vector<32x160xf32>, vector<160x256xf32>, vector<32x256xf32> -> vector<32x256xf32>
    %c0_73 = arith.constant 0 : index
    %c0_74 = arith.constant 0 : index
    %151 = vector.load %arg8[%c0_73, %c0_74] : memref<32x1xf32, #tpu.memory_space<vmem>>, vector<32x1xf32>
    %152 = vector.broadcast %151 : vector<32x1xf32> to vector<32x256xf32>
    %153 = arith.addf %150, %152 : vector<32x256xf32>
    %cst_75 = arith.constant 0.000000e+00 : f32
    %154 = vector.broadcast %cst_75 : f32 to vector<32x256xf32>
    %155 = arith.cmpf ogt, %153, %154 : vector<32x256xf32>
    %156 = math.exp %153 : vector<32x256xf32>
    %cst_76 = arith.constant 1.000000e+00 : f32
    %157 = vector.broadcast %cst_76 : f32 to vector<32x256xf32>
    %158 = arith.subf %156, %157 : vector<32x256xf32>
    %159 = arith.select %155, %153, %158 : vector<32x256xi1>, vector<32x256xf32>
    %160 = vector.extract_strided_slice %159 {offsets = [0, 1], sizes = [32, 255], strides = [1, 1]} : vector<32x256xf32> to vector<32x255xf32>
    %161 = vector.extract_strided_slice %159 {offsets = [0, 0], sizes = [32, 1], strides = [1, 1]} : vector<32x256xf32> to vector<32x1xf32>
    %162 = tpu.concatenate %160, %161 in 1 : vector<32x255xf32>, vector<32x1xf32> -> vector<32x256xf32>
    %163 = arith.maximumf %159, %162 : vector<32x256xf32>
    %164 = vector.extract_strided_slice %159 {offsets = [0, 2], sizes = [32, 254], strides = [1, 1]} : vector<32x256xf32> to vector<32x254xf32>
    %165 = vector.extract_strided_slice %159 {offsets = [0, 0], sizes = [32, 2], strides = [1, 1]} : vector<32x256xf32> to vector<32x2xf32>
    %166 = tpu.concatenate %164, %165 in 1 : vector<32x254xf32>, vector<32x2xf32> -> vector<32x256xf32>
    %167 = arith.maximumf %163, %166 : vector<32x256xf32>
    %168 = arith.truncf %167 : vector<32x256xf32> to vector<32x256xbf16>
    %c0_77 = arith.constant 0 : index
    %c0_78 = arith.constant 0 : index
    %169 = vector.load %arg9[%c0_77, %c0_78] : memref<256x256xbf16, #tpu.memory_space<vmem>>, vector<256x256xbf16>
    %cst_79 = arith.constant dense<0.000000e+00> : vector<32x256xf32>
    %170 = tpu.matmul %168, %169, %cst_79 {dimension_numbers = #tpu.dot_dimension_numbers<[1], [0], [0], [1], [0, 0, 1, 1], [], []>} : vector<32x256xbf16>, vector<256x256xbf16>, vector<32x256xf32> -> vector<32x256xf32>
    %c0_80 = arith.constant 0 : index
    %c0_81 = arith.constant 0 : index
    %171 = vector.load %arg16[%c0_80, %c0_81] : memref<320x1024xf32, #tpu.memory_space<vmem>>, vector<32x256xf32>
    tpu.vector_store %arg16[%c0_80, %c0_81], %170 {strides = array<i32>} : memref<320x1024xf32, #tpu.memory_space<vmem>>, vector<32x256xf32>,
    %172 = vector.extract_strided_slice %170 {offsets = [0, 1], sizes = [32, 255], strides = [1, 1]} : vector<32x256xf32> to vector<32x255xf32>
    %173 = vector.extract_strided_slice %170 {offsets = [0, 0], sizes = [32, 1], strides = [1, 1]} : vector<32x256xf32> to vector<32x1xf32>
    %174 = tpu.concatenate %172, %173 in 1 : vector<32x255xf32>, vector<32x1xf32> -> vector<32x256xf32>
    %c32_82 = arith.constant 32 : index
    %c0_83 = arith.constant 0 : index
    %175 = vector.load %arg16[%c32_82, %c0_83] : memref<320x1024xf32, #tpu.memory_space<vmem>>, vector<32x256xf32>
    tpu.vector_store %arg16[%c32_82, %c0_83], %174 {strides = array<i32>} : memref<320x1024xf32, #tpu.memory_space<vmem>>, vector<32x256xf32>,
    %176 = vector.extract_strided_slice %170 {offsets = [0, 2], sizes = [32, 254], strides = [1, 1]} : vector<32x256xf32> to vector<32x254xf32>
    %177 = vector.extract_strided_slice %170 {offsets = [0, 0], sizes = [32, 2], strides = [1, 1]} : vector<32x256xf32> to vector<32x2xf32>
    %178 = tpu.concatenate %176, %177 in 1 : vector<32x254xf32>, vector<32x2xf32> -> vector<32x256xf32>
    %c64_84 = arith.constant 64 : index
    %c0_85 = arith.constant 0 : index
    %179 = vector.load %arg16[%c64_84, %c0_85] : memref<320x1024xf32, #tpu.memory_space<vmem>>, vector<32x256xf32>
    tpu.vector_store %arg16[%c64_84, %c0_85], %178 {strides = array<i32>} : memref<320x1024xf32, #tpu.memory_space<vmem>>, vector<32x256xf32>,
    %180 = vector.extract_strided_slice %170 {offsets = [0, 3], sizes = [32, 253], strides = [1, 1]} : vector<32x256xf32> to vector<32x253xf32>
    %181 = vector.extract_strided_slice %170 {offsets = [0, 0], sizes = [32, 3], strides = [1, 1]} : vector<32x256xf32> to vector<32x3xf32>
    %182 = tpu.concatenate %180, %181 in 1 : vector<32x253xf32>, vector<32x3xf32> -> vector<32x256xf32>
    %c96_86 = arith.constant 96 : index
    %c0_87 = arith.constant 0 : index
    %183 = vector.load %arg16[%c96_86, %c0_87] : memref<320x1024xf32, #tpu.memory_space<vmem>>, vector<32x256xf32>
    tpu.vector_store %arg16[%c96_86, %c0_87], %182 {strides = array<i32>} : memref<320x1024xf32, #tpu.memory_space<vmem>>, vector<32x256xf32>,
    %184 = vector.extract_strided_slice %170 {offsets = [0, 4], sizes = [32, 252], strides = [1, 1]} : vector<32x256xf32> to vector<32x252xf32>
    %185 = vector.extract_strided_slice %170 {offsets = [0, 0], sizes = [32, 4], strides = [1, 1]} : vector<32x256xf32> to vector<32x4xf32>
    %186 = tpu.concatenate %184, %185 in 1 : vector<32x252xf32>, vector<32x4xf32> -> vector<32x256xf32>
    %c128_88 = arith.constant 128 : index
    %c0_89 = arith.constant 0 : index
    %187 = vector.load %arg16[%c128_88, %c0_89] : memref<320x1024xf32, #tpu.memory_space<vmem>>, vector<32x256xf32>
    tpu.vector_store %arg16[%c128_88, %c0_89], %186 {strides = array<i32>} : memref<320x1024xf32, #tpu.memory_space<vmem>>, vector<32x256xf32>,
    %188 = vector.extract_strided_slice %170 {offsets = [0, 5], sizes = [32, 251], strides = [1, 1]} : vector<32x256xf32> to vector<32x251xf32>
    %189 = vector.extract_strided_slice %170 {offsets = [0, 0], sizes = [32, 5], strides = [1, 1]} : vector<32x256xf32> to vector<32x5xf32>
    %190 = tpu.concatenate %188, %189 in 1 : vector<32x251xf32>, vector<32x5xf32> -> vector<32x256xf32>
    %c160 = arith.constant 160 : index
    %c0_90 = arith.constant 0 : index
    %191 = vector.load %arg16[%c160, %c0_90] : memref<320x1024xf32, #tpu.memory_space<vmem>>, vector<32x256xf32>
    tpu.vector_store %arg16[%c160, %c0_90], %190 {strides = array<i32>} : memref<320x1024xf32, #tpu.memory_space<vmem>>, vector<32x256xf32>,
    %192 = vector.extract_strided_slice %170 {offsets = [0, 6], sizes = [32, 250], strides = [1, 1]} : vector<32x256xf32> to vector<32x250xf32>
    %193 = vector.extract_strided_slice %170 {offsets = [0, 0], sizes = [32, 6], strides = [1, 1]} : vector<32x256xf32> to vector<32x6xf32>
    %194 = tpu.concatenate %192, %193 in 1 : vector<32x250xf32>, vector<32x6xf32> -> vector<32x256xf32>
    %c192 = arith.constant 192 : index
    %c0_91 = arith.constant 0 : index
    %195 = vector.load %arg16[%c192, %c0_91] : memref<320x1024xf32, #tpu.memory_space<vmem>>, vector<32x256xf32>
    tpu.vector_store %arg16[%c192, %c0_91], %194 {strides = array<i32>} : memref<320x1024xf32, #tpu.memory_space<vmem>>, vector<32x256xf32>,
    %196 = vector.extract_strided_slice %170 {offsets = [0, 7], sizes = [32, 249], strides = [1, 1]} : vector<32x256xf32> to vector<32x249xf32>
    %197 = vector.extract_strided_slice %170 {offsets = [0, 0], sizes = [32, 7], strides = [1, 1]} : vector<32x256xf32> to vector<32x7xf32>
    %198 = tpu.concatenate %196, %197 in 1 : vector<32x249xf32>, vector<32x7xf32> -> vector<32x256xf32>
    %c224 = arith.constant 224 : index
    %c0_92 = arith.constant 0 : index
    %199 = vector.load %arg16[%c224, %c0_92] : memref<320x1024xf32, #tpu.memory_space<vmem>>, vector<32x256xf32>
    tpu.vector_store %arg16[%c224, %c0_92], %198 {strides = array<i32>} : memref<320x1024xf32, #tpu.memory_space<vmem>>, vector<32x256xf32>,
    %200 = vector.extract_strided_slice %170 {offsets = [0, 8], sizes = [32, 248], strides = [1, 1]} : vector<32x256xf32> to vector<32x248xf32>
    %201 = vector.extract_strided_slice %170 {offsets = [0, 0], sizes = [32, 8], strides = [1, 1]} : vector<32x256xf32> to vector<32x8xf32>
    %202 = tpu.concatenate %200, %201 in 1 : vector<32x248xf32>, vector<32x8xf32> -> vector<32x256xf32>
    %c256 = arith.constant 256 : index
    %c0_93 = arith.constant 0 : index
    %203 = vector.load %arg16[%c256, %c0_93] : memref<320x1024xf32, #tpu.memory_space<vmem>>, vector<32x256xf32>
    tpu.vector_store %arg16[%c256, %c0_93], %202 {strides = array<i32>} : memref<320x1024xf32, #tpu.memory_space<vmem>>, vector<32x256xf32>,
    %204 = vector.extract_strided_slice %170 {offsets = [0, 9], sizes = [32, 247], strides = [1, 1]} : vector<32x256xf32> to vector<32x247xf32>
    %205 = vector.extract_strided_slice %170 {offsets = [0, 0], sizes = [32, 9], strides = [1, 1]} : vector<32x256xf32> to vector<32x9xf32>
    %206 = tpu.concatenate %204, %205 in 1 : vector<32x247xf32>, vector<32x9xf32> -> vector<32x256xf32>
    %c288 = arith.constant 288 : index
    %c0_94 = arith.constant 0 : index
    %207 = vector.load %arg16[%c288, %c0_94] : memref<320x1024xf32, #tpu.memory_space<vmem>>, vector<32x256xf32>
    tpu.vector_store %arg16[%c288, %c0_94], %206 {strides = array<i32>} : memref<320x1024xf32, #tpu.memory_space<vmem>>, vector<32x256xf32>,
    %c0_95 = arith.constant 0 : index
    %c0_96 = arith.constant 0 : index
    %208 = vector.load %arg16[%c0_95, %c0_96] : memref<320x1024xf32, #tpu.memory_space<vmem>>, vector<320x256xf32>
    %c0_97 = arith.constant 0 : index
    %c0_98 = arith.constant 0 : index
    %209 = vector.load %arg10[%c0_97, %c0_98] : memref<64x320xf32, #tpu.memory_space<vmem>>, vector<64x320xf32>
    %cst_99 = arith.constant dense<0.000000e+00> : vector<64x256xf32>
    %210 = tpu.matmul %209, %208, %cst_99 {dimension_numbers = #tpu.dot_dimension_numbers<[1], [0], [0], [1], [0, 0, 1, 1], [], []>} : vector<64x320xf32>, vector<320x256xf32>, vector<64x256xf32> -> vector<64x256xf32>
    %c0_100 = arith.constant 0 : index
    %c0_101 = arith.constant 0 : index
    %211 = vector.load %arg11[%c0_100, %c0_101] : memref<64x1xf32, #tpu.memory_space<vmem>>, vector<64x1xf32>
    %212 = vector.broadcast %211 : vector<64x1xf32> to vector<64x256xf32>
    %213 = arith.addf %210, %212 : vector<64x256xf32>
    %cst_102 = arith.constant 0.000000e+00 : f32
    %214 = vector.broadcast %cst_102 : f32 to vector<64x256xf32>
    %215 = arith.cmpf ogt, %213, %214 : vector<64x256xf32>
    %216 = math.exp %213 : vector<64x256xf32>
    %cst_103 = arith.constant 1.000000e+00 : f32
    %217 = vector.broadcast %cst_103 : f32 to vector<64x256xf32>
    %218 = arith.subf %216, %217 : vector<64x256xf32>
    %219 = arith.select %215, %213, %218 : vector<64x256xi1>, vector<64x256xf32>
    %220 = vector.extract_strided_slice %219 {offsets = [0, 1], sizes = [64, 255], strides = [1, 1]} : vector<64x256xf32> to vector<64x255xf32>
    %221 = vector.extract_strided_slice %219 {offsets = [0, 0], sizes = [64, 1], strides = [1, 1]} : vector<64x256xf32> to vector<64x1xf32>
    %222 = tpu.concatenate %220, %221 in 1 : vector<64x255xf32>, vector<64x1xf32> -> vector<64x256xf32>
    %223 = arith.maximumf %219, %222 : vector<64x256xf32>
    %224 = vector.extract_strided_slice %219 {offsets = [0, 2], sizes = [64, 254], strides = [1, 1]} : vector<64x256xf32> to vector<64x254xf32>
    %225 = vector.extract_strided_slice %219 {offsets = [0, 0], sizes = [64, 2], strides = [1, 1]} : vector<64x256xf32> to vector<64x2xf32>
    %226 = tpu.concatenate %224, %225 in 1 : vector<64x254xf32>, vector<64x2xf32> -> vector<64x256xf32>
    %227 = arith.maximumf %223, %226 : vector<64x256xf32>
    %228 = arith.truncf %227 : vector<64x256xf32> to vector<64x256xbf16>
    %c0_104 = arith.constant 0 : index
    %c0_105 = arith.constant 0 : index
    %229 = vector.load %arg12[%c0_104, %c0_105] : memref<256x256xbf16, #tpu.memory_space<vmem>>, vector<256x256xbf16>
    %cst_106 = arith.constant dense<0.000000e+00> : vector<64x256xf32>
    %230 = tpu.matmul %228, %229, %cst_106 {dimension_numbers = #tpu.dot_dimension_numbers<[1], [0], [0], [1], [0, 0, 1, 1], [], []>} : vector<64x256xbf16>, vector<256x256xbf16>, vector<64x256xf32> -> vector<64x256xf32>
    %c0_107 = arith.constant 0 : index
    %c0_108 = arith.constant 0 : index
    %231 = vector.load %arg13[%c0_107, %c0_108] : memref<8x64xbf16, #tpu.memory_space<vmem>>, vector<8x64xbf16>
    %232 = arith.truncf %230 : vector<64x256xf32> to vector<64x256xbf16>
    %cst_109 = arith.constant dense<0.000000e+00> : vector<8x256xf32>
    %233 = tpu.matmul %231, %232, %cst_109 {dimension_numbers = #tpu.dot_dimension_numbers<[1], [0], [0], [1], [0, 0, 1, 1], [], []>} : vector<8x64xbf16>, vector<64x256xbf16>, vector<8x256xf32> -> vector<8x256xf32>
    %234 = arith.truncf %233 : vector<8x256xf32> to vector<8x256xbf16>
    %c0_110 = arith.constant 0 : index
    %c0_111 = arith.constant 0 : index
    %235 = vector.load %arg14[%c0_110, %c0_111] : memref<256x256xbf16, #tpu.memory_space<vmem>>, vector<256x256xbf16>
    %cst_112 = arith.constant dense<0.000000e+00> : vector<8x256xf32>
    %236 = tpu.matmul %234, %235, %cst_112 {dimension_numbers = #tpu.dot_dimension_numbers<[1], [0], [0], [1], [0, 0, 1, 1], [], []>} : vector<8x256xbf16>, vector<256x256xbf16>, vector<8x256xf32> -> vector<8x256xf32>
    %cst_113 = arith.constant 0.00999999977 : f32
    %237 = vector.broadcast %cst_113 : f32 to vector<8x256xf32>
    %238 = arith.mulf %236, %237 : vector<8x256xf32>
    %c0_114 = arith.constant 0 : index
    %c0_115 = arith.constant 0 : index
    %c0_116 = arith.constant 0 : index
    %239 = vector.load %arg15[%c0_114, %c0_115, %c0_116] : memref<1x8x256xf32, #tpu.memory_space<vmem>>, vector<1x8x256xf32>
    %240 = vector.shape_cast %239 : vector<1x8x256xf32> to vector<8x256xf32>
    %241 = vector.shape_cast %238 : vector<8x256xf32> to vector<1x8x256xf32>
    tpu.vector_store %arg15[%c0_114, %c0_115, %c0_116], %241 {strides = array<i32>} : memref<1x8x256xf32, #tpu.memory_space<vmem>>, vector<1x8x256xf32>,
    return
  }
  func.func @transform_0(%arg0: i32) -> (i32, i32, i32) {
    %c0_i32 = arith.constant 0 : i32
    %c0_i32_0 = arith.constant 0 : i32
    %c0_i32_1 = arith.constant 0 : i32
    return %arg0, %c0_i32, %c0_i32_0 : i32, i32, i32
  }
  func.func @transform_1(%arg0: i32) -> (i32, i32) {
    %c0_i32 = arith.constant 0 : i32
    %c0_i32_0 = arith.constant 0 : i32
    %c0_i32_1 = arith.constant 0 : i32
    return %c0_i32, %c0_i32_0 : i32, i32
  }
  func.func @transform_2(%arg0: i32) -> (i32, i32) {
    %c0_i32 = arith.constant 0 : i32
    %c0_i32_0 = arith.constant 0 : i32
    %c0_i32_1 = arith.constant 0 : i32
    return %c0_i32, %c0_i32_0 : i32, i32
  }
  func.func @transform_3(%arg0: i32) -> (i32, i32) {
    %c0_i32 = arith.constant 0 : i32
    %c0_i32_0 = arith.constant 0 : i32
    %c0_i32_1 = arith.constant 0 : i32
    return %c0_i32, %c0_i32_0 : i32, i32
  }
  func.func @transform_4(%arg0: i32) -> (i32, i32) {
    %c0_i32 = arith.constant 0 : i32
    %c0_i32_0 = arith.constant 0 : i32
    %c0_i32_1 = arith.constant 0 : i32
    return %c0_i32, %c0_i32_0 : i32, i32
  }
  func.func @transform_5(%arg0: i32) -> (i32, i32) {
    %c0_i32 = arith.constant 0 : i32
    %c0_i32_0 = arith.constant 0 : i32
    %c0_i32_1 = arith.constant 0 : i32
    return %c0_i32, %c0_i32_0 : i32, i32
  }
  func.func @transform_6(%arg0: i32) -> (i32, i32) {
    %c0_i32 = arith.constant 0 : i32
    %c0_i32_0 = arith.constant 0 : i32
    %c0_i32_1 = arith.constant 0 : i32
    return %c0_i32, %c0_i32_0 : i32, i32
  }
  func.func @transform_7(%arg0: i32) -> (i32, i32) {
    %c0_i32 = arith.constant 0 : i32
    %c0_i32_0 = arith.constant 0 : i32
    %c0_i32_1 = arith.constant 0 : i32
    return %c0_i32, %c0_i32_0 : i32, i32
  }
  func.func @transform_8(%arg0: i32) -> (i32, i32) {
    %c0_i32 = arith.constant 0 : i32
    %c0_i32_0 = arith.constant 0 : i32
    %c0_i32_1 = arith.constant 0 : i32
    return %c0_i32, %c0_i32_0 : i32, i32
  }
  func.func @transform_9(%arg0: i32) -> (i32, i32) {
    %c0_i32 = arith.constant 0 : i32
    %c0_i32_0 = arith.constant 0 : i32
    %c0_i32_1 = arith.constant 0 : i32
    return %c0_i32, %c0_i32_0 : i32, i32
  }
  func.func @transform_10(%arg0: i32) -> (i32, i32) {
    %c0_i32 = arith.constant 0 : i32
    %c0_i32_0 = arith.constant 0 : i32
    %c0_i32_1 = arith.constant 0 : i32
    return %c0_i32, %c0_i32_0 : i32, i32
  }
  func.func @transform_11(%arg0: i32) -> (i32, i32) {
    %c0_i32 = arith.constant 0 : i32
    %c0_i32_0 = arith.constant 0 : i32
    %c0_i32_1 = arith.constant 0 : i32
    return %c0_i32, %c0_i32_0 : i32, i32
  }
  func.func @transform_12(%arg0: i32) -> (i32, i32) {
    %c0_i32 = arith.constant 0 : i32
    %c0_i32_0 = arith.constant 0 : i32
    %c0_i32_1 = arith.constant 0 : i32
    return %c0_i32, %c0_i32_0 : i32, i32
  }
  func.func @transform_13(%arg0: i32) -> (i32, i32) {
    %c0_i32 = arith.constant 0 : i32
    %c0_i32_0 = arith.constant 0 : i32
    %c0_i32_1 = arith.constant 0 : i32
    return %c0_i32, %c0_i32_0 : i32, i32
  }
  func.func @transform_14(%arg0: i32) -> (i32, i32, i32) {
    %c0_i32 = arith.constant 0 : i32
    %c0_i32_0 = arith.constant 0 : i32
    %c0_i32_1 = arith.constant 0 : i32
    return %arg0, %c0_i32, %c0_i32_0 : i32, i32, i32
  }
}

</mosaic_0001>

<llo_original>
// kernel: tpu_custom_call.1
$region0: #{tpu_custom_call.1}
  #allocation0 [shape = 'u32[]', space=smem, size = 0x4, offset = 0x4, fixed_abs, tag = 'smem constant byte address 0x4 - core index']
  #allocation1 [shape = 'u32[144,128]{1,0:T(1,128)}', space=vmem, size = 0x12000, scoped, tag = 'internal scratch']
  %s0 = inlined_call_operand.hbm [shape: f32[8,128], index: 0, kind: input, shape index: {}]
  %s1 = inlined_call_operand.hbm [shape: f32[8,128], index: 1, kind: output, shape index: {}]
  %s2 = sld [smem:[#allocation0]]
  $region18: #{tpu_custom_call.1} parent=0
    _
  %s4 = ssub.s32 1, %s2
  %s5 = scalar_select 0, %s4, %s2
  $region1: #{tpu_custom_call.1} parent=0
    #allocation2 [shape = 'u8[4096]{0}', space=vmem, size = 0x1000, scoped, tag = 'input window, operand 0, single buffered']
    #allocation3 [shape = 's32[1]{0}', space=sflag, size = 0x4, scoped, tag = 'scoped memory for tpu_custom_call.1']
    #allocation4 [shape = 's32[1]{0}', space=sflag, size = 0x4, scoped, tag = 'scoped memory for tpu_custom_call.1']
    #allocation5 [shape = 'u8[4096]{0}', space=vmem, size = 0x1000, scoped, tag = 'output window, operand 0, single buffered']
    %6 = vsyncpa [#allocation3], 0
    %7 = vsyncpa [#allocation4], 0
    // Predicated region
    $region2: #{tpu_custom_call.1} parent=1 // pred_check
      _
    $region3: #{tpu_custom_call.1} parent=1 // pred_check_branch
      %9 = sbr.rel (0) target = $region5
    $region4: #{tpu_custom_call.1} parent=1 // pred_region
      %s11 = ssub.s32 128, 128
      %12 = vsyncadd [#allocation3], %s11
      %s14 = sshll.u32 [#allocation2], 4
      %s15 = int_to_ptr.vmem [resolvable:$true] %s14
      %17 = dma.hbm_to_vmem [thread:$0]  %s0, 128, %s15, [#allocation3]
    $region5: #{tpu_custom_call.1} parent=1 // pred_fallthru
      _
    // Predicated region
    $region6: #{tpu_custom_call.1} parent=1 // pred_check
      _
    $region7: #{tpu_custom_call.1} parent=1 // pred_check_branch
      %19 = sbr.rel (0) target = $region9
    $region8: #{tpu_custom_call.1} parent=1 // pred_region
      %20 = dma.done [#allocation3], 128
    $region9: #{tpu_custom_call.1} parent=1 // pred_fallthru
      _
    %v21 = vld [vmem:[#allocation2] sm:$0xff]
    %22 = vrot.lane.b32.xlu0 %v21, 1
    %v23 = vpop.permute.xlu0 %22
    %24 = vst [vmem:[#allocation5] sm:$0xff] %v23
    // Predicated region
    $region10: #{tpu_custom_call.1} parent=1 // pred_check
      _
    $region11: #{tpu_custom_call.1} parent=1 // pred_check_branch
      %26 = sbr.rel (0) target = $region13
    $region12: #{tpu_custom_call.1} parent=1 // pred_region
      %s28 = ssub.s32 128, 128
      %29 = vsyncadd [#allocation4], %s28
      %s31 = sshll.u32 [#allocation5], 4
      %s32 = int_to_ptr.vmem [resolvable:$true] %s31
      %34 = dma.vmem_to_hbm [thread:$0]  %s32, 128, %s1, [#allocation4]
    $region13: #{tpu_custom_call.1} parent=1 // pred_fallthru
      _
    // Predicated region
    $region14: #{tpu_custom_call.1} parent=1 // pred_check
      _
    $region15: #{tpu_custom_call.1} parent=1 // pred_check_branch
      %36 = sbr.rel (0) target = $region17
    $region16: #{tpu_custom_call.1} parent=1 // pred_region
      %37 = dma.done [#allocation4], 128
    $region17: #{tpu_custom_call.1} parent=1 // pred_fallthru
      _
    %38 = vsyncpa [#allocation3], 1
    %39 = vsyncpa [#allocation4], 1

// kernel: deep_model_forward.1
$region0: #{deep_model_forward.1}
  #allocation0 [shape = 'u32[]', space=smem, size = 0x4, offset = 0x4, fixed_abs, tag = 'smem constant byte address 0x4 - core index']
  #allocation1 [shape = 'u32[144,128]{1,0:T(1,128)}', space=vmem, size = 0x12000, scoped, tag = 'internal scratch']
  #allocation2 [shape = 'f32[320,1024]{1,0:T(8,128)}', space=vmem, size = 0x140000, scoped, tag = 'scratch operand']
  %s0 = inlined_call_operand.vmem [shape: f32[1,8,1024], index: 0, kind: input, shape index: {}]
  %s1 = inlined_call_operand.vmem [shape: f32[8,80], index: 1, kind: input, shape index: {}]
  %s2 = inlined_call_operand.vmem [shape: f32[8,1], index: 2, kind: input, shape index: {}]
  %s3 = inlined_call_operand.vmem [shape: f32[16,80], index: 3, kind: input, shape index: {}]
  %s4 = inlined_call_operand.vmem [shape: f32[16,1], index: 4, kind: input, shape index: {}]
  %s5 = inlined_call_operand.vmem [shape: bf16[1024,256], index: 5, kind: input, shape index: {}]
  %s6 = inlined_call_operand.vmem [shape: f32[32,160], index: 6, kind: input, shape index: {}]
  %s7 = inlined_call_operand.vmem [shape: f32[32,1], index: 7, kind: input, shape index: {}]
  %s8 = inlined_call_operand.vmem [shape: bf16[256,256], index: 8, kind: input, shape index: {}]
  %s9 = inlined_call_operand.vmem [shape: f32[64,320], index: 9, kind: input, shape index: {}]
  %s10 = inlined_call_operand.vmem [shape: f32[64,1], index: 10, kind: input, shape index: {}]
  %s11 = inlined_call_operand.vmem [shape: bf16[256,256], index: 11, kind: input, shape index: {}]
  %s12 = inlined_call_operand.vmem [shape: bf16[8,64], index: 12, kind: input, shape index: {}]
  %s13 = inlined_call_operand.vmem [shape: bf16[256,256], index: 13, kind: input, shape index: {}]
  %s14 = inlined_call_operand.vmem [shape: f32[1,8,256], index: 14, kind: output, shape index: {}]
  %s15 = sld [smem:[#allocation0]]
  $region66: #{deep_model_forward.1} parent=0
    _
  %s17 = ssub.s32 1, %s15
  %s18 = scalar_select 0, %s17, %s15
  // Predicated region
  $region2: #{deep_model_forward.1} parent=0 // pred_check
    _
  $region3: #{deep_model_forward.1} parent=0 // pred_check_branch
    %20 = sbr.rel (0) target = $region5
  $region4: #{deep_model_forward.1} parent=0 // pred_region
    _
  $region5: #{deep_model_forward.1} parent=0 // pred_fallthru
    _
  // Predicated region
  $region6: #{deep_model_forward.1} parent=0 // pred_check
    _
  $region7: #{deep_model_forward.1} parent=0 // pred_check_branch
    %22 = sbr.rel (0) target = $region9
  $region8: #{deep_model_forward.1} parent=0 // pred_region
    _
  $region9: #{deep_model_forward.1} parent=0 // pred_fallthru
    _
  // Predicated region
  $region10: #{deep_model_forward.1} parent=0 // pred_check
    _
  $region11: #{deep_model_forward.1} parent=0 // pred_check_branch
    %24 = sbr.rel (0) target = $region13
  $region12: #{deep_model_forward.1} parent=0 // pred_region
    _
  $region13: #{deep_model_forward.1} parent=0 // pred_fallthru
    _
  // Predicated region
  $region14: #{deep_model_forward.1} parent=0 // pred_check
    _
  $region15: #{deep_model_forward.1} parent=0 // pred_check_branch
    %26 = sbr.rel (0) target = $region17
  $region16: #{deep_model_forward.1} parent=0 // pred_region
    _
  $region17: #{deep_model_forward.1} parent=0 // pred_fallthru
    _
  // Predicated region
  $region18: #{deep_model_forward.1} parent=0 // pred_check
    _
  $region19: #{deep_model_forward.1} parent=0 // pred_check_branch
    %28 = sbr.rel (0) target = $region21
  $region20: #{deep_model_forward.1} parent=0 // pred_region
    _
  $region21: #{deep_model_forward.1} parent=0 // pred_fallthru
    _
  // Predicated region
  $region22: #{deep_model_forward.1} parent=0 // pred_check
    _
  $region23: #{deep_model_forward.1} parent=0 // pred_check_branch
    %30 = sbr.rel (0) target = $region25
  $region24: #{deep_model_forward.1} parent=0 // pred_region
    _
  $region25: #{deep_model_forward.1} parent=0 // pred_fallthru
    _
  // Predicated region
  $region26: #{deep_model_forward.1} parent=0 // pred_check
    _
  $region27: #{deep_model_forward.1} parent=0 // pred_check_branch
    %32 = sbr.rel (0) target = $region29
  $region28: #{deep_model_forward.1} parent=0 // pred_region
    _
  $region29: #{deep_model_forward.1} parent=0 // pred_fallthru
    _
  // Predicated region
  $region30: #{deep_model_forward.1} parent=0 // pred_check
    _
  $region31: #{deep_model_forward.1} parent=0 // pred_check_branch
    %34 = sbr.rel (0) target = $region33
  $region32: #{deep_model_forward.1} parent=0 // pred_region
    _
  $region33: #{deep_model_forward.1} parent=0 // pred_fallthru
    _
  // Predicated region
  $region34: #{deep_model_forward.1} parent=0 // pred_check
    _
  $region35: #{deep_model_forward.1} parent=0 // pred_check_branch
    %36 = sbr.rel (0) target = $region37
  $region36: #{deep_model_forward.1} parent=0 // pred_region
    _
  $region37: #{deep_model_forward.1} parent=0 // pred_fallthru
    _
  // Predicated region
  $region38: #{deep_model_forward.1} parent=0 // pred_check
    _
  $region39: #{deep_model_forward.1} parent=0 // pred_check_branch
    %38 = sbr.rel (0) target = $region41
  $region40: #{deep_model_forward.1} parent=0 // pred_region
    _
  $region41: #{deep_model_forward.1} parent=0 // pred_fallthru
    _
  // Predicated region
  $region42: #{deep_model_forward.1} parent=0 // pred_check
    _
  $region43: #{deep_model_forward.1} parent=0 // pred_check_branch
    %40 = sbr.rel (0) target = $region45
  $region44: #{deep_model_forward.1} parent=0 // pred_region
    _
  $region45: #{deep_model_forward.1} parent=0 // pred_fallthru
    _
  // Predicated region
  $region46: #{deep_model_forward.1} parent=0 // pred_check
    _
  $region47: #{deep_model_forward.1} parent=0 // pred_check_branch
    %42 = sbr.rel (0) target = $region49
  $region48: #{deep_model_forward.1} parent=0 // pred_region
    _
  $region49: #{deep_model_forward.1} parent=0 // pred_fallthru
    _
  // Predicated region
  $region50: #{deep_model_forward.1} parent=0 // pred_check
    _
  $region51: #{deep_model_forward.1} parent=0 // pred_check_branch
    %44 = sbr.rel (0) target = $region53
  $region52: #{deep_model_forward.1} parent=0 // pred_region
    _
  $region53: #{deep_model_forward.1} parent=0 // pred_fallthru
    _
  // Predicated region
  $region54: #{deep_model_forward.1} parent=0 // pred_check
    _
  $region55: #{deep_model_forward.1} parent=0 // pred_check_branch
    %46 = sbr.rel (0) target = $region57
  $region56: #{deep_model_forward.1} parent=0 // pred_region
    _
  $region57: #{deep_model_forward.1} parent=0 // pred_fallthru
    _
  %v48 = vld [vmem:[%s0] sm:$0xff]
  %v49 = vld [vmem:[%s0 + $0x8] sm:$0xff]
  %v50 = vld [vmem:[%s0 + $0x10] sm:$0xff]
  %v51 = vld [vmem:[%s0 + $0x18] sm:$0xff]
  %v52 = vld [vmem:[%s0 + $0x20] sm:$0xff]
  %v53 = vld [vmem:[%s0 + $0x28] sm:$0xff]
  %v54 = vld [vmem:[%s0 + $0x30] sm:$0xff]
  %v55 = vld [vmem:[%s0 + $0x38] sm:$0xff]
  %56 = vst [vmem:[#allocation2] sm:$0xff] %v48
  %57 = vst [vmem:[#allocation2 + $0x8] sm:$0xff] %v49
  %58 = vst [vmem:[#allocation2 + $0x10] sm:$0xff] %v50
  %59 = vst [vmem:[#allocation2 + $0x18] sm:$0xff] %v51
  %60 = vst [vmem:[#allocation2 + $0x20] sm:$0xff] %v52
  %61 = vst [vmem:[#allocation2 + $0x28] sm:$0xff] %v53
  %62 = vst [vmem:[#allocation2 + $0x30] sm:$0xff] %v54
  %63 = vst [vmem:[#allocation2 + $0x38] sm:$0xff] %v55
  %72 = vrot.lane.b32.xlu0 %v48, 127
  %v73 = vpop.permute.xlu0 %72
  %74 = vrot.lane.b32.xlu0 %v49, 127
  %v75 = vpop.permute.xlu0 %74
  %76 = vrot.lane.b32.xlu0 %v50, 127
  %v77 = vpop.permute.xlu0 %76
  %78 = vrot.lane.b32.xlu0 %v51, 127
  %v79 = vpop.permute.xlu0 %78
  %80 = vrot.lane.b32.xlu0 %v52, 127
  %v81 = vpop.permute.xlu0 %80
  %82 = vrot.lane.b32.xlu0 %v53, 127
  %v83 = vpop.permute.xlu0 %82
  %84 = vrot.lane.b32.xlu0 %v54, 127
  %v85 = vpop.permute.xlu0 %84
  %86 = vrot.lane.b32.xlu0 %v55, 127
  %v87 = vpop.permute.xlu0 %86
  %vm88 = vcmask 1039360
  %v89 = vsel %vm88, %v73, %v75
  %v90 = vsel %vm88, %v75, %v77
  %v91 = vsel %vm88, %v77, %v79
  %v92 = vsel %vm88, %v79, %v81
  %v93 = vsel %vm88, %v81, %v83
  %v94 = vsel %vm88, %v83, %v85
  %v95 = vsel %vm88, %v85, %v87
  %v105 = vsel %vm88, %v87, %v73
  %106 = vst [vmem:[#allocation2 + $0x40] sm:$0xff] %v89
  %107 = vst [vmem:[#allocation2 + $0x48] sm:$0xff] %v90
  %108 = vst [vmem:[#allocation2 + $0x50] sm:$0xff] %v91
  %109 = vst [vmem:[#allocation2 + $0x58] sm:$0xff] %v92
  %110 = vst [vmem:[#allocation2 + $0x60] sm:$0xff] %v93
  %111 = vst [vmem:[#allocation2 + $0x68] sm:$0xff] %v94
  %112 = vst [vmem:[#allocation2 + $0x70] sm:$0xff] %v95
  %113 = vst [vmem:[#allocation2 + $0x78] sm:$0xff] %v105
  %114 = vrot.lane.b32.xlu0 %v48, 126
  %v115 = vpop.permute.xlu0 %114
  %116 = vrot.lane.b32.xlu0 %v49, 126
  %v117 = vpop.permute.xlu0 %116
  %118 = vrot.lane.b32.xlu0 %v50, 126
  %v119 = vpop.permute.xlu0 %118
  %120 = vrot.lane.b32.xlu0 %v51, 126
  %v121 = vpop.permute.xlu0 %120
  %122 = vrot.lane.b32.xlu0 %v52, 126
  %v123 = vpop.permute.xlu0 %122
  %124 = vrot.lane.b32.xlu0 %v53, 126
  %v125 = vpop.permute.xlu0 %124
  %126 = vrot.lane.b32.xlu0 %v54, 126
  %v127 = vpop.permute.xlu0 %126
  %128 = vrot.lane.b32.xlu0 %v55, 126
  %v129 = vpop.permute.xlu0 %128
  %vm130 = vcmask 1031168
  %v131 = vsel %vm130, %v115, %v117
  %v132 = vsel %vm130, %v117, %v119
  %v133 = vsel %vm130, %v119, %v121
  %v134 = vsel %vm130, %v121, %v123
  %v135 = vsel %vm130, %v123, %v125
  %v136 = vsel %vm130, %v125, %v127
  %v137 = vsel %vm130, %v127, %v129
  %v147 = vsel %vm130, %v129, %v115
  %148 = vst [vmem:[#allocation2 + $0x80] sm:$0xff] %v131
  %149 = vst [vmem:[#allocation2 + $0x88] sm:$0xff] %v132
  %150 = vst [vmem:[#allocation2 + $0x90] sm:$0xff] %v133
  %151 = vst [vmem:[#allocation2 + $0x98] sm:$0xff] %v134
  %152 = vst [vmem:[#allocation2 + $0xa0] sm:$0xff] %v135
  %153 = vst [vmem:[#allocation2 + $0xa8] sm:$0xff] %v136
  %154 = vst [vmem:[#allocation2 + $0xb0] sm:$0xff] %v137
  %155 = vst [vmem:[#allocation2 + $0xb8] sm:$0xff] %v147
  %156 = vrot.lane.b32.xlu0 %v48, 125
  %v157 = vpop.permute.xlu0 %156
  %158 = vrot.lane.b32.xlu0 %v49, 125
  %v159 = vpop.permute.xlu0 %158
  %160 = vrot.lane.b32.xlu0 %v50, 125
  %v161 = vpop.permute.xlu0 %160
  %162 = vrot.lane.b32.xlu0 %v51, 125
  %v163 = vpop.permute.xlu0 %162
  %164 = vrot.lane.b32.xlu0 %v52, 125
  %v165 = vpop.permute.xlu0 %164
  %166 = vrot.lane.b32.xlu0 %v53, 125
  %v167 = vpop.permute.xlu0 %166
  %168 = vrot.lane.b32.xlu0 %v54, 125
  %v169 = vpop.permute.xlu0 %168
  %170 = vrot.lane.b32.xlu0 %v55, 125
  %v171 = vpop.permute.xlu0 %170
  %vm172 = vcmask 1022976
  %v173 = vsel %vm172, %v157, %v159
  %v174 = vsel %vm172, %v159, %v161
  %v175 = vsel %vm172, %v161, %v163
  %v176 = vsel %vm172, %v163, %v165
  %v177 = vsel %vm172, %v165, %v167
  %v178 = vsel %vm172, %v167, %v169
  %v179 = vsel %vm172, %v169, %v171
  %v189 = vsel %vm172, %v171, %v157
  %190 = vst [vmem:[#allocation2 + $0xc0] sm:$0xff] %v173
  %191 = vst [vmem:[#allocation2 + $0xc8] sm:$0xff] %v174
  %192 = vst [vmem:[#allocation2 + $0xd0] sm:$0xff] %v175
  %193 = vst [vmem:[#allocation2 + $0xd8] sm:$0xff] %v176
  %194 = vst [vmem:[#allocation2 + $0xe0] sm:$0xff] %v177
  %195 = vst [vmem:[#allocation2 + $0xe8] sm:$0xff] %v178
  %196 = vst [vmem:[#allocation2 + $0xf0] sm:$0xff] %v179
  %197 = vst [vmem:[#allocation2 + $0xf8] sm:$0xff] %v189
  %198 = vrot.lane.b32.xlu0 %v48, 124
  %v199 = vpop.permute.xlu0 %198
  %200 = vrot.lane.b32.xlu0 %v49, 124
  %v201 = vpop.permute.xlu0 %200
  %202 = vrot.lane.b32.xlu0 %v50, 124
  %v203 = vpop.permute.xlu0 %202
  %204 = vrot.lane.b32.xlu0 %v51, 124
  %v205 = vpop.permute.xlu0 %204
  %206 = vrot.lane.b32.xlu0 %v52, 124
  %v207 = vpop.permute.xlu0 %206
  %208 = vrot.lane.b32.xlu0 %v53, 124
  %v209 = vpop.permute.xlu0 %208
  %210 = vrot.lane.b32.xlu0 %v54, 124
  %v211 = vpop.permute.xlu0 %210
  %212 = vrot.lane.b32.xlu0 %v55, 124
  %v213 = vpop.permute.xlu0 %212
  %vm214 = vcmask 1014784
  %v215 = vsel %vm214, %v199, %v201
  %v216 = vsel %vm214, %v201, %v203
  %v217 = vsel %vm214, %v203, %v205
  %v218 = vsel %vm214, %v205, %v207
  %v219 = vsel %vm214, %v207, %v209
  %v220 = vsel %vm214, %v209, %v211
  %v221 = vsel %vm214, %v211, %v213
  %v231 = vsel %vm214, %v213, %v199
  %232 = vst [vmem:[#allocation2 + $0x100] sm:$0xff] %v215
  %233 = vst [vmem:[#allocation2 + $0x108] sm:$0xff] %v216
  %234 = vst [vmem:[#allocation2 + $0x110] sm:$0xff] %v217
  %235 = vst [vmem:[#allocation2 + $0x118] sm:$0xff] %v218
  %236 = vst [vmem:[#allocation2 + $0x120] sm:$0xff] %v219
  %237 = vst [vmem:[#allocation2 + $0x128] sm:$0xff] %v220
  %238 = vst [vmem:[#allocation2 + $0x130] sm:$0xff] %v221
  %239 = vst [vmem:[#allocation2 + $0x138] sm:$0xff] %v231
  %240 = vrot.lane.b32.xlu0 %v48, 123
  %v241 = vpop.permute.xlu0 %240
  %242 = vrot.lane.b32.xlu0 %v49, 123
  %v243 = vpop.permute.xlu0 %242
  %244 = vrot.lane.b32.xlu0 %v50, 123
  %v245 = vpop.permute.xlu0 %244
  %246 = vrot.lane.b32.xlu0 %v51, 123
  %v247 = vpop.permute.xlu0 %246
  %248 = vrot.lane.b32.xlu0 %v52, 123
  %v249 = vpop.permute.xlu0 %248
  %250 = vrot.lane.b32.xlu0 %v53, 123
  %v251 = vpop.permute.xlu0 %250
  %252 = vrot.lane.b32.xlu0 %v54, 123
  %v253 = vpop.permute.xlu0 %252
  %254 = vrot.lane.b32.xlu0 %v55, 123
  %v255 = vpop.permute.xlu0 %254
  %vm256 = vcmask 1006592
  %v257 = vsel %vm256, %v241, %v243
  %v258 = vsel %vm256, %v243, %v245
  %v259 = vsel %vm256, %v245, %v247
  %v260 = vsel %vm256, %v247, %v249
  %v261 = vsel %vm256, %v249, %v251
  %v262 = vsel %vm256, %v251, %v253
  %v263 = vsel %vm256, %v253, %v255
  %v273 = vsel %vm256, %v255, %v241
  %274 = vst [vmem:[#allocation2 + $0x140] sm:$0xff] %v257
  %275 = vst [vmem:[#allocation2 + $0x148] sm:$0xff] %v258
  %276 = vst [vmem:[#allocation2 + $0x150] sm:$0xff] %v259
  %277 = vst [vmem:[#allocation2 + $0x158] sm:$0xff] %v260
  %278 = vst [vmem:[#allocation2 + $0x160] sm:$0xff] %v261
  %279 = vst [vmem:[#allocation2 + $0x168] sm:$0xff] %v262
  %280 = vst [vmem:[#allocation2 + $0x170] sm:$0xff] %v263
  %281 = vst [vmem:[#allocation2 + $0x178] sm:$0xff] %v273
  %282 = vrot.lane.b32.xlu0 %v48, 122
  %v283 = vpop.permute.xlu0 %282
  %284 = vrot.lane.b32.xlu0 %v49, 122
  %v285 = vpop.permute.xlu0 %284
  %286 = vrot.lane.b32.xlu0 %v50, 122
  %v287 = vpop.permute.xlu0 %286
  %288 = vrot.lane.b32.xlu0 %v51, 122
  %v289 = vpop.permute.xlu0 %288
  %290 = vrot.lane.b32.xlu0 %v52, 122
  %v291 = vpop.permute.xlu0 %290
  %292 = vrot.lane.b32.xlu0 %v53, 122
  %v293 = vpop.permute.xlu0 %292
  %294 = vrot.lane.b32.xlu0 %v54, 122
  %v295 = vpop.permute.xlu0 %294
  %296 = vrot.lane.b32.xlu0 %v55, 122
  %v297 = vpop.permute.xlu0 %296
  %vm298 = vcmask 998400
  %v299 = vsel %vm298, %v283, %v285
  %v300 = vsel %vm298, %v285, %v287
  %v301 = vsel %vm298, %v287, %v289
  %v302 = vsel %vm298, %v289, %v291
  %v303 = vsel %vm298, %v291, %v293
  %v304 = vsel %vm298, %v293, %v295
  %v305 = vsel %vm298, %v295, %v297
  %v315 = vsel %vm298, %v297, %v283
  %316 = vst [vmem:[#allocation2 + $0x180] sm:$0xff] %v299
  %317 = vst [vmem:[#allocation2 + $0x188] sm:$0xff] %v300
  %318 = vst [vmem:[#allocation2 + $0x190] sm:$0xff] %v301
  %319 = vst [vmem:[#allocation2 + $0x198] sm:$0xff] %v302
  %320 = vst [vmem:[#allocation2 + $0x1a0] sm:$0xff] %v303
  %321 = vst [vmem:[#allocation2 + $0x1a8] sm:$0xff] %v304
  %322 = vst [vmem:[#allocation2 + $0x1b0] sm:$0xff] %v305
  %323 = vst [vmem:[#allocation2 + $0x1b8] sm:$0xff] %v315
  %324 = vrot.lane.b32.xlu0 %v48, 121
  %v325 = vpop.permute.xlu0 %324
  %326 = vrot.lane.b32.xlu0 %v49, 121
  %v327 = vpop.permute.xlu0 %326
  %328 = vrot.lane.b32.xlu0 %v50, 121
  %v329 = vpop.permute.xlu0 %328
  %330 = vrot.lane.b32.xlu0 %v51, 121
  %v331 = vpop.permute.xlu0 %330
  %332 = vrot.lane.b32.xlu0 %v52, 121
  %v333 = vpop.permute.xlu0 %332
  %334 = vrot.lane.b32.xlu0 %v53, 121
  %v335 = vpop.permute.xlu0 %334
  %336 = vrot.lane.b32.xlu0 %v54, 121
  %v337 = vpop.permute.xlu0 %336
  %338 = vrot.lane.b32.xlu0 %v55, 121
  %v339 = vpop.permute.xlu0 %338
  %vm340 = vcmask 990208
  %v341 = vsel %vm340, %v325, %v327
  %v342 = vsel %vm340, %v327, %v329
  %v343 = vsel %vm340, %v329, %v331
  %v344 = vsel %vm340, %v331, %v333
  %v345 = vsel %vm340, %v333, %v335
  %v346 = vsel %vm340, %v335, %v337
  %v347 = vsel %vm340, %v337, %v339
  %v357 = vsel %vm340, %v339, %v325
  %358 = vst [vmem:[#allocation2 + $0x1c0] sm:$0xff] %v341
  %359 = vst [vmem:[#allocation2 + $0x1c8] sm:$0xff] %v342
  %360 = vst [vmem:[#allocation2 + $0x1d0] sm:$0xff] %v343
  %361 = vst [vmem:[#allocation2 + $0x1d8] sm:$0xff] %v344
  %362 = vst [vmem:[#allocation2 + $0x1e0] sm:$0xff] %v345
  %363 = vst [vmem:[#allocation2 + $0x1e8] sm:$0xff] %v346
  %364 = vst [vmem:[#allocation2 + $0x1f0] sm:$0xff] %v347
  %365 = vst [vmem:[#allocation2 + $0x1f8] sm:$0xff] %v357
  %366 = vrot.lane.b32.xlu0 %v48, 120
  %v367 = vpop.permute.xlu0 %366
  %368 = vrot.lane.b32.xlu0 %v49, 120
  %v369 = vpop.permute.xlu0 %368
  %370 = vrot.lane.b32.xlu0 %v50, 120
  %v371 = vpop.permute.xlu0 %370
  %372 = vrot.lane.b32.xlu0 %v51, 120
  %v373 = vpop.permute.xlu0 %372
  %374 = vrot.lane.b32.xlu0 %v52, 120
  %v375 = vpop.permute.xlu0 %374
  %376 = vrot.lane.b32.xlu0 %v53, 120
  %v377 = vpop.permute.xlu0 %376
  %378 = vrot.lane.b32.xlu0 %v54, 120
  %v379 = vpop.permute.xlu0 %378
  %380 = vrot.lane.b32.xlu0 %v55, 120
  %v381 = vpop.permute.xlu0 %380
  %vm382 = vcmask 982016
  %v383 = vsel %vm382, %v367, %v369
  %v384 = vsel %vm382, %v369, %v371
  %v385 = vsel %vm382, %v371, %v373
  %v386 = vsel %vm382, %v373, %v375
  %v387 = vsel %vm382, %v375, %v377
  %v388 = vsel %vm382, %v377, %v379
  %v389 = vsel %vm382, %v379, %v381
  %v399 = vsel %vm382, %v381, %v367
  %400 = vst [vmem:[#allocation2 + $0x200] sm:$0xff] %v383
  %401 = vst [vmem:[#allocation2 + $0x208] sm:$0xff] %v384
  %402 = vst [vmem:[#allocation2 + $0x210] sm:$0xff] %v385
  %403 = vst [vmem:[#allocation2 + $0x218] sm:$0xff] %v386
  %404 = vst [vmem:[#allocation2 + $0x220] sm:$0xff] %v387
  %405 = vst [vmem:[#allocation2 + $0x228] sm:$0xff] %v388
  %406 = vst [vmem:[#allocation2 + $0x230] sm:$0xff] %v389
  %407 = vst [vmem:[#allocation2 + $0x238] sm:$0xff] %v399
  %408 = vrot.lane.b32.xlu0 %v48, 119
  %v409 = vpop.permute.xlu0 %408
  %410 = vrot.lane.b32.xlu0 %v49, 119
  %v411 = vpop.permute.xlu0 %410
  %412 = vrot.lane.b32.xlu0 %v50, 119
  %v413 = vpop.permute.xlu0 %412
  %414 = vrot.lane.b32.xlu0 %v51, 119
  %v415 = vpop.permute.xlu0 %414
  %416 = vrot.lane.b32.xlu0 %v52, 119
  %v417 = vpop.permute.xlu0 %416
  %418 = vrot.lane.b32.xlu0 %v53, 119
  %v419 = vpop.permute.xlu0 %418
  %420 = vrot.lane.b32.xlu0 %v54, 119
  %v421 = vpop.permute.xlu0 %420
  %422 = vrot.lane.b32.xlu0 %v55, 119
  %v423 = vpop.permute.xlu0 %422
  %vm424 = vcmask 973824
  %v425 = vsel %vm424, %v409, %v411
  %v426 = vsel %vm424, %v411, %v413
  %v427 = vsel %vm424, %v413, %v415
  %v428 = vsel %vm424, %v415, %v417
  %v429 = vsel %vm424, %v417, %v419
  %v430 = vsel %vm424, %v419, %v421
  %v431 = vsel %vm424, %v421, %v423
  %v441 = vsel %vm424, %v423, %v409
  %442 = vst [vmem:[#allocation2 + $0x240] sm:$0xff] %v425
  %443 = vst [vmem:[#allocation2 + $0x248] sm:$0xff] %v426
  %444 = vst [vmem:[#allocation2 + $0x250] sm:$0xff] %v427
  %445 = vst [vmem:[#allocation2 + $0x258] sm:$0xff] %v428
  %446 = vst [vmem:[#allocation2 + $0x260] sm:$0xff] %v429
  %447 = vst [vmem:[#allocation2 + $0x268] sm:$0xff] %v430
  %448 = vst [vmem:[#allocation2 + $0x270] sm:$0xff] %v431
  %449 = vst [vmem:[#allocation2 + $0x278] sm:$0xff] %v441
  %v450 = vld [vmem:[#allocation2] sm:$0xff]
  %v451 = vld [vmem:[#allocation2 + $0x8] sm:$0xff]
  %v452 = vld [vmem:[#allocation2 + $0x10] sm:$0xff]
  %v453 = vld [vmem:[#allocation2 + $0x18] sm:$0xff]
  %v454 = vld [vmem:[#allocation2 + $0x20] sm:$0xff]
  %v455 = vld [vmem:[#allocation2 + $0x28] sm:$0xff]
  %v456 = vld [vmem:[#allocation2 + $0x30] sm:$0xff]
  %v457 = vld [vmem:[#allocation2 + $0x38] sm:$0xff]
  %v458 = vld [vmem:[#allocation2 + $0x40] sm:$0xff]
  %v459 = vld [vmem:[#allocation2 + $0x48] sm:$0xff]
  %v460 = vld [vmem:[#allocation2 + $0x50] sm:$0xff]
  %v461 = vld [vmem:[#allocation2 + $0x58] sm:$0xff]
  %v462 = vld [vmem:[#allocation2 + $0x60] sm:$0xff]
  %v463 = vld [vmem:[#allocation2 + $0x68] sm:$0xff]
  %v464 = vld [vmem:[#allocation2 + $0x70] sm:$0xff]
  %v465 = vld [vmem:[#allocation2 + $0x78] sm:$0xff]
  %v466 = vld [vmem:[#allocation2 + $0x80] sm:$0xff]
  %v467 = vld [vmem:[#allocation2 + $0x88] sm:$0xff]
  %v468 = vld [vmem:[#allocation2 + $0x90] sm:$0xff]
  %v469 = vld [vmem:[#allocation2 + $0x98] sm:$0xff]
  %v470 = vld [vmem:[#allocation2 + $0xa0] sm:$0xff]
  %v471 = vld [vmem:[#allocation2 + $0xa8] sm:$0xff]
  %v472 = vld [vmem:[#allocation2 + $0xb0] sm:$0xff]
  %v473 = vld [vmem:[#allocation2 + $0xb8] sm:$0xff]
  %v474 = vld [vmem:[#allocation2 + $0xc0] sm:$0xff]
  %v475 = vld [vmem:[#allocation2 + $0xc8] sm:$0xff]
  %v476 = vld [vmem:[#allocation2 + $0xd0] sm:$0xff]
  %v477 = vld [vmem:[#allocation2 + $0xd8] sm:$0xff]
  %v478 = vld [vmem:[#allocation2 + $0xe0] sm:$0xff]
  %v479 = vld [vmem:[#allocation2 + $0xe8] sm:$0xff]
  %v480 = vld [vmem:[#allocation2 + $0xf0] sm:$0xff]
  %v481 = vld [vmem:[#allocation2 + $0xf8] sm:$0xff]
  %v482 = vld [vmem:[#allocation2 + $0x100] sm:$0xff]
  %v483 = vld [vmem:[#allocation2 + $0x108] sm:$0xff]
  %v484 = vld [vmem:[#allocation2 + $0x110] sm:$0xff]
  %v485 = vld [vmem:[#allocation2 + $0x118] sm:$0xff]
  %v486 = vld [vmem:[#allocation2 + $0x120] sm:$0xff]
  %v487 = vld [vmem:[#allocation2 + $0x128] sm:$0xff]
  %v488 = vld [vmem:[#allocation2 + $0x130] sm:$0xff]
  %v489 = vld [vmem:[#allocation2 + $0x138] sm:$0xff]
  %v490 = vld [vmem:[#allocation2 + $0x140] sm:$0xff]
  %v491 = vld [vmem:[#allocation2 + $0x148] sm:$0xff]
  %v492 = vld [vmem:[#allocation2 + $0x150] sm:$0xff]
  %v493 = vld [vmem:[#allocation2 + $0x158] sm:$0xff]
  %v494 = vld [vmem:[#allocation2 + $0x160] sm:$0xff]
  %v495 = vld [vmem:[#allocation2 + $0x168] sm:$0xff]
  %v496 = vld [vmem:[#allocation2 + $0x170] sm:$0xff]
  %v497 = vld [vmem:[#allocation2 + $0x178] sm:$0xff]
  %v498 = vld [vmem:[#allocation2 + $0x180] sm:$0xff]
  %v499 = vld [vmem:[#allocation2 + $0x188] sm:$0xff]
  %v500 = vld [vmem:[#allocation2 + $0x190] sm:$0xff]
  %v501 = vld [vmem:[#allocation2 + $0x198] sm:$0xff]
  %v502 = vld [vmem:[#allocation2 + $0x1a0] sm:$0xff]
  %v503 = vld [vmem:[#allocation2 + $0x1a8] sm:$0xff]
  %v504 = vld [vmem:[#allocation2 + $0x1b0] sm:$0xff]
  %v505 = vld [vmem:[#allocation2 + $0x1b8] sm:$0xff]
  %v506 = vld [vmem:[#allocation2 + $0x1c0] sm:$0xff]
  %v507 = vld [vmem:[#allocation2 + $0x1c8] sm:$0xff]
  %v508 = vld [vmem:[#allocation2 + $0x1d0] sm:$0xff]
  %v509 = vld [vmem:[#allocation2 + $0x1d8] sm:$0xff]
  %v510 = vld [vmem:[#allocation2 + $0x1e0] sm:$0xff]
  %v511 = vld [vmem:[#allocation2 + $0x1e8] sm:$0xff]
  %v512 = vld [vmem:[#allocation2 + $0x1f0] sm:$0xff]
  %v513 = vld [vmem:[#allocation2 + $0x1f8] sm:$0xff]
  %v514 = vld [vmem:[#allocation2 + $0x200] sm:$0xff]
  %v515 = vld [vmem:[#allocation2 + $0x208] sm:$0xff]
  %v516 = vld [vmem:[#allocation2 + $0x210] sm:$0xff]
  %v517 = vld [vmem:[#allocation2 + $0x218] sm:$0xff]
  %v518 = vld [vmem:[#allocation2 + $0x220] sm:$0xff]
  %v519 = vld [vmem:[#allocation2 + $0x228] sm:$0xff]
  %v520 = vld [vmem:[#allocation2 + $0x230] sm:$0xff]
  %v521 = vld [vmem:[#allocation2 + $0x238] sm:$0xff]
  %v522 = vld [vmem:[#allocation2 + $0x240] sm:$0xff]
  %v523 = vld [vmem:[#allocation2 + $0x248] sm:$0xff]
  %v524 = vld [vmem:[#allocation2 + $0x250] sm:$0xff]
  %v525 = vld [vmem:[#allocation2 + $0x258] sm:$0xff]
  %v526 = vld [vmem:[#allocation2 + $0x260] sm:$0xff]
  %v527 = vld [vmem:[#allocation2 + $0x268] sm:$0xff]
  %v528 = vld [vmem:[#allocation2 + $0x270] sm:$0xff]
  %v529 = vld [vmem:[#allocation2 + $0x278] sm:$0xff]
  %v530 = vld [vmem:[%s1] sm:$0xff]
  %v531 = vld [vmem:[%s2] sm:$0xff]
  %533 = vset.pattern.permute.xlu0 0
  %534 = vperm.xlu0 %533, %v531
  %v535 = vpop.permute.xlu0 %534
  %vm537 = vcmask 654336
  %v539 = vsel %vm537, %v530, 0
  %541 = vmatprep.subr.mxu0 0.0
  %542 = vmatpush1.msra.mxu0 0.0
  %543 = vmatprep.subr.mxu0 0.0
  %544 = vmatpush1.msra.mxu0 0.0
  %545 = vmatprep.subr.mxu0 0.0
  %546 = vmatpush1.msra.mxu0 0.0
  %547 = vmatprep.subr.mxu0 0.0
  %548 = vmatpush1.msra.mxu0 0.0
  %549 = vmatprep.subr.mxu0 0.0
  %550 = vmatpush1.msra.mxu0 0.0
  %551 = vmatprep.subr.mxu0 0.0
  %552 = vmatpush1.msra.mxu0 0.0
  %553 = vmatprep.subr.mxu0 %v523
  %554 = vmatpush1.msra.mxu0 %v522
  %555 = vmatprep.subr.mxu0 %v515
  %556 = vmatpush1.msra.mxu0 %v514
  %557 = vmatprep.subr.mxu0 %v507
  %558 = vmatpush1.msra.mxu0 %v506
  %559 = vmatprep.subr.mxu0 %v499
  %560 = vmatpush1.msra.mxu0 %v498
  %561 = vmatprep.subr.mxu0 %v491
  %562 = vmatpush1.msra.mxu0 %v490
  %563 = vmatprep.subr.mxu0 %v483
  %564 = vmatpush1.msra.mxu0 %v482
  %565 = vmatprep.subr.mxu0 %v475
  %566 = vmatpush1.msra.mxu0 %v474
  %567 = vmatprep.subr.mxu0 %v467
  %568 = vmatpush1.msra.mxu0 %v466
  %569 = vmatprep.subr.mxu0 %v459
  %570 = vmatpush1.msra.mxu0 %v458
  %571 = vmatprep.subr.mxu0 %v451
  %572 = vmatpush1.msra.mxu0 %v450
  %573 = vmatprep.subr.mxu0 0.0
  %574 = vmatpush2.msra.mxu0 0.0
  %575 = vmatprep.subr.mxu0 0.0
  %576 = vmatpush2.msra.mxu0 0.0
  %577 = vmatprep.subr.mxu0 0.0
  %578 = vmatpush2.msra.mxu0 0.0
  %579 = vmatprep.subr.mxu0 0.0
  %580 = vmatpush2.msra.mxu0 0.0
  %581 = vmatprep.subr.mxu0 0.0
  %582 = vmatpush2.msra.mxu0 0.0
  %583 = vmatprep.subr.mxu0 0.0
  %584 = vmatpush2.msra.mxu0 0.0
  %585 = vmatprep.subr.mxu0 0.0
  %586 = vmatpush2.msra.mxu0 0.0
  %587 = vmatprep.subr.mxu0 0.0
  %588 = vmatpush2.msra.mxu0 0.0
  %589 = vmatprep.subr.mxu0 0.0
  %590 = vmatpush2.msra.mxu0 0.0
  %591 = vmatprep.subr.mxu0 0.0
  %592 = vmatpush2.msra.mxu0 0.0
  %593 = vmatprep.subr.mxu0 0.0
  %594 = vmatpush2.msra.mxu0 0.0
  %595 = vmatprep.subr.mxu0 0.0
  %596 = vmatpush2.msra.mxu0 0.0
  %597 = vmatprep.subr.mxu0 0.0
  %598 = vmatpush2.msra.mxu0 0.0
  %599 = vmatprep.subr.mxu0 0.0
  %600 = vmatpush2.msra.mxu0 0.0
  %601 = vmatprep.subr.mxu0 0.0
  %602 = vmatpush2.msra.mxu0 0.0
  %603 = vmatprep.subr.mxu0 0.0
  %604 = vmatpush2.msra.mxu0 0.0
  %605 = vmatprep.mubr.f32.mxu0 0.0
  %606 = vmatmul.mubr.f32.gmra.mxu0 %v539
  %v607 = vpop.f32.mrf.mxu0
  %v608 = vadd.f32 %v535, %v607
  %v609 = vpop.f32.mrf.mxu0
  %v610 = vadd.f32 %v535, %v609
  %611 = vdwg.mxu0
  %612 = vmatprep.subr.mxu0 0.0
  %613 = vmatpush1.msra.mxu0 0.0
  %614 = vmatprep.subr.mxu0 0.0
  %615 = vmatpush1.msra.mxu0 0.0
  %616 = vmatprep.subr.mxu0 0.0
  %617 = vmatpush1.msra.mxu0 0.0
  %618 = vmatprep.subr.mxu0 0.0
  %619 = vmatpush1.msra.mxu0 0.0
  %620 = vmatprep.subr.mxu0 0.0
  %621 = vmatpush1.msra.mxu0 0.0
  %622 = vmatprep.subr.mxu0 0.0
  %623 = vmatpush1.msra.mxu0 0.0
  %624 = vmatprep.subr.mxu0 %v525
  %625 = vmatpush1.msra.mxu0 %v524
  %626 = vmatprep.subr.mxu0 %v517
  %627 = vmatpush1.msra.mxu0 %v516
  %628 = vmatprep.subr.mxu0 %v509
  %629 = vmatpush1.msra.mxu0 %v508
  %630 = vmatprep.subr.mxu0 %v501
  %631 = vmatpush1.msra.mxu0 %v500
  %632 = vmatprep.subr.mxu0 %v493
  %633 = vmatpush1.msra.mxu0 %v492
  %634 = vmatprep.subr.mxu0 %v485
  %635 = vmatpush1.msra.mxu0 %v484
  %636 = vmatprep.subr.mxu0 %v477
  %637 = vmatpush1.msra.mxu0 %v476
  %638 = vmatprep.subr.mxu0 %v469
  %639 = vmatpush1.msra.mxu0 %v468
  %640 = vmatprep.subr.mxu0 %v461
  %641 = vmatpush1.msra.mxu0 %v460
  %642 = vmatprep.subr.mxu0 %v453
  %643 = vmatpush1.msra.mxu0 %v452
  %644 = vmatprep.subr.mxu0 0.0
  %645 = vmatpush2.msra.mxu0 0.0
  %646 = vmatprep.subr.mxu0 0.0
  %647 = vmatpush2.msra.mxu0 0.0
  %648 = vmatprep.subr.mxu0 0.0
  %649 = vmatpush2.msra.mxu0 0.0
  %650 = vmatprep.subr.mxu0 0.0
  %651 = vmatpush2.msra.mxu0 0.0
  %652 = vmatprep.subr.mxu0 0.0
  %653 = vmatpush2.msra.mxu0 0.0
  %654 = vmatprep.subr.mxu0 0.0
  %655 = vmatpush2.msra.mxu0 0.0
  %656 = vmatprep.subr.mxu0 0.0
  %657 = vmatpush2.msra.mxu0 0.0
  %658 = vmatprep.subr.mxu0 0.0
  %659 = vmatpush2.msra.mxu0 0.0
  %660 = vmatprep.subr.mxu0 0.0
  %661 = vmatpush2.msra.mxu0 0.0
  %662 = vmatprep.subr.mxu0 0.0
  %663 = vmatpush2.msra.mxu0 0.0
  %664 = vmatprep.subr.mxu0 0.0
  %665 = vmatpush2.msra.mxu0 0.0
  %666 = vmatprep.subr.mxu0 0.0
  %667 = vmatpush2.msra.mxu0 0.0
  %668 = vmatprep.subr.mxu0 0.0
  %669 = vmatpush2.msra.mxu0 0.0
  %670 = vmatprep.subr.mxu0 0.0
  %671 = vmatpush2.msra.mxu0 0.0
  %672 = vmatprep.subr.mxu0 0.0
  %673 = vmatpush2.msra.mxu0 0.0
  %674 = vmatprep.subr.mxu0 0.0
  %675 = vmatpush2.msra.mxu0 0.0
  %676 = vmatprep.mubr.f32.mxu0 0.0
  %677 = vmatmul.mubr.f32.gmra.mxu0 %v539
  %v678 = vpop.f32.mrf.mxu0
  %v679 = vadd.f32 %v535, %v678
  %v680 = vpop.f32.mrf.mxu0
  %v681 = vadd.f32 %v535, %v680
  %682 = vdwg.mxu0
  %683 = vmatprep.subr.mxu0 0.0
  %684 = vmatpush1.msra.mxu0 0.0
  %685 = vmatprep.subr.mxu0 0.0
  %686 = vmatpush1.msra.mxu0 0.0
  %687 = vmatprep.subr.mxu0 0.0
  %688 = vmatpush1.msra.mxu0 0.0
  %689 = vmatprep.subr.mxu0 0.0
  %690 = vmatpush1.msra.mxu0 0.0
  %691 = vmatprep.subr.mxu0 0.0
  %692 = vmatpush1.msra.mxu0 0.0
  %693 = vmatprep.subr.mxu0 0.0
  %694 = vmatpush1.msra.mxu0 0.0
  %695 = vmatprep.subr.mxu0 %v527
  %696 = vmatpush1.msra.mxu0 %v526
  %697 = vmatprep.subr.mxu0 %v519
  %698 = vmatpush1.msra.mxu0 %v518
  %699 = vmatprep.subr.mxu0 %v511
  %700 = vmatpush1.msra.mxu0 %v510
  %701 = vmatprep.subr.mxu0 %v503
  %702 = vmatpush1.msra.mxu0 %v502
  %703 = vmatprep.subr.mxu0 %v495
  %704 = vmatpush1.msra.mxu0 %v494
  %705 = vmatprep.subr.mxu0 %v487
  %706 = vmatpush1.msra.mxu0 %v486
  %707 = vmatprep.subr.mxu0 %v479
  %708 = vmatpush1.msra.mxu0 %v478
  %709 = vmatprep.subr.mxu0 %v471
  %710 = vmatpush1.msra.mxu0 %v470
  %711 = vmatprep.subr.mxu0 %v463
  %712 = vmatpush1.msra.mxu0 %v462
  %713 = vmatprep.subr.mxu0 %v455
  %714 = vmatpush1.msra.mxu0 %v454
  %715 = vmatprep.subr.mxu0 0.0
  %716 = vmatpush2.msra.mxu0 0.0
  %717 = vmatprep.subr.mxu0 0.0
  %718 = vmatpush2.msra.mxu0 0.0
  %719 = vmatprep.subr.mxu0 0.0
  %720 = vmatpush2.msra.mxu0 0.0
  %721 = vmatprep.subr.mxu0 0.0
  %722 = vmatpush2.msra.mxu0 0.0
  %723 = vmatprep.subr.mxu0 0.0
  %724 = vmatpush2.msra.mxu0 0.0
  %725 = vmatprep.subr.mxu0 0.0
  %726 = vmatpush2.msra.mxu0 0.0
  %727 = vmatprep.subr.mxu0 0.0
  %728 = vmatpush2.msra.mxu0 0.0
  %729 = vmatprep.subr.mxu0 0.0
  %730 = vmatpush2.msra.mxu0 0.0
  %731 = vmatprep.subr.mxu0 0.0
  %732 = vmatpush2.msra.mxu0 0.0
  %733 = vmatprep.subr.mxu0 0.0
  %734 = vmatpush2.msra.mxu0 0.0
  %735 = vmatprep.subr.mxu0 0.0
  %736 = vmatpush2.msra.mxu0 0.0
  %737 = vmatprep.subr.mxu0 0.0
  %738 = vmatpush2.msra.mxu0 0.0
  %739 = vmatprep.subr.mxu0 0.0
  %740 = vmatpush2.msra.mxu0 0.0
  %741 = vmatprep.subr.mxu0 0.0
  %742 = vmatpush2.msra.mxu0 0.0
  %743 = vmatprep.subr.mxu0 0.0
  %744 = vmatpush2.msra.mxu0 0.0
  %745 = vmatprep.subr.mxu0 0.0
  %746 = vmatpush2.msra.mxu0 0.0
  %747 = vmatprep.mubr.f32.mxu0 0.0
  %748 = vmatmul.mubr.f32.gmra.mxu0 %v539
  %v749 = vpop.f32.mrf.mxu0
  %v750 = vadd.f32 %v535, %v749
  %v751 = vpop.f32.mrf.mxu0
  %v752 = vadd.f32 %v535, %v751
  %753 = vdwg.mxu0
  %754 = vmatprep.subr.mxu0 0.0
  %755 = vmatpush1.msra.mxu0 0.0
  %756 = vmatprep.subr.mxu0 0.0
  %757 = vmatpush1.msra.mxu0 0.0
  %758 = vmatprep.subr.mxu0 0.0
  %759 = vmatpush1.msra.mxu0 0.0
  %760 = vmatprep.subr.mxu0 0.0
  %761 = vmatpush1.msra.mxu0 0.0
  %762 = vmatprep.subr.mxu0 0.0
  %763 = vmatpush1.msra.mxu0 0.0
  %764 = vmatprep.subr.mxu0 0.0
  %765 = vmatpush1.msra.mxu0 0.0
  %766 = vmatprep.subr.mxu0 %v529
  %767 = vmatpush1.msra.mxu0 %v528
  %768 = vmatprep.subr.mxu0 %v521
  %769 = vmatpush1.msra.mxu0 %v520
  %770 = vmatprep.subr.mxu0 %v513
  %771 = vmatpush1.msra.mxu0 %v512
  %772 = vmatprep.subr.mxu0 %v505
  %773 = vmatpush1.msra.mxu0 %v504
  %774 = vmatprep.subr.mxu0 %v497
  %775 = vmatpush1.msra.mxu0 %v496
  %776 = vmatprep.subr.mxu0 %v489
  %777 = vmatpush1.msra.mxu0 %v488
  %778 = vmatprep.subr.mxu0 %v481
  %779 = vmatpush1.msra.mxu0 %v480
  %780 = vmatprep.subr.mxu0 %v473
  %781 = vmatpush1.msra.mxu0 %v472
  %782 = vmatprep.subr.mxu0 %v465
  %783 = vmatpush1.msra.mxu0 %v464
  %784 = vmatprep.subr.mxu0 %v457
  %785 = vmatpush1.msra.mxu0 %v456
  %786 = vmatprep.subr.mxu0 0.0
  %787 = vmatpush2.msra.mxu0 0.0
  %788 = vmatprep.subr.mxu0 0.0
  %789 = vmatpush2.msra.mxu0 0.0
  %790 = vmatprep.subr.mxu0 0.0
  %791 = vmatpush2.msra.mxu0 0.0
  %792 = vmatprep.subr.mxu0 0.0
  %793 = vmatpush2.msra.mxu0 0.0
  %794 = vmatprep.subr.mxu0 0.0
  %795 = vmatpush2.msra.mxu0 0.0
  %796 = vmatprep.subr.mxu0 0.0
  %797 = vmatpush2.msra.mxu0 0.0
  %798 = vmatprep.subr.mxu0 0.0
  %799 = vmatpush2.msra.mxu0 0.0
  %800 = vmatprep.subr.mxu0 0.0
  %801 = vmatpush2.msra.mxu0 0.0
  %802 = vmatprep.subr.mxu0 0.0
  %803 = vmatpush2.msra.mxu0 0.0
  %804 = vmatprep.subr.mxu0 0.0
  %805 = vmatpush2.msra.mxu0 0.0
  %806 = vmatprep.subr.mxu0 0.0
  %807 = vmatpush2.msra.mxu0 0.0
  %808 = vmatprep.subr.mxu0 0.0
  %809 = vmatpush2.msra.mxu0 0.0
  %810 = vmatprep.subr.mxu0 0.0
  %811 = vmatpush2.msra.mxu0 0.0
  %812 = vmatprep.subr.mxu0 0.0
  %813 = vmatpush2.msra.mxu0 0.0
  %814 = vmatprep.subr.mxu0 0.0
  %815 = vmatpush2.msra.mxu0 0.0
  %816 = vmatprep.subr.mxu0 0.0
  %817 = vmatpush2.msra.mxu0 0.0
  %818 = vmatprep.mubr.f32.mxu0 0.0
  %819 = vmatmul.mubr.f32.gmra.mxu0 %v539
  %v820 = vpop.f32.mrf.mxu0
  %v821 = vadd.f32 %v535, %v820
  %v822 = vpop.f32.mrf.mxu0
  %v823 = vadd.f32 %v535, %v822
  %824 = vdwg.mxu0
  %vm825 = vcmp.gt.f32.partialorder %v608, 0.0
  %vm826 = vcmp.gt.f32.partialorder %v610, 0.0
  %vm827 = vcmp.gt.f32.partialorder %v679, 0.0
  %vm828 = vcmp.gt.f32.partialorder %v681, 0.0
  %vm829 = vcmp.gt.f32.partialorder %v750, 0.0
  %vm830 = vcmp.gt.f32.partialorder %v752, 0.0
  %vm831 = vcmp.gt.f32.partialorder %v821, 0.0
  %vm832 = vcmp.gt.f32.partialorder %v823, 0.0
  %v833 = vmul.f32 %v608, 1.442695
  %v834 = vpow.pop %v833
  %v835 = vmul.f32 %v610, 1.442695
  %v836 = vpow.pop %v835
  %v837 = vmul.f32 %v679, 1.442695
  %v838 = vpow.pop %v837
  %v839 = vmul.f32 %v681, 1.442695
  %v840 = vpow.pop %v839
  %v841 = vmul.f32 %v750, 1.442695
  %v842 = vpow.pop %v841
  %v843 = vmul.f32 %v752, 1.442695
  %v844 = vpow.pop %v843
  %v845 = vmul.f32 %v821, 1.442695
  %v846 = vpow.pop %v845
  %v847 = vmul.f32 %v823, 1.442695
  %v848 = vpow.pop %v847
  %v849 = vsub.f32 %v834, 1.0
  %v850 = vsub.f32 %v836, 1.0
  %v851 = vsub.f32 %v838, 1.0
  %v852 = vsub.f32 %v840, 1.0
  %v853 = vsub.f32 %v842, 1.0
  %v854 = vsub.f32 %v844, 1.0
  %v855 = vsub.f32 %v846, 1.0
  %v856 = vsub.f32 %v848, 1.0
  %v857 = vsel %vm825, %v608, %v849
  %v858 = vsel %vm826, %v610, %v850
  %v859 = vsel %vm827, %v679, %v851
  %v860 = vsel %vm828, %v681, %v852
  %v861 = vsel %vm829, %v750, %v853
  %v862 = vsel %vm830, %v752, %v854
  %v863 = vsel %vm831, %v821, %v855
  %v864 = vsel %vm832, %v823, %v856
  %865 = vst [vmem:[#allocation2] sm:$0xff] %v857
  %866 = vst [vmem:[#allocation2 + $0x8] sm:$0xff] %v858
  %867 = vst [vmem:[#allocation2 + $0x10] sm:$0xff] %v859
  %868 = vst [vmem:[#allocation2 + $0x18] sm:$0xff] %v860
  %869 = vst [vmem:[#allocation2 + $0x20] sm:$0xff] %v861
  %870 = vst [vmem:[#allocation2 + $0x28] sm:$0xff] %v862
  %871 = vst [vmem:[#allocation2 + $0x30] sm:$0xff] %v863
  %872 = vst [vmem:[#allocation2 + $0x38] sm:$0xff] %v864
  %881 = vrot.lane.b32.xlu0 %v857, 127
  %v882 = vpop.permute.xlu0 %881
  %883 = vrot.lane.b32.xlu0 %v858, 127
  %v884 = vpop.permute.xlu0 %883
  %885 = vrot.lane.b32.xlu0 %v859, 127
  %v886 = vpop.permute.xlu0 %885
  %887 = vrot.lane.b32.xlu0 %v860, 127
  %v888 = vpop.permute.xlu0 %887
  %889 = vrot.lane.b32.xlu0 %v861, 127
  %v890 = vpop.permute.xlu0 %889
  %891 = vrot.lane.b32.xlu0 %v862, 127
  %v892 = vpop.permute.xlu0 %891
  %893 = vrot.lane.b32.xlu0 %v863, 127
  %v894 = vpop.permute.xlu0 %893
  %895 = vrot.lane.b32.xlu0 %v864, 127
  %v896 = vpop.permute.xlu0 %895
  %v897 = vsel %vm88, %v882, %v884
  %v898 = vsel %vm88, %v884, %v886
  %v899 = vsel %vm88, %v886, %v888
  %v900 = vsel %vm88, %v888, %v890
  %v901 = vsel %vm88, %v890, %v892
  %v902 = vsel %vm88, %v892, %v894
  %v903 = vsel %vm88, %v894, %v896
  %v913 = vsel %vm88, %v896, %v882
  %914 = vst [vmem:[#allocation2 + $0x40] sm:$0xff] %v897
  %915 = vst [vmem:[#allocation2 + $0x48] sm:$0xff] %v898
  %916 = vst [vmem:[#allocation2 + $0x50] sm:$0xff] %v899
  %917 = vst [vmem:[#allocation2 + $0x58] sm:$0xff] %v900
  %918 = vst [vmem:[#allocation2 + $0x60] sm:$0xff] %v901
  %919 = vst [vmem:[#allocation2 + $0x68] sm:$0xff] %v902
  %920 = vst [vmem:[#allocation2 + $0x70] sm:$0xff] %v903
  %921 = vst [vmem:[#allocation2 + $0x78] sm:$0xff] %v913
  %922 = vrot.lane.b32.xlu0 %v857, 126
  %v923 = vpop.permute.xlu0 %922
  %924 = vrot.lane.b32.xlu0 %v858, 126
  %v925 = vpop.permute.xlu0 %924
  %926 = vrot.lane.b32.xlu0 %v859, 126
  %v927 = vpop.permute.xlu0 %926
  %928 = vrot.lane.b32.xlu0 %v860, 126
  %v929 = vpop.permute.xlu0 %928
  %930 = vrot.lane.b32.xlu0 %v861, 126
  %v931 = vpop.permute.xlu0 %930
  %932 = vrot.lane.b32.xlu0 %v862, 126
  %v933 = vpop.permute.xlu0 %932
  %934 = vrot.lane.b32.xlu0 %v863, 126
  %v935 = vpop.permute.xlu0 %934
  %936 = vrot.lane.b32.xlu0 %v864, 126
  %v937 = vpop.permute.xlu0 %936
  %v938 = vsel %vm130, %v923, %v925
  %v939 = vsel %vm130, %v925, %v927
  %v940 = vsel %vm130, %v927, %v929
  %v941 = vsel %vm130, %v929, %v931
  %v942 = vsel %vm130, %v931, %v933
  %v943 = vsel %vm130, %v933, %v935
  %v944 = vsel %vm130, %v935, %v937
  %v954 = vsel %vm130, %v937, %v923
  %955 = vst [vmem:[#allocation2 + $0x80] sm:$0xff] %v938
  %956 = vst [vmem:[#allocation2 + $0x88] sm:$0xff] %v939
  %957 = vst [vmem:[#allocation2 + $0x90] sm:$0xff] %v940
  %958 = vst [vmem:[#allocation2 + $0x98] sm:$0xff] %v941
  %959 = vst [vmem:[#allocation2 + $0xa0] sm:$0xff] %v942
  %960 = vst [vmem:[#allocation2 + $0xa8] sm:$0xff] %v943
  %961 = vst [vmem:[#allocation2 + $0xb0] sm:$0xff] %v944
  %962 = vst [vmem:[#allocation2 + $0xb8] sm:$0xff] %v954
  %963 = vrot.lane.b32.xlu0 %v857, 125
  %v964 = vpop.permute.xlu0 %963
  %965 = vrot.lane.b32.xlu0 %v858, 125
  %v966 = vpop.permute.xlu0 %965
  %967 = vrot.lane.b32.xlu0 %v859, 125
  %v968 = vpop.permute.xlu0 %967
  %969 = vrot.lane.b32.xlu0 %v860, 125
  %v970 = vpop.permute.xlu0 %969
  %971 = vrot.lane.b32.xlu0 %v861, 125
  %v972 = vpop.permute.xlu0 %971
  %973 = vrot.lane.b32.xlu0 %v862, 125
  %v974 = vpop.permute.xlu0 %973
  %975 = vrot.lane.b32.xlu0 %v863, 125
  %v976 = vpop.permute.xlu0 %975
  %977 = vrot.lane.b32.xlu0 %v864, 125
  %v978 = vpop.permute.xlu0 %977
  %v979 = vsel %vm172, %v964, %v966
  %v980 = vsel %vm172, %v966, %v968
  %v981 = vsel %vm172, %v968, %v970
  %v982 = vsel %vm172, %v970, %v972
  %v983 = vsel %vm172, %v972, %v974
  %v984 = vsel %vm172, %v974, %v976
  %v985 = vsel %vm172, %v976, %v978
  %v995 = vsel %vm172, %v978, %v964
  %996 = vst [vmem:[#allocation2 + $0xc0] sm:$0xff] %v979
  %997 = vst [vmem:[#allocation2 + $0xc8] sm:$0xff] %v980
  %998 = vst [vmem:[#allocation2 + $0xd0] sm:$0xff] %v981
  %999 = vst [vmem:[#allocation2 + $0xd8] sm:$0xff] %v982
  %1000 = vst [vmem:[#allocation2 + $0xe0] sm:$0xff] %v983
  %1001 = vst [vmem:[#allocation2 + $0xe8] sm:$0xff] %v984
  %1002 = vst [vmem:[#allocation2 + $0xf0] sm:$0xff] %v985
  %1003 = vst [vmem:[#allocation2 + $0xf8] sm:$0xff] %v995
  %1004 = vrot.lane.b32.xlu0 %v857, 124
  %v1005 = vpop.permute.xlu0 %1004
  %1006 = vrot.lane.b32.xlu0 %v858, 124
  %v1007 = vpop.permute.xlu0 %1006
  %1008 = vrot.lane.b32.xlu0 %v859, 124
  %v1009 = vpop.permute.xlu0 %1008
  %1010 = vrot.lane.b32.xlu0 %v860, 124
  %v1011 = vpop.permute.xlu0 %1010
  %1012 = vrot.lane.b32.xlu0 %v861, 124
  %v1013 = vpop.permute.xlu0 %1012
  %1014 = vrot.lane.b32.xlu0 %v862, 124
  %v1015 = vpop.permute.xlu0 %1014
  %1016 = vrot.lane.b32.xlu0 %v863, 124
  %v1017 = vpop.permute.xlu0 %1016
  %1018 = vrot.lane.b32.xlu0 %v864, 124
  %v1019 = vpop.permute.xlu0 %1018
  %v1020 = vsel %vm214, %v1005, %v1007
  %v1021 = vsel %vm214, %v1007, %v1009
  %v1022 = vsel %vm214, %v1009, %v1011
  %v1023 = vsel %vm214, %v1011, %v1013
  %v1024 = vsel %vm214, %v1013, %v1015
  %v1025 = vsel %vm214, %v1015, %v1017
  %v1026 = vsel %vm214, %v1017, %v1019
  %v1036 = vsel %vm214, %v1019, %v1005
  %1037 = vst [vmem:[#allocation2 + $0x100] sm:$0xff] %v1020
  %1038 = vst [vmem:[#allocation2 + $0x108] sm:$0xff] %v1021
  %1039 = vst [vmem:[#allocation2 + $0x110] sm:$0xff] %v1022
  %1040 = vst [vmem:[#allocation2 + $0x118] sm:$0xff] %v1023
  %1041 = vst [vmem:[#allocation2 + $0x120] sm:$0xff] %v1024
  %1042 = vst [vmem:[#allocation2 + $0x128] sm:$0xff] %v1025
  %1043 = vst [vmem:[#allocation2 + $0x130] sm:$0xff] %v1026
  %1044 = vst [vmem:[#allocation2 + $0x138] sm:$0xff] %v1036
  %1045 = vrot.lane.b32.xlu0 %v857, 123
  %v1046 = vpop.permute.xlu0 %1045
  %1047 = vrot.lane.b32.xlu0 %v858, 123
  %v1048 = vpop.permute.xlu0 %1047
  %1049 = vrot.lane.b32.xlu0 %v859, 123
  %v1050 = vpop.permute.xlu0 %1049
  %1051 = vrot.lane.b32.xlu0 %v860, 123
  %v1052 = vpop.permute.xlu0 %1051
  %1053 = vrot.lane.b32.xlu0 %v861, 123
  %v1054 = vpop.permute.xlu0 %1053
  %1055 = vrot.lane.b32.xlu0 %v862, 123
  %v1056 = vpop.permute.xlu0 %1055
  %1057 = vrot.lane.b32.xlu0 %v863, 123
  %v1058 = vpop.permute.xlu0 %1057
  %1059 = vrot.lane.b32.xlu0 %v864, 123
  %v1060 = vpop.permute.xlu0 %1059
  %v1061 = vsel %vm256, %v1046, %v1048
  %v1062 = vsel %vm256, %v1048, %v1050
  %v1063 = vsel %vm256, %v1050, %v1052
  %v1064 = vsel %vm256, %v1052, %v1054
  %v1065 = vsel %vm256, %v1054, %v1056
  %v1066 = vsel %vm256, %v1056, %v1058
  %v1067 = vsel %vm256, %v1058, %v1060
  %v1077 = vsel %vm256, %v1060, %v1046
  %1078 = vst [vmem:[#allocation2 + $0x140] sm:$0xff] %v1061
  %1079 = vst [vmem:[#allocation2 + $0x148] sm:$0xff] %v1062
  %1080 = vst [vmem:[#allocation2 + $0x150] sm:$0xff] %v1063
  %1081 = vst [vmem:[#allocation2 + $0x158] sm:$0xff] %v1064
  %1082 = vst [vmem:[#allocation2 + $0x160] sm:$0xff] %v1065
  %1083 = vst [vmem:[#allocation2 + $0x168] sm:$0xff] %v1066
  %1084 = vst [vmem:[#allocation2 + $0x170] sm:$0xff] %v1067
  %1085 = vst [vmem:[#allocation2 + $0x178] sm:$0xff] %v1077
  %1086 = vrot.lane.b32.xlu0 %v857, 122
  %v1087 = vpop.permute.xlu0 %1086
  %1088 = vrot.lane.b32.xlu0 %v858, 122
  %v1089 = vpop.permute.xlu0 %1088
  %1090 = vrot.lane.b32.xlu0 %v859, 122
  %v1091 = vpop.permute.xlu0 %1090
  %1092 = vrot.lane.b32.xlu0 %v860, 122
  %v1093 = vpop.permute.xlu0 %1092
  %1094 = vrot.lane.b32.xlu0 %v861, 122
  %v1095 = vpop.permute.xlu0 %1094
  %1096 = vrot.lane.b32.xlu0 %v862, 122
  %v1097 = vpop.permute.xlu0 %1096
  %1098 = vrot.lane.b32.xlu0 %v863, 122
  %v1099 = vpop.permute.xlu0 %1098
  %1100 = vrot.lane.b32.xlu0 %v864, 122
  %v1101 = vpop.permute.xlu0 %1100
  %v1102 = vsel %vm298, %v1087, %v1089
  %v1103 = vsel %vm298, %v1089, %v1091
  %v1104 = vsel %vm298, %v1091, %v1093
  %v1105 = vsel %vm298, %v1093, %v1095
  %v1106 = vsel %vm298, %v1095, %v1097
  %v1107 = vsel %vm298, %v1097, %v1099
  %v1108 = vsel %vm298, %v1099, %v1101
  %v1118 = vsel %vm298, %v1101, %v1087
  %1119 = vst [vmem:[#allocation2 + $0x180] sm:$0xff] %v1102
  %1120 = vst [vmem:[#allocation2 + $0x188] sm:$0xff] %v1103
  %1121 = vst [vmem:[#allocation2 + $0x190] sm:$0xff] %v1104
  %1122 = vst [vmem:[#allocation2 + $0x198] sm:$0xff] %v1105
  %1123 = vst [vmem:[#allocation2 + $0x1a0] sm:$0xff] %v1106
  %1124 = vst [vmem:[#allocation2 + $0x1a8] sm:$0xff] %v1107
  %1125 = vst [vmem:[#allocation2 + $0x1b0] sm:$0xff] %v1108
  %1126 = vst [vmem:[#allocation2 + $0x1b8] sm:$0xff] %v1118
  %1127 = vrot.lane.b32.xlu0 %v857, 121
  %v1128 = vpop.permute.xlu0 %1127
  %1129 = vrot.lane.b32.xlu0 %v858, 121
  %v1130 = vpop.permute.xlu0 %1129
  %1131 = vrot.lane.b32.xlu0 %v859, 121
  %v1132 = vpop.permute.xlu0 %1131
  %1133 = vrot.lane.b32.xlu0 %v860, 121
  %v1134 = vpop.permute.xlu0 %1133
  %1135 = vrot.lane.b32.xlu0 %v861, 121
  %v1136 = vpop.permute.xlu0 %1135
  %1137 = vrot.lane.b32.xlu0 %v862, 121
  %v1138 = vpop.permute.xlu0 %1137
  %1139 = vrot.lane.b32.xlu0 %v863, 121
  %v1140 = vpop.permute.xlu0 %1139
  %1141 = vrot.lane.b32.xlu0 %v864, 121
  %v1142 = vpop.permute.xlu0 %1141
  %v1143 = vsel %vm340, %v1128, %v1130
  %v1144 = vsel %vm340, %v1130, %v1132
  %v1145 = vsel %vm340, %v1132, %v1134
  %v1146 = vsel %vm340, %v1134, %v1136
  %v1147 = vsel %vm340, %v1136, %v1138
  %v1148 = vsel %vm340, %v1138, %v1140
  %v1149 = vsel %vm340, %v1140, %v1142
  %v1159 = vsel %vm340, %v1142, %v1128
  %1160 = vst [vmem:[#allocation2 + $0x1c0] sm:$0xff] %v1143
  %1161 = vst [vmem:[#allocation2 + $0x1c8] sm:$0xff] %v1144
  %1162 = vst [vmem:[#allocation2 + $0x1d0] sm:$0xff] %v1145
  %1163 = vst [vmem:[#allocation2 + $0x1d8] sm:$0xff] %v1146
  %1164 = vst [vmem:[#allocation2 + $0x1e0] sm:$0xff] %v1147
  %1165 = vst [vmem:[#allocation2 + $0x1e8] sm:$0xff] %v1148
  %1166 = vst [vmem:[#allocation2 + $0x1f0] sm:$0xff] %v1149
  %1167 = vst [vmem:[#allocation2 + $0x1f8] sm:$0xff] %v1159
  %1168 = vrot.lane.b32.xlu0 %v857, 120
  %v1169 = vpop.permute.xlu0 %1168
  %1170 = vrot.lane.b32.xlu0 %v858, 120
  %v1171 = vpop.permute.xlu0 %1170
  %1172 = vrot.lane.b32.xlu0 %v859, 120
  %v1173 = vpop.permute.xlu0 %1172
  %1174 = vrot.lane.b32.xlu0 %v860, 120
  %v1175 = vpop.permute.xlu0 %1174
  %1176 = vrot.lane.b32.xlu0 %v861, 120
  %v1177 = vpop.permute.xlu0 %1176
  %1178 = vrot.lane.b32.xlu0 %v862, 120
  %v1179 = vpop.permute.xlu0 %1178
  %1180 = vrot.lane.b32.xlu0 %v863, 120
  %v1181 = vpop.permute.xlu0 %1180
  %1182 = vrot.lane.b32.xlu0 %v864, 120
  %v1183 = vpop.permute.xlu0 %1182
  %v1184 = vsel %vm382, %v1169, %v1171
  %v1185 = vsel %vm382, %v1171, %v1173
  %v1186 = vsel %vm382, %v1173, %v1175
  %v1187 = vsel %vm382, %v1175, %v1177
  %v1188 = vsel %vm382, %v1177, %v1179
  %v1189 = vsel %vm382, %v1179, %v1181
  %v1190 = vsel %vm382, %v1181, %v1183
  %v1200 = vsel %vm382, %v1183, %v1169
  %1201 = vst [vmem:[#allocation2 + $0x200] sm:$0xff] %v1184
  %1202 = vst [vmem:[#allocation2 + $0x208] sm:$0xff] %v1185
  %1203 = vst [vmem:[#allocation2 + $0x210] sm:$0xff] %v1186
  %1204 = vst [vmem:[#allocation2 + $0x218] sm:$0xff] %v1187
  %1205 = vst [vmem:[#allocation2 + $0x220] sm:$0xff] %v1188
  %1206 = vst [vmem:[#allocation2 + $0x228] sm:$0xff] %v1189
  %1207 = vst [vmem:[#allocation2 + $0x230] sm:$0xff] %v1190
  %1208 = vst [vmem:[#allocation2 + $0x238] sm:$0xff] %v1200
  %1209 = vrot.lane.b32.xlu0 %v857, 119
  %v1210 = vpop.permute.xlu0 %1209
  %1211 = vrot.lane.b32.xlu0 %v858, 119
  %v1212 = vpop.permute.xlu0 %1211
  %1213 = vrot.lane.b32.xlu0 %v859, 119
  %v1214 = vpop.permute.xlu0 %1213
  %1215 = vrot.lane.b32.xlu0 %v860, 119
  %v1216 = vpop.permute.xlu0 %1215
  %1217 = vrot.lane.b32.xlu0 %v861, 119
  %v1218 = vpop.permute.xlu0 %1217
  %1219 = vrot.lane.b32.xlu0 %v862, 119
  %v1220 = vpop.permute.xlu0 %1219
  %1221 = vrot.lane.b32.xlu0 %v863, 119
  %v1222 = vpop.permute.xlu0 %1221
  %1223 = vrot.lane.b32.xlu0 %v864, 119
  %v1224 = vpop.permute.xlu0 %1223
  %v1225 = vsel %vm424, %v1210, %v1212
  %v1226 = vsel %vm424, %v1212, %v1214
  %v1227 = vsel %vm424, %v1214, %v1216
  %v1228 = vsel %vm424, %v1216, %v1218
  %v1229 = vsel %vm424, %v1218, %v1220
  %v1230 = vsel %vm424, %v1220, %v1222
  %v1231 = vsel %vm424, %v1222, %v1224
  %v1241 = vsel %vm424, %v1224, %v1210
  %1242 = vst [vmem:[#allocation2 + $0x240] sm:$0xff] %v1225
  %1243 = vst [vmem:[#allocation2 + $0x248] sm:$0xff] %v1226
  %1244 = vst [vmem:[#allocation2 + $0x250] sm:$0xff] %v1227
  %1245 = vst [vmem:[#allocation2 + $0x258] sm:$0xff] %v1228
  %1246 = vst [vmem:[#allocation2 + $0x260] sm:$0xff] %v1229
  %1247 = vst [vmem:[#allocation2 + $0x268] sm:$0xff] %v1230
  %1248 = vst [vmem:[#allocation2 + $0x270] sm:$0xff] %v1231
  %1249 = vst [vmem:[#allocation2 + $0x278] sm:$0xff] %v1241
  %v1250 = vld [vmem:[#allocation2] sm:$0xff]
  %v1251 = vld [vmem:[#allocation2 + $0x8] sm:$0xff]
  %v1252 = vld [vmem:[#allocation2 + $0x10] sm:$0xff]
  %v1253 = vld [vmem:[#allocation2 + $0x18] sm:$0xff]
  %v1254 = vld [vmem:[#allocation2 + $0x20] sm:$0xff]
  %v1255 = vld [vmem:[#allocation2 + $0x28] sm:$0xff]
  %v1256 = vld [vmem:[#allocation2 + $0x30] sm:$0xff]
  %v1257 = vld [vmem:[#allocation2 + $0x38] sm:$0xff]
  %v1258 = vld [vmem:[#allocation2 + $0x40] sm:$0xff]
  %v1259 = vld [vmem:[#allocation2 + $0x48] sm:$0xff]
  %v1260 = vld [vmem:[#allocation2 + $0x50] sm:$0xff]
  %v1261 = vld [vmem:[#allocation2 + $0x58] sm:$0xff]
  %v1262 = vld [vmem:[#allocation2 + $0x60] sm:$0xff]
  %v1263 = vld [vmem:[#allocation2 + $0x68] sm:$0xff]
  %v1264 = vld [vmem:[#allocation2 + $0x70] sm:$0xff]
  %v1265 = vld [vmem:[#allocation2 + $0x78] sm:$0xff]
  %v1266 = vld [vmem:[#allocation2 + $0x80] sm:$0xff]
  %v1267 = vld [vmem:[#allocation2 + $0x88] sm:$0xff]
  %v1268 = vld [vmem:[#allocation2 + $0x90] sm:$0xff]
  %v1269 = vld [vmem:[#allocation2 + $0x98] sm:$0xff]
  %v1270 = vld [vmem:[#allocation2 + $0xa0] sm:$0xff]
  %v1271 = vld [vmem:[#allocation2 + $0xa8] sm:$0xff]
  %v1272 = vld [vmem:[#allocation2 + $0xb0] sm:$0xff]
  %v1273 = vld [vmem:[#allocation2 + $0xb8] sm:$0xff]
  %v1274 = vld [vmem:[#allocation2 + $0xc0] sm:$0xff]
  %v1275 = vld [vmem:[#allocation2 + $0xc8] sm:$0xff]
  %v1276 = vld [vmem:[#allocation2 + $0xd0] sm:$0xff]
  %v1277 = vld [vmem:[#allocation2 + $0xd8] sm:$0xff]
  %v1278 = vld [vmem:[#allocation2 + $0xe0] sm:$0xff]
  %v1279 = vld [vmem:[#allocation2 + $0xe8] sm:$0xff]
  %v1280 = vld [vmem:[#allocation2 + $0xf0] sm:$0xff]
  %v1281 = vld [vmem:[#allocation2 + $0xf8] sm:$0xff]
  %v1282 = vld [vmem:[#allocation2 + $0x100] sm:$0xff]
  %v1283 = vld [vmem:[#allocation2 + $0x108] sm:$0xff]
  %v1284 = vld [vmem:[#allocation2 + $0x110] sm:$0xff]
  %v1285 = vld [vmem:[#allocation2 + $0x118] sm:$0xff]
  %v1286 = vld [vmem:[#allocation2 + $0x120] sm:$0xff]
  %v1287 = vld [vmem:[#allocation2 + $0x128] sm:$0xff]
  %v1288 = vld [vmem:[#allocation2 + $0x130] sm:$0xff]
  %v1289 = vld [vmem:[#allocation2 + $0x138] sm:$0xff]
  %v1290 = vld [vmem:[#allocation2 + $0x140] sm:$0xff]
  %v1291 = vld [vmem:[#allocation2 + $0x148] sm:$0xff]
  %v1292 = vld [vmem:[#allocation2 + $0x150] sm:$0xff]
  %v1293 = vld [vmem:[#allocation2 + $0x158] sm:$0xff]
  %v1294 = vld [vmem:[#allocation2 + $0x160] sm:$0xff]
  %v1295 = vld [vmem:[#allocation2 + $0x168] sm:$0xff]
  %v1296 = vld [vmem:[#allocation2 + $0x170] sm:$0xff]
  %v1297 = vld [vmem:[#allocation2 + $0x178] sm:$0xff]
  %v1298 = vld [vmem:[#allocation2 + $0x180] sm:$0xff]
  %v1299 = vld [vmem:[#allocation2 + $0x188] sm:$0xff]
  %v1300 = vld [vmem:[#allocation2 + $0x190] sm:$0xff]
  %v1301 = vld [vmem:[#allocation2 + $0x198] sm:$0xff]
  %v1302 = vld [vmem:[#allocation2 + $0x1a0] sm:$0xff]
  %v1303 = vld [vmem:[#allocation2 + $0x1a8] sm:$0xff]
  %v1304 = vld [vmem:[#allocation2 + $0x1b0] sm:$0xff]
  %v1305 = vld [vmem:[#allocation2 + $0x1b8] sm:$0xff]
  %v1306 = vld [vmem:[#allocation2 + $0x1c0] sm:$0xff]
  %v1307 = vld [vmem:[#allocation2 + $0x1c8] sm:$0xff]
  %v1308 = vld [vmem:[#allocation2 + $0x1d0] sm:$0xff]
  %v1309 = vld [vmem:[#allocation2 + $0x1d8] sm:$0xff]
  %v1310 = vld [vmem:[#allocation2 + $0x1e0] sm:$0xff]
  %v1311 = vld [vmem:[#allocation2 + $0x1e8] sm:$0xff]
  %v1312 = vld [vmem:[#allocation2 + $0x1f0] sm:$0xff]
  %v1313 = vld [vmem:[#allocation2 + $0x1f8] sm:$0xff]
  %v1314 = vld [vmem:[#allocation2 + $0x200] sm:$0xff]
  %v1315 = vld [vmem:[#allocation2 + $0x208] sm:$0xff]
  %v1316 = vld [vmem:[#allocation2 + $0x210] sm:$0xff]
  %v1317 = vld [vmem:[#allocation2 + $0x218] sm:$0xff]
  %v1318 = vld [vmem:[#allocation2 + $0x220] sm:$0xff]
  %v1319 = vld [vmem:[#allocation2 + $0x228] sm:$0xff]
  %v1320 = vld [vmem:[#allocation2 + $0x230] sm:$0xff]
  %v1321 = vld [vmem:[#allocation2 + $0x238] sm:$0xff]
  %v1322 = vld [vmem:[#allocation2 + $0x240] sm:$0xff]
  %v1323 = vld [vmem:[#allocation2 + $0x248] sm:$0xff]
  %v1324 = vld [vmem:[#allocation2 + $0x250] sm:$0xff]
  %v1325 = vld [vmem:[#allocation2 + $0x258] sm:$0xff]
  %v1326 = vld [vmem:[#allocation2 + $0x260] sm:$0xff]
  %v1327 = vld [vmem:[#allocation2 + $0x268] sm:$0xff]
  %v1328 = vld [vmem:[#allocation2 + $0x270] sm:$0xff]
  %v1329 = vld [vmem:[#allocation2 + $0x278] sm:$0xff]
  %v1330 = vld [vmem:[%s3] sm:$0xff]
  %v1331 = vld [vmem:[%s3 + $0x8] sm:$0xff]
  %v1332 = vld [vmem:[%s4] sm:$0xff]
  %v1333 = vld [vmem:[%s4 + $0x8] sm:$0xff]
  %1335 = vset.pattern.permute.xlu0 0
  %1336 = vperm.xlu0 %1335, %v1332
  %v1337 = vpop.permute.xlu0 %1336
  %1340 = vset.pattern.permute.xlu0 0
  %1341 = vperm.xlu0 %1340, %v1333
  %v1342 = vpop.permute.xlu0 %1341
  %v1345 = vsel %vm537, %v1330, 0
  %v1348 = vsel %vm537, %v1331, 0
  %1350 = vmatprep.subr.mxu0 0.0
  %1351 = vmatpush1.msra.mxu0 0.0
  %1352 = vmatprep.subr.mxu0 0.0
  %1353 = vmatpush1.msra.mxu0 0.0
  %1354 = vmatprep.subr.mxu0 0.0
  %1355 = vmatpush1.msra.mxu0 0.0
  %1356 = vmatprep.subr.mxu0 0.0
  %1357 = vmatpush1.msra.mxu0 0.0
  %1358 = vmatprep.subr.mxu0 0.0
  %1359 = vmatpush1.msra.mxu0 0.0
  %1360 = vmatprep.subr.mxu0 0.0
  %1361 = vmatpush1.msra.mxu0 0.0
  %1362 = vmatprep.subr.mxu0 %v1323
  %1363 = vmatpush1.msra.mxu0 %v1322
  %1364 = vmatprep.subr.mxu0 %v1315
  %1365 = vmatpush1.msra.mxu0 %v1314
  %1366 = vmatprep.subr.mxu0 %v1307
  %1367 = vmatpush1.msra.mxu0 %v1306
  %1368 = vmatprep.subr.mxu0 %v1299
  %1369 = vmatpush1.msra.mxu0 %v1298
  %1370 = vmatprep.subr.mxu0 %v1291
  %1371 = vmatpush1.msra.mxu0 %v1290
  %1372 = vmatprep.subr.mxu0 %v1283
  %1373 = vmatpush1.msra.mxu0 %v1282
  %1374 = vmatprep.subr.mxu0 %v1275
  %1375 = vmatpush1.msra.mxu0 %v1274
  %1376 = vmatprep.subr.mxu0 %v1267
  %1377 = vmatpush1.msra.mxu0 %v1266
  %1378 = vmatprep.subr.mxu0 %v1259
  %1379 = vmatpush1.msra.mxu0 %v1258
  %1380 = vmatprep.subr.mxu0 %v1251
  %1381 = vmatpush1.msra.mxu0 %v1250
  %1382 = vmatprep.subr.mxu0 0.0
  %1383 = vmatpush2.msra.mxu0 0.0
  %1384 = vmatprep.subr.mxu0 0.0
  %1385 = vmatpush2.msra.mxu0 0.0
  %1386 = vmatprep.subr.mxu0 0.0
  %1387 = vmatpush2.msra.mxu0 0.0
  %1388 = vmatprep.subr.mxu0 0.0
  %1389 = vmatpush2.msra.mxu0 0.0
  %1390 = vmatprep.subr.mxu0 0.0
  %1391 = vmatpush2.msra.mxu0 0.0
  %1392 = vmatprep.subr.mxu0 0.0
  %1393 = vmatpush2.msra.mxu0 0.0
  %1394 = vmatprep.subr.mxu0 0.0
  %1395 = vmatpush2.msra.mxu0 0.0
  %1396 = vmatprep.subr.mxu0 0.0
  %1397 = vmatpush2.msra.mxu0 0.0
  %1398 = vmatprep.subr.mxu0 0.0
  %1399 = vmatpush2.msra.mxu0 0.0
  %1400 = vmatprep.subr.mxu0 0.0
  %1401 = vmatpush2.msra.mxu0 0.0
  %1402 = vmatprep.subr.mxu0 0.0
  %1403 = vmatpush2.msra.mxu0 0.0
  %1404 = vmatprep.subr.mxu0 0.0
  %1405 = vmatpush2.msra.mxu0 0.0
  %1406 = vmatprep.subr.mxu0 0.0
  %1407 = vmatpush2.msra.mxu0 0.0
  %1408 = vmatprep.subr.mxu0 0.0
  %1409 = vmatpush2.msra.mxu0 0.0
  %1410 = vmatprep.subr.mxu0 0.0
  %1411 = vmatpush2.msra.mxu0 0.0
  %1412 = vmatprep.subr.mxu0 0.0
  %1413 = vmatpush2.msra.mxu0 0.0
  %1414 = vmatprep.mubr.f32.mxu0 0.0
  %1415 = vmatmul.mubr.f32.gmra.mxu0 %v1345
  %v1416 = vpop.f32.mrf.mxu0
  %v1417 = vadd.f32 %v1337, %v1416
  %v1418 = vpop.f32.mrf.mxu0
  %v1419 = vadd.f32 %v1337, %v1418
  %1420 = vmatprep.mubr.f32.mxu0 0.0
  %1421 = vmatmul.mubr.f32.gmra.mxu0 %v1348
  %v1422 = vpop.f32.mrf.mxu0
  %v1423 = vadd.f32 %v1342, %v1422
  %v1424 = vpop.f32.mrf.mxu0
  %v1425 = vadd.f32 %v1342, %v1424
  %1426 = vdwg.mxu0
  %1427 = vmatprep.subr.mxu0 0.0
  %1428 = vmatpush1.msra.mxu0 0.0
  %1429 = vmatprep.subr.mxu0 0.0
  %1430 = vmatpush1.msra.mxu0 0.0
  %1431 = vmatprep.subr.mxu0 0.0
  %1432 = vmatpush1.msra.mxu0 0.0
  %1433 = vmatprep.subr.mxu0 0.0
  %1434 = vmatpush1.msra.mxu0 0.0
  %1435 = vmatprep.subr.mxu0 0.0
  %1436 = vmatpush1.msra.mxu0 0.0
  %1437 = vmatprep.subr.mxu0 0.0
  %1438 = vmatpush1.msra.mxu0 0.0
  %1439 = vmatprep.subr.mxu0 %v1325
  %1440 = vmatpush1.msra.mxu0 %v1324
  %1441 = vmatprep.subr.mxu0 %v1317
  %1442 = vmatpush1.msra.mxu0 %v1316
  %1443 = vmatprep.subr.mxu0 %v1309
  %1444 = vmatpush1.msra.mxu0 %v1308
  %1445 = vmatprep.subr.mxu0 %v1301
  %1446 = vmatpush1.msra.mxu0 %v1300
  %1447 = vmatprep.subr.mxu0 %v1293
  %1448 = vmatpush1.msra.mxu0 %v1292
  %1449 = vmatprep.subr.mxu0 %v1285
  %1450 = vmatpush1.msra.mxu0 %v1284
  %1451 = vmatprep.subr.mxu0 %v1277
  %1452 = vmatpush1.msra.mxu0 %v1276
  %1453 = vmatprep.subr.mxu0 %v1269
  %1454 = vmatpush1.msra.mxu0 %v1268
  %1455 = vmatprep.subr.mxu0 %v1261
  %1456 = vmatpush1.msra.mxu0 %v1260
  %1457 = vmatprep.subr.mxu0 %v1253
  %1458 = vmatpush1.msra.mxu0 %v1252
  %1459 = vmatprep.subr.mxu0 0.0
  %1460 = vmatpush2.msra.mxu0 0.0
  %1461 = vmatprep.subr.mxu0 0.0
  %1462 = vmatpush2.msra.mxu0 0.0
  %1463 = vmatprep.subr.mxu0 0.0
  %1464 = vmatpush2.msra.mxu0 0.0
  %1465 = vmatprep.subr.mxu0 0.0
  %1466 = vmatpush2.msra.mxu0 0.0
  %1467 = vmatprep.subr.mxu0 0.0
  %1468 = vmatpush2.msra.mxu0 0.0
  %1469 = vmatprep.subr.mxu0 0.0
  %1470 = vmatpush2.msra.mxu0 0.0
  %1471 = vmatprep.subr.mxu0 0.0
  %1472 = vmatpush2.msra.mxu0 0.0
  %1473 = vmatprep.subr.mxu0 0.0
  %1474 = vmatpush2.msra.mxu0 0.0
  %1475 = vmatprep.subr.mxu0 0.0
  %1476 = vmatpush2.msra.mxu0 0.0
  %1477 = vmatprep.subr.mxu0 0.0
  %1478 = vmatpush2.msra.mxu0 0.0
  %1479 = vmatprep.subr.mxu0 0.0
  %1480 = vmatpush2.msra.mxu0 0.0
  %1481 = vmatprep.subr.mxu0 0.0
  %1482 = vmatpush2.msra.mxu0 0.0
  %1483 = vmatprep.subr.mxu0 0.0
  %1484 = vmatpush2.msra.mxu0 0.0
  %1485 = vmatprep.subr.mxu0 0.0
  %1486 = vmatpush2.msra.mxu0 0.0
  %1487 = vmatprep.subr.mxu0 0.0
  %1488 = vmatpush2.msra.mxu0 0.0
  %1489 = vmatprep.subr.mxu0 0.0
  %1490 = vmatpush2.msra.mxu0 0.0
  %1491 = vmatprep.mubr.f32.mxu0 0.0
  %1492 = vmatmul.mubr.f32.gmra.mxu0 %v1345
  %v1493 = vpop.f32.mrf.mxu0
  %v1494 = vadd.f32 %v1337, %v1493
  %v1495 = vpop.f32.mrf.mxu0
  %v1496 = vadd.f32 %v1337, %v1495
  %1497 = vmatprep.mubr.f32.mxu0 0.0
  %1498 = vmatmul.mubr.f32.gmra.mxu0 %v1348
  %v1499 = vpop.f32.mrf.mxu0
  %v1500 = vadd.f32 %v1342, %v1499
  %v1501 = vpop.f32.mrf.mxu0
  %v1502 = vadd.f32 %v1342, %v1501
  %1503 = vdwg.mxu0
  %1504 = vmatprep.subr.mxu0 0.0
  %1505 = vmatpush1.msra.mxu0 0.0
  %1506 = vmatprep.subr.mxu0 0.0
  %1507 = vmatpush1.msra.mxu0 0.0
  %1508 = vmatprep.subr.mxu0 0.0
  %1509 = vmatpush1.msra.mxu0 0.0
  %1510 = vmatprep.subr.mxu0 0.0
  %1511 = vmatpush1.msra.mxu0 0.0
  %1512 = vmatprep.subr.mxu0 0.0
  %1513 = vmatpush1.msra.mxu0 0.0
  %1514 = vmatprep.subr.mxu0 0.0
  %1515 = vmatpush1.msra.mxu0 0.0
  %1516 = vmatprep.subr.mxu0 %v1327
  %1517 = vmatpush1.msra.mxu0 %v1326
  %1518 = vmatprep.subr.mxu0 %v1319
  %1519 = vmatpush1.msra.mxu0 %v1318
  %1520 = vmatprep.subr.mxu0 %v1311
  %1521 = vmatpush1.msra.mxu0 %v1310
  %1522 = vmatprep.subr.mxu0 %v1303
  %1523 = vmatpush1.msra.mxu0 %v1302
  %1524 = vmatprep.subr.mxu0 %v1295
  %1525 = vmatpush1.msra.mxu0 %v1294
  %1526 = vmatprep.subr.mxu0 %v1287
  %1527 = vmatpush1.msra.mxu0 %v1286
  %1528 = vmatprep.subr.mxu0 %v1279
  %1529 = vmatpush1.msra.mxu0 %v1278
  %1530 = vmatprep.subr.mxu0 %v1271
  %1531 = vmatpush1.msra.mxu0 %v1270
  %1532 = vmatprep.subr.mxu0 %v1263
  %1533 = vmatpush1.msra.mxu0 %v1262
  %1534 = vmatprep.subr.mxu0 %v1255
  %1535 = vmatpush1.msra.mxu0 %v1254
  %1536 = vmatprep.subr.mxu0 0.0
  %1537 = vmatpush2.msra.mxu0 0.0
  %1538 = vmatprep.subr.mxu0 0.0
  %1539 = vmatpush2.msra.mxu0 0.0
  %1540 = vmatprep.subr.mxu0 0.0
  %1541 = vmatpush2.msra.mxu0 0.0
  %1542 = vmatprep.subr.mxu0 0.0
  %1543 = vmatpush2.msra.mxu0 0.0
  %1544 = vmatprep.subr.mxu0 0.0
  %1545 = vmatpush2.msra.mxu0 0.0
  %1546 = vmatprep.subr.mxu0 0.0
  %1547 = vmatpush2.msra.mxu0 0.0
  %1548 = vmatprep.subr.mxu0 0.0
  %1549 = vmatpush2.msra.mxu0 0.0
  %1550 = vmatprep.subr.mxu0 0.0
  %1551 = vmatpush2.msra.mxu0 0.0
  %1552 = vmatprep.subr.mxu0 0.0
  %1553 = vmatpush2.msra.mxu0 0.0
  %1554 = vmatprep.subr.mxu0 0.0
  %1555 = vmatpush2.msra.mxu0 0.0
  %1556 = vmatprep.subr.mxu0 0.0
  %1557 = vmatpush2.msra.mxu0 0.0
  %1558 = vmatprep.subr.mxu0 0.0
  %1559 = vmatpush2.msra.mxu0 0.0
  %1560 = vmatprep.subr.mxu0 0.0
  %1561 = vmatpush2.msra.mxu0 0.0
  %1562 = vmatprep.subr.mxu0 0.0
  %1563 = vmatpush2.msra.mxu0 0.0
  %1564 = vmatprep.subr.mxu0 0.0
  %1565 = vmatpush2.msra.mxu0 0.0
  %1566 = vmatprep.subr.mxu0 0.0
  %1567 = vmatpush2.msra.mxu0 0.0
  %1568 = vmatprep.mubr.f32.mxu0 0.0
  %1569 = vmatmul.mubr.f32.gmra.mxu0 %v1345
  %v1570 = vpop.f32.mrf.mxu0
  %v1571 = vadd.f32 %v1337, %v1570
  %v1572 = vpop.f32.mrf.mxu0
  %v1573 = vadd.f32 %v1337, %v1572
  %1574 = vmatprep.mubr.f32.mxu0 0.0
  %1575 = vmatmul.mubr.f32.gmra.mxu0 %v1348
  %v1576 = vpop.f32.mrf.mxu0
  %v1577 = vadd.f32 %v1342, %v1576
  %v1578 = vpop.f32.mrf.mxu0
  %v1579 = vadd.f32 %v1342, %v1578
  %1580 = vdwg.mxu0
  %1581 = vmatprep.subr.mxu0 0.0
  %1582 = vmatpush1.msra.mxu0 0.0
  %1583 = vmatprep.subr.mxu0 0.0
  %1584 = vmatpush1.msra.mxu0 0.0
  %1585 = vmatprep.subr.mxu0 0.0
  %1586 = vmatpush1.msra.mxu0 0.0
  %1587 = vmatprep.subr.mxu0 0.0
  %1588 = vmatpush1.msra.mxu0 0.0
  %1589 = vmatprep.subr.mxu0 0.0
  %1590 = vmatpush1.msra.mxu0 0.0
  %1591 = vmatprep.subr.mxu0 0.0
  %1592 = vmatpush1.msra.mxu0 0.0
  %1593 = vmatprep.subr.mxu0 %v1329
  %1594 = vmatpush1.msra.mxu0 %v1328
  %1595 = vmatprep.subr.mxu0 %v1321
  %1596 = vmatpush1.msra.mxu0 %v1320
  %1597 = vmatprep.subr.mxu0 %v1313
  %1598 = vmatpush1.msra.mxu0 %v1312
  %1599 = vmatprep.subr.mxu0 %v1305
  %1600 = vmatpush1.msra.mxu0 %v1304
  %1601 = vmatprep.subr.mxu0 %v1297
  %1602 = vmatpush1.msra.mxu0 %v1296
  %1603 = vmatprep.subr.mxu0 %v1289
  %1604 = vmatpush1.msra.mxu0 %v1288
  %1605 = vmatprep.subr.mxu0 %v1281
  %1606 = vmatpush1.msra.mxu0 %v1280
  %1607 = vmatprep.subr.mxu0 %v1273
  %1608 = vmatpush1.msra.mxu0 %v1272
  %1609 = vmatprep.subr.mxu0 %v1265
  %1610 = vmatpush1.msra.mxu0 %v1264
  %1611 = vmatprep.subr.mxu0 %v1257
  %1612 = vmatpush1.msra.mxu0 %v1256
  %1613 = vmatprep.subr.mxu0 0.0
  %1614 = vmatpush2.msra.mxu0 0.0
  %1615 = vmatprep.subr.mxu0 0.0
  %1616 = vmatpush2.msra.mxu0 0.0
  %1617 = vmatprep.subr.mxu0 0.0
  %1618 = vmatpush2.msra.mxu0 0.0
  %1619 = vmatprep.subr.mxu0 0.0
  %1620 = vmatpush2.msra.mxu0 0.0
  %1621 = vmatprep.subr.mxu0 0.0
  %1622 = vmatpush2.msra.mxu0 0.0
  %1623 = vmatprep.subr.mxu0 0.0
  %1624 = vmatpush2.msra.mxu0 0.0
  %1625 = vmatprep.subr.mxu0 0.0
  %1626 = vmatpush2.msra.mxu0 0.0
  %1627 = vmatprep.subr.mxu0 0.0
  %1628 = vmatpush2.msra.mxu0 0.0
  %1629 = vmatprep.subr.mxu0 0.0
  %1630 = vmatpush2.msra.mxu0 0.0
  %1631 = vmatprep.subr.mxu0 0.0
  %1632 = vmatpush2.msra.mxu0 0.0
  %1633 = vmatprep.subr.mxu0 0.0
  %1634 = vmatpush2.msra.mxu0 0.0
  %1635 = vmatprep.subr.mxu0 0.0
  %1636 = vmatpush2.msra.mxu0 0.0
  %1637 = vmatprep.subr.mxu0 0.0
  %1638 = vmatpush2.msra.mxu0 0.0
  %1639 = vmatprep.subr.mxu0 0.0
  %1640 = vmatpush2.msra.mxu0 0.0
  %1641 = vmatprep.subr.mxu0 0.0
  %1642 = vmatpush2.msra.mxu0 0.0
  %1643 = vmatprep.subr.mxu0 0.0
  %1644 = vmatpush2.msra.mxu0 0.0
  %1645 = vmatprep.mubr.f32.mxu0 0.0
  %1646 = vmatmul.mubr.f32.gmra.mxu0 %v1345
  %v1647 = vpop.f32.mrf.mxu0
  %v1648 = vadd.f32 %v1337, %v1647
  %v1649 = vpop.f32.mrf.mxu0
  %v1650 = vadd.f32 %v1337, %v1649
  %1651 = vmatprep.mubr.f32.mxu0 0.0
  %1652 = vmatmul.mubr.f32.gmra.mxu0 %v1348
  %v1653 = vpop.f32.mrf.mxu0
  %v1654 = vadd.f32 %v1342, %v1653
  %v1655 = vpop.f32.mrf.mxu0
  %v1656 = vadd.f32 %v1342, %v1655
  %1657 = vdwg.mxu0
  %vm1658 = vcmp.gt.f32.partialorder %v1417, 0.0
  %vm1659 = vcmp.gt.f32.partialorder %v1419, 0.0
  %vm1660 = vcmp.gt.f32.partialorder %v1494, 0.0
  %vm1661 = vcmp.gt.f32.partialorder %v1496, 0.0
  %vm1662 = vcmp.gt.f32.partialorder %v1571, 0.0
  %vm1663 = vcmp.gt.f32.partialorder %v1573, 0.0
  %vm1664 = vcmp.gt.f32.partialorder %v1648, 0.0
  %vm1665 = vcmp.gt.f32.partialorder %v1650, 0.0
  %vm1666 = vcmp.gt.f32.partialorder %v1423, 0.0
  %vm1667 = vcmp.gt.f32.partialorder %v1425, 0.0
  %vm1668 = vcmp.gt.f32.partialorder %v1500, 0.0
  %vm1669 = vcmp.gt.f32.partialorder %v1502, 0.0
  %vm1670 = vcmp.gt.f32.partialorder %v1577, 0.0
  %vm1671 = vcmp.gt.f32.partialorder %v1579, 0.0
  %vm1672 = vcmp.gt.f32.partialorder %v1654, 0.0
  %vm1673 = vcmp.gt.f32.partialorder %v1656, 0.0
  %v1674 = vmul.f32 %v1417, 1.442695
  %v1675 = vpow.pop %v1674
  %v1676 = vmul.f32 %v1419, 1.442695
  %v1677 = vpow.pop %v1676
  %v1678 = vmul.f32 %v1494, 1.442695
  %v1679 = vpow.pop %v1678
  %v1680 = vmul.f32 %v1496, 1.442695
  %v1681 = vpow.pop %v1680
  %v1682 = vmul.f32 %v1571, 1.442695
  %v1683 = vpow.pop %v1682
  %v1684 = vmul.f32 %v1573, 1.442695
  %v1685 = vpow.pop %v1684
  %v1686 = vmul.f32 %v1648, 1.442695
  %v1687 = vpow.pop %v1686
  %v1688 = vmul.f32 %v1650, 1.442695
  %v1689 = vpow.pop %v1688
  %v1690 = vmul.f32 %v1423, 1.442695
  %v1691 = vpow.pop %v1690
  %v1692 = vmul.f32 %v1425, 1.442695
  %v1693 = vpow.pop %v1692
  %v1694 = vmul.f32 %v1500, 1.442695
  %v1695 = vpow.pop %v1694
  %v1696 = vmul.f32 %v1502, 1.442695
  %v1697 = vpow.pop %v1696
  %v1698 = vmul.f32 %v1577, 1.442695
  %v1699 = vpow.pop %v1698
  %v1700 = vmul.f32 %v1579, 1.442695
  %v1701 = vpow.pop %v1700
  %v1702 = vmul.f32 %v1654, 1.442695
  %v1703 = vpow.pop %v1702
  %v1704 = vmul.f32 %v1656, 1.442695
  %v1705 = vpow.pop %v1704
  %v1706 = vsub.f32 %v1675, 1.0
  %v1707 = vsub.f32 %v1677, 1.0
  %v1708 = vsub.f32 %v1679, 1.0
  %v1709 = vsub.f32 %v1681, 1.0
  %v1710 = vsub.f32 %v1683, 1.0
  %v1711 = vsub.f32 %v1685, 1.0
  %v1712 = vsub.f32 %v1687, 1.0
  %v1713 = vsub.f32 %v1689, 1.0
  %v1714 = vsub.f32 %v1691, 1.0
  %v1715 = vsub.f32 %v1693, 1.0
  %v1716 = vsub.f32 %v1695, 1.0
  %v1717 = vsub.f32 %v1697, 1.0
  %v1718 = vsub.f32 %v1699, 1.0
  %v1719 = vsub.f32 %v1701, 1.0
  %v1720 = vsub.f32 %v1703, 1.0
  %v1721 = vsub.f32 %v1705, 1.0
  %v1722 = vsel %vm1658, %v1417, %v1706
  %v1723 = vsel %vm1659, %v1419, %v1707
  %v1724 = vsel %vm1660, %v1494, %v1708
  %v1725 = vsel %vm1661, %v1496, %v1709
  %v1726 = vsel %vm1662, %v1571, %v1710
  %v1727 = vsel %vm1663, %v1573, %v1711
  %v1728 = vsel %vm1664, %v1648, %v1712
  %v1729 = vsel %vm1665, %v1650, %v1713
  %v1730 = vsel %vm1666, %v1423, %v1714
  %v1731 = vsel %vm1667, %v1425, %v1715
  %v1732 = vsel %vm1668, %v1500, %v1716
  %v1733 = vsel %vm1669, %v1502, %v1717
  %v1734 = vsel %vm1670, %v1577, %v1718
  %v1735 = vsel %vm1671, %v1579, %v1719
  %v1736 = vsel %vm1672, %v1654, %v1720
  %v1737 = vsel %vm1673, %v1656, %v1721
  %1754 = vrot.lane.b32.xlu0 %v1722, 127
  %v1755 = vpop.permute.xlu0 %1754
  %1756 = vrot.lane.b32.xlu0 %v1723, 127
  %v1757 = vpop.permute.xlu0 %1756
  %1758 = vrot.lane.b32.xlu0 %v1724, 127
  %v1759 = vpop.permute.xlu0 %1758
  %1760 = vrot.lane.b32.xlu0 %v1725, 127
  %v1761 = vpop.permute.xlu0 %1760
  %1762 = vrot.lane.b32.xlu0 %v1726, 127
  %v1763 = vpop.permute.xlu0 %1762
  %1764 = vrot.lane.b32.xlu0 %v1727, 127
  %v1765 = vpop.permute.xlu0 %1764
  %1766 = vrot.lane.b32.xlu0 %v1728, 127
  %v1767 = vpop.permute.xlu0 %1766
  %1768 = vrot.lane.b32.xlu0 %v1729, 127
  %v1769 = vpop.permute.xlu0 %1768
  %1770 = vrot.lane.b32.xlu0 %v1730, 127
  %v1771 = vpop.permute.xlu0 %1770
  %1772 = vrot.lane.b32.xlu0 %v1731, 127
  %v1773 = vpop.permute.xlu0 %1772
  %1774 = vrot.lane.b32.xlu0 %v1732, 127
  %v1775 = vpop.permute.xlu0 %1774
  %1776 = vrot.lane.b32.xlu0 %v1733, 127
  %v1777 = vpop.permute.xlu0 %1776
  %1778 = vrot.lane.b32.xlu0 %v1734, 127
  %v1779 = vpop.permute.xlu0 %1778
  %1780 = vrot.lane.b32.xlu0 %v1735, 127
  %v1781 = vpop.permute.xlu0 %1780
  %1782 = vrot.lane.b32.xlu0 %v1736, 127
  %v1783 = vpop.permute.xlu0 %1782
  %1784 = vrot.lane.b32.xlu0 %v1737, 127
  %v1785 = vpop.permute.xlu0 %1784
  %v1786 = vsel %vm88, %v1755, %v1757
  %v1787 = vsel %vm88, %v1757, %v1759
  %v1788 = vsel %vm88, %v1759, %v1761
  %v1789 = vsel %vm88, %v1761, %v1763
  %v1790 = vsel %vm88, %v1763, %v1765
  %v1791 = vsel %vm88, %v1765, %v1767
  %v1792 = vsel %vm88, %v1767, %v1769
  %v1793 = vsel %vm88, %v1771, %v1773
  %v1794 = vsel %vm88, %v1773, %v1775
  %v1795 = vsel %vm88, %v1775, %v1777
  %v1796 = vsel %vm88, %v1777, %v1779
  %v1797 = vsel %vm88, %v1779, %v1781
  %v1798 = vsel %vm88, %v1781, %v1783
  %v1799 = vsel %vm88, %v1783, %v1785
  %v1818 = vsel %vm88, %v1769, %v1755
  %v1819 = vsel %vm88, %v1785, %v1771
  %v1820 = vmax.f32 %v1722, %v1786
  %v1821 = vmax.f32 %v1723, %v1787
  %v1822 = vmax.f32 %v1724, %v1788
  %v1823 = vmax.f32 %v1725, %v1789
  %v1824 = vmax.f32 %v1726, %v1790
  %v1825 = vmax.f32 %v1727, %v1791
  %v1826 = vmax.f32 %v1728, %v1792
  %v1827 = vmax.f32 %v1729, %v1818
  %v1828 = vmax.f32 %v1730, %v1793
  %v1829 = vmax.f32 %v1731, %v1794
  %v1830 = vmax.f32 %v1732, %v1795
  %v1831 = vmax.f32 %v1733, %v1796
  %v1832 = vmax.f32 %v1734, %v1797
  %v1833 = vmax.f32 %v1735, %v1798
  %v1834 = vmax.f32 %v1736, %v1799
  %v1835 = vmax.f32 %v1737, %v1819
  %1836 = vrot.lane.b32.xlu0 %v1722, 126
  %v1837 = vpop.permute.xlu0 %1836
  %1838 = vrot.lane.b32.xlu0 %v1723, 126
  %v1839 = vpop.permute.xlu0 %1838
  %1840 = vrot.lane.b32.xlu0 %v1724, 126
  %v1841 = vpop.permute.xlu0 %1840
  %1842 = vrot.lane.b32.xlu0 %v1725, 126
  %v1843 = vpop.permute.xlu0 %1842
  %1844 = vrot.lane.b32.xlu0 %v1726, 126
  %v1845 = vpop.permute.xlu0 %1844
  %1846 = vrot.lane.b32.xlu0 %v1727, 126
  %v1847 = vpop.permute.xlu0 %1846
  %1848 = vrot.lane.b32.xlu0 %v1728, 126
  %v1849 = vpop.permute.xlu0 %1848
  %1850 = vrot.lane.b32.xlu0 %v1729, 126
  %v1851 = vpop.permute.xlu0 %1850
  %1852 = vrot.lane.b32.xlu0 %v1730, 126
  %v1853 = vpop.permute.xlu0 %1852
  %1854 = vrot.lane.b32.xlu0 %v1731, 126
  %v1855 = vpop.permute.xlu0 %1854
  %1856 = vrot.lane.b32.xlu0 %v1732, 126
  %v1857 = vpop.permute.xlu0 %1856
  %1858 = vrot.lane.b32.xlu0 %v1733, 126
  %v1859 = vpop.permute.xlu0 %1858
  %1860 = vrot.lane.b32.xlu0 %v1734, 126
  %v1861 = vpop.permute.xlu0 %1860
  %1862 = vrot.lane.b32.xlu0 %v1735, 126
  %v1863 = vpop.permute.xlu0 %1862
  %1864 = vrot.lane.b32.xlu0 %v1736, 126
  %v1865 = vpop.permute.xlu0 %1864
  %1866 = vrot.lane.b32.xlu0 %v1737, 126
  %v1867 = vpop.permute.xlu0 %1866
  %v1868 = vsel %vm130, %v1837, %v1839
  %v1869 = vsel %vm130, %v1839, %v1841
  %v1870 = vsel %vm130, %v1841, %v1843
  %v1871 = vsel %vm130, %v1843, %v1845
  %v1872 = vsel %vm130, %v1845, %v1847
  %v1873 = vsel %vm130, %v1847, %v1849
  %v1874 = vsel %vm130, %v1849, %v1851
  %v1875 = vsel %vm130, %v1853, %v1855
  %v1876 = vsel %vm130, %v1855, %v1857
  %v1877 = vsel %vm130, %v1857, %v1859
  %v1878 = vsel %vm130, %v1859, %v1861
  %v1879 = vsel %vm130, %v1861, %v1863
  %v1880 = vsel %vm130, %v1863, %v1865
  %v1881 = vsel %vm130, %v1865, %v1867
  %v1900 = vsel %vm130, %v1851, %v1837
  %v1901 = vsel %vm130, %v1867, %v1853
  %v1902 = vmax.f32 %v1820, %v1868
  %v1903 = vmax.f32 %v1821, %v1869
  %v1904 = vmax.f32 %v1822, %v1870
  %v1905 = vmax.f32 %v1823, %v1871
  %v1906 = vmax.f32 %v1824, %v1872
  %v1907 = vmax.f32 %v1825, %v1873
  %v1908 = vmax.f32 %v1826, %v1874
  %v1909 = vmax.f32 %v1827, %v1900
  %v1910 = vmax.f32 %v1828, %v1875
  %v1911 = vmax.f32 %v1829, %v1876
  %v1912 = vmax.f32 %v1830, %v1877
  %v1913 = vmax.f32 %v1831, %v1878
  %v1914 = vmax.f32 %v1832, %v1879
  %v1915 = vmax.f32 %v1833, %v1880
  %v1916 = vmax.f32 %v1834, %v1881
  %v1917 = vmax.f32 %v1835, %v1901
  %v1918 = vpack.c.bf16 %v1910, %v1902
  %v1919 = vpack.c.bf16 %v1911, %v1903
  %v1920 = vpack.c.bf16 %v1912, %v1904
  %v1921 = vpack.c.bf16 %v1913, %v1905
  %v1922 = vpack.c.bf16 %v1914, %v1906
  %v1923 = vpack.c.bf16 %v1915, %v1907
  %v1924 = vpack.c.bf16 %v1916, %v1908
  %v1925 = vpack.c.bf16 %v1917, %v1909
  %v1926 = vld [vmem:[%s5] sm:$0xff]
  %v1927 = vld [vmem:[%s5 + $0x8] sm:$0xff]
  %v1928 = vld [vmem:[%s5 + $0x10] sm:$0xff]
  %v1929 = vld [vmem:[%s5 + $0x18] sm:$0xff]
  %v1930 = vld [vmem:[%s5 + $0x20] sm:$0xff]
  %v1931 = vld [vmem:[%s5 + $0x28] sm:$0xff]
  %v1932 = vld [vmem:[%s5 + $0x30] sm:$0xff]
  %v1933 = vld [vmem:[%s5 + $0x38] sm:$0xff]
  %v1934 = vld [vmem:[%s5 + $0x40] sm:$0xff]
  %v1935 = vld [vmem:[%s5 + $0x48] sm:$0xff]
  %v1936 = vld [vmem:[%s5 + $0x50] sm:$0xff]
  %v1937 = vld [vmem:[%s5 + $0x58] sm:$0xff]
  %v1938 = vld [vmem:[%s5 + $0x60] sm:$0xff]
  %v1939 = vld [vmem:[%s5 + $0x68] sm:$0xff]
  %v1940 = vld [vmem:[%s5 + $0x70] sm:$0xff]
  %v1941 = vld [vmem:[%s5 + $0x78] sm:$0xff]
  %v1942 = vld [vmem:[%s5 + $0x80] sm:$0xff]
  %v1943 = vld [vmem:[%s5 + $0x88] sm:$0xff]
  %v1944 = vld [vmem:[%s5 + $0x90] sm:$0xff]
  %v1945 = vld [vmem:[%s5 + $0x98] sm:$0xff]
  %v1946 = vld [vmem:[%s5 + $0xa0] sm:$0xff]
  %v1947 = vld [vmem:[%s5 + $0xa8] sm:$0xff]
  %v1948 = vld [vmem:[%s5 + $0xb0] sm:$0xff]
  %v1949 = vld [vmem:[%s5 + $0xb8] sm:$0xff]
  %v1950 = vld [vmem:[%s5 + $0xc0] sm:$0xff]
  %v1951 = vld [vmem:[%s5 + $0xc8] sm:$0xff]
  %v1952 = vld [vmem:[%s5 + $0xd0] sm:$0xff]
  %v1953 = vld [vmem:[%s5 + $0xd8] sm:$0xff]
  %v1954 = vld [vmem:[%s5 + $0xe0] sm:$0xff]
  %v1955 = vld [vmem:[%s5 + $0xe8] sm:$0xff]
  %v1956 = vld [vmem:[%s5 + $0xf0] sm:$0xff]
  %v1957 = vld [vmem:[%s5 + $0xf8] sm:$0xff]
  %v1958 = vld [vmem:[%s5 + $0x100] sm:$0xff]
  %v1959 = vld [vmem:[%s5 + $0x108] sm:$0xff]
  %v1960 = vld [vmem:[%s5 + $0x110] sm:$0xff]
  %v1961 = vld [vmem:[%s5 + $0x118] sm:$0xff]
  %v1962 = vld [vmem:[%s5 + $0x120] sm:$0xff]
  %v1963 = vld [vmem:[%s5 + $0x128] sm:$0xff]
  %v1964 = vld [vmem:[%s5 + $0x130] sm:$0xff]
  %v1965 = vld [vmem:[%s5 + $0x138] sm:$0xff]
  %v1966 = vld [vmem:[%s5 + $0x140] sm:$0xff]
  %v1967 = vld [vmem:[%s5 + $0x148] sm:$0xff]
  %v1968 = vld [vmem:[%s5 + $0x150] sm:$0xff]
  %v1969 = vld [vmem:[%s5 + $0x158] sm:$0xff]
  %v1970 = vld [vmem:[%s5 + $0x160] sm:$0xff]
  %v1971 = vld [vmem:[%s5 + $0x168] sm:$0xff]
  %v1972 = vld [vmem:[%s5 + $0x170] sm:$0xff]
  %v1973 = vld [vmem:[%s5 + $0x178] sm:$0xff]
  %v1974 = vld [vmem:[%s5 + $0x180] sm:$0xff]
  %v1975 = vld [vmem:[%s5 + $0x188] sm:$0xff]
  %v1976 = vld [vmem:[%s5 + $0x190] sm:$0xff]
  %v1977 = vld [vmem:[%s5 + $0x198] sm:$0xff]
  %v1978 = vld [vmem:[%s5 + $0x1a0] sm:$0xff]
  %v1979 = vld [vmem:[%s5 + $0x1a8] sm:$0xff]
  %v1980 = vld [vmem:[%s5 + $0x1b0] sm:$0xff]
  %v1981 = vld [vmem:[%s5 + $0x1b8] sm:$0xff]
  %v1982 = vld [vmem:[%s5 + $0x1c0] sm:$0xff]
  %v1983 = vld [vmem:[%s5 + $0x1c8] sm:$0xff]
  %v1984 = vld [vmem:[%s5 + $0x1d0] sm:$0xff]
  %v1985 = vld [vmem:[%s5 + $0x1d8] sm:$0xff]
  %v1986 = vld [vmem:[%s5 + $0x1e0] sm:$0xff]
  %v1987 = vld [vmem:[%s5 + $0x1e8] sm:$0xff]
  %v1988 = vld [vmem:[%s5 + $0x1f0] sm:$0xff]
  %v1989 = vld [vmem:[%s5 + $0x1f8] sm:$0xff]
  %v1990 = vld [vmem:[%s5 + $0x200] sm:$0xff]
  %v1991 = vld [vmem:[%s5 + $0x208] sm:$0xff]
  %v1992 = vld [vmem:[%s5 + $0x210] sm:$0xff]
  %v1993 = vld [vmem:[%s5 + $0x218] sm:$0xff]
  %v1994 = vld [vmem:[%s5 + $0x220] sm:$0xff]
  %v1995 = vld [vmem:[%s5 + $0x228] sm:$0xff]
  %v1996 = vld [vmem:[%s5 + $0x230] sm:$0xff]
  %v1997 = vld [vmem:[%s5 + $0x238] sm:$0xff]
  %v1998 = vld [vmem:[%s5 + $0x240] sm:$0xff]
  %v1999 = vld [vmem:[%s5 + $0x248] sm:$0xff]
  %v2000 = vld [vmem:[%s5 + $0x250] sm:$0xff]
  %v2001 = vld [vmem:[%s5 + $0x258] sm:$0xff]
  %v2002 = vld [vmem:[%s5 + $0x260] sm:$0xff]
  %v2003 = vld [vmem:[%s5 + $0x268] sm:$0xff]
  %v2004 = vld [vmem:[%s5 + $0x270] sm:$0xff]
  %v2005 = vld [vmem:[%s5 + $0x278] sm:$0xff]
  %v2006 = vld [vmem:[%s5 + $0x280] sm:$0xff]
  %v2007 = vld [vmem:[%s5 + $0x288] sm:$0xff]
  %v2008 = vld [vmem:[%s5 + $0x290] sm:$0xff]
  %v2009 = vld [vmem:[%s5 + $0x298] sm:$0xff]
  %v2010 = vld [vmem:[%s5 + $0x2a0] sm:$0xff]
  %v2011 = vld [vmem:[%s5 + $0x2a8] sm:$0xff]
  %v2012 = vld [vmem:[%s5 + $0x2b0] sm:$0xff]
  %v2013 = vld [vmem:[%s5 + $0x2b8] sm:$0xff]
  %v2014 = vld [vmem:[%s5 + $0x2c0] sm:$0xff]
  %v2015 = vld [vmem:[%s5 + $0x2c8] sm:$0xff]
  %v2016 = vld [vmem:[%s5 + $0x2d0] sm:$0xff]
  %v2017 = vld [vmem:[%s5 + $0x2d8] sm:$0xff]
  %v2018 = vld [vmem:[%s5 + $0x2e0] sm:$0xff]
  %v2019 = vld [vmem:[%s5 + $0x2e8] sm:$0xff]
  %v2020 = vld [vmem:[%s5 + $0x2f0] sm:$0xff]
  %v2021 = vld [vmem:[%s5 + $0x2f8] sm:$0xff]
  %v2022 = vld [vmem:[%s5 + $0x300] sm:$0xff]
  %v2023 = vld [vmem:[%s5 + $0x308] sm:$0xff]
  %v2024 = vld [vmem:[%s5 + $0x310] sm:$0xff]
  %v2025 = vld [vmem:[%s5 + $0x318] sm:$0xff]
  %v2026 = vld [vmem:[%s5 + $0x320] sm:$0xff]
  %v2027 = vld [vmem:[%s5 + $0x328] sm:$0xff]
  %v2028 = vld [vmem:[%s5 + $0x330] sm:$0xff]
  %v2029 = vld [vmem:[%s5 + $0x338] sm:$0xff]
  %v2030 = vld [vmem:[%s5 + $0x340] sm:$0xff]
  %v2031 = vld [vmem:[%s5 + $0x348] sm:$0xff]
  %v2032 = vld [vmem:[%s5 + $0x350] sm:$0xff]
  %v2033 = vld [vmem:[%s5 + $0x358] sm:$0xff]
  %v2034 = vld [vmem:[%s5 + $0x360] sm:$0xff]
  %v2035 = vld [vmem:[%s5 + $0x368] sm:$0xff]
  %v2036 = vld [vmem:[%s5 + $0x370] sm:$0xff]
  %v2037 = vld [vmem:[%s5 + $0x378] sm:$0xff]
  %v2038 = vld [vmem:[%s5 + $0x380] sm:$0xff]
  %v2039 = vld [vmem:[%s5 + $0x388] sm:$0xff]
  %v2040 = vld [vmem:[%s5 + $0x390] sm:$0xff]
  %v2041 = vld [vmem:[%s5 + $0x398] sm:$0xff]
  %v2042 = vld [vmem:[%s5 + $0x3a0] sm:$0xff]
  %v2043 = vld [vmem:[%s5 + $0x3a8] sm:$0xff]
  %v2044 = vld [vmem:[%s5 + $0x3b0] sm:$0xff]
  %v2045 = vld [vmem:[%s5 + $0x3b8] sm:$0xff]
  %v2046 = vld [vmem:[%s5 + $0x3c0] sm:$0xff]
  %v2047 = vld [vmem:[%s5 + $0x3c8] sm:$0xff]
  %v2048 = vld [vmem:[%s5 + $0x3d0] sm:$0xff]
  %v2049 = vld [vmem:[%s5 + $0x3d8] sm:$0xff]
  %v2050 = vld [vmem:[%s5 + $0x3e0] sm:$0xff]
  %v2051 = vld [vmem:[%s5 + $0x3e8] sm:$0xff]
  %v2052 = vld [vmem:[%s5 + $0x3f0] sm:$0xff]
  %v2053 = vld [vmem:[%s5 + $0x3f8] sm:$0xff]
  %v2182 = vunpack.c.l.b16 %v1926
  %v2183 = vunpack.c.h.b16 %v1926
  %v2184 = vunpack.c.l.b16 %v1927
  %v2185 = vunpack.c.h.b16 %v1927
  %v2186 = vunpack.c.l.b16 %v1928
  %v2187 = vunpack.c.h.b16 %v1928
  %v2188 = vunpack.c.l.b16 %v1929
  %v2189 = vunpack.c.h.b16 %v1929
  %v2190 = vunpack.c.l.b16 %v1930
  %v2191 = vunpack.c.h.b16 %v1930
  %v2192 = vunpack.c.l.b16 %v1931
  %v2193 = vunpack.c.h.b16 %v1931
  %v2194 = vunpack.c.l.b16 %v1932
  %v2195 = vunpack.c.h.b16 %v1932
  %v2196 = vunpack.c.l.b16 %v1933
  %v2197 = vunpack.c.h.b16 %v1933
  %v2198 = vunpack.c.l.b16 %v1934
  %v2199 = vunpack.c.h.b16 %v1934
  %v2200 = vunpack.c.l.b16 %v1935
  %v2201 = vunpack.c.h.b16 %v1935
  %v2202 = vunpack.c.l.b16 %v1936
  %v2203 = vunpack.c.h.b16 %v1936
  %v2204 = vunpack.c.l.b16 %v1937
  %v2205 = vunpack.c.h.b16 %v1937
  %v2206 = vunpack.c.l.b16 %v1938
  %v2207 = vunpack.c.h.b16 %v1938
  %v2208 = vunpack.c.l.b16 %v1939
  %v2209 = vunpack.c.h.b16 %v1939
  %v2210 = vunpack.c.l.b16 %v1940
  %v2211 = vunpack.c.h.b16 %v1940
  %v2212 = vunpack.c.l.b16 %v1941
  %v2213 = vunpack.c.h.b16 %v1941
  %v2214 = vunpack.c.l.b16 %v1942
  %v2215 = vunpack.c.h.b16 %v1942
  %v2216 = vunpack.c.l.b16 %v1943
  %v2217 = vunpack.c.h.b16 %v1943
  %v2218 = vunpack.c.l.b16 %v1944
  %v2219 = vunpack.c.h.b16 %v1944
  %v2220 = vunpack.c.l.b16 %v1945
  %v2221 = vunpack.c.h.b16 %v1945
  %v2222 = vunpack.c.l.b16 %v1946
  %v2223 = vunpack.c.h.b16 %v1946
  %v2224 = vunpack.c.l.b16 %v1947
  %v2225 = vunpack.c.h.b16 %v1947
  %v2226 = vunpack.c.l.b16 %v1948
  %v2227 = vunpack.c.h.b16 %v1948
  %v2228 = vunpack.c.l.b16 %v1949
  %v2229 = vunpack.c.h.b16 %v1949
  %v2230 = vunpack.c.l.b16 %v1950
  %v2231 = vunpack.c.h.b16 %v1950
  %v2232 = vunpack.c.l.b16 %v1951
  %v2233 = vunpack.c.h.b16 %v1951
  %v2234 = vunpack.c.l.b16 %v1952
  %v2235 = vunpack.c.h.b16 %v1952
  %v2236 = vunpack.c.l.b16 %v1953
  %v2237 = vunpack.c.h.b16 %v1953
  %v2238 = vunpack.c.l.b16 %v1954
  %v2239 = vunpack.c.h.b16 %v1954
  %v2240 = vunpack.c.l.b16 %v1955
  %v2241 = vunpack.c.h.b16 %v1955
  %v2242 = vunpack.c.l.b16 %v1956
  %v2243 = vunpack.c.h.b16 %v1956
  %v2244 = vunpack.c.l.b16 %v1957
  %v2245 = vunpack.c.h.b16 %v1957
  %v2246 = vunpack.c.l.b16 %v1958
  %v2247 = vunpack.c.h.b16 %v1958
  %v2248 = vunpack.c.l.b16 %v1959
  %v2249 = vunpack.c.h.b16 %v1959
  %v2250 = vunpack.c.l.b16 %v1960
  %v2251 = vunpack.c.h.b16 %v1960
  %v2252 = vunpack.c.l.b16 %v1961
  %v2253 = vunpack.c.h.b16 %v1961
  %v2254 = vunpack.c.l.b16 %v1962
  %v2255 = vunpack.c.h.b16 %v1962
  %v2256 = vunpack.c.l.b16 %v1963
  %v2257 = vunpack.c.h.b16 %v1963
  %v2258 = vunpack.c.l.b16 %v1964
  %v2259 = vunpack.c.h.b16 %v1964
  %v2260 = vunpack.c.l.b16 %v1965
  %v2261 = vunpack.c.h.b16 %v1965
  %v2262 = vunpack.c.l.b16 %v1966
  %v2263 = vunpack.c.h.b16 %v1966
  %v2264 = vunpack.c.l.b16 %v1967
  %v2265 = vunpack.c.h.b16 %v1967
  %v2266 = vunpack.c.l.b16 %v1968
  %v2267 = vunpack.c.h.b16 %v1968
  %v2268 = vunpack.c.l.b16 %v1969
  %v2269 = vunpack.c.h.b16 %v1969
  %v2270 = vunpack.c.l.b16 %v1970
  %v2271 = vunpack.c.h.b16 %v1970
  %v2272 = vunpack.c.l.b16 %v1971
  %v2273 = vunpack.c.h.b16 %v1971
  %v2274 = vunpack.c.l.b16 %v1972
  %v2275 = vunpack.c.h.b16 %v1972
  %v2276 = vunpack.c.l.b16 %v1973
  %v2277 = vunpack.c.h.b16 %v1973
  %v2278 = vunpack.c.l.b16 %v1974
  %v2279 = vunpack.c.h.b16 %v1974
  %v2280 = vunpack.c.l.b16 %v1975
  %v2281 = vunpack.c.h.b16 %v1975
  %v2282 = vunpack.c.l.b16 %v1976
  %v2283 = vunpack.c.h.b16 %v1976
  %v2284 = vunpack.c.l.b16 %v1977
  %v2285 = vunpack.c.h.b16 %v1977
  %v2286 = vunpack.c.l.b16 %v1978
  %v2287 = vunpack.c.h.b16 %v1978
  %v2288 = vunpack.c.l.b16 %v1979
  %v2289 = vunpack.c.h.b16 %v1979
  %v2290 = vunpack.c.l.b16 %v1980
  %v2291 = vunpack.c.h.b16 %v1980
  %v2292 = vunpack.c.l.b16 %v1981
  %v2293 = vunpack.c.h.b16 %v1981
  %v2294 = vunpack.c.l.b16 %v1982
  %v2295 = vunpack.c.h.b16 %v1982
  %v2296 = vunpack.c.l.b16 %v1983
  %v2297 = vunpack.c.h.b16 %v1983
  %v2298 = vunpack.c.l.b16 %v1984
  %v2299 = vunpack.c.h.b16 %v1984
  %v2300 = vunpack.c.l.b16 %v1985
  %v2301 = vunpack.c.h.b16 %v1985
  %v2302 = vunpack.c.l.b16 %v1986
  %v2303 = vunpack.c.h.b16 %v1986
  %v2304 = vunpack.c.l.b16 %v1987
  %v2305 = vunpack.c.h.b16 %v1987
  %v2306 = vunpack.c.l.b16 %v1988
  %v2307 = vunpack.c.h.b16 %v1988
  %v2308 = vunpack.c.l.b16 %v1989
  %v2309 = vunpack.c.h.b16 %v1989
  %v2310 = vunpack.c.l.b16 %v1990
  %v2311 = vunpack.c.h.b16 %v1990
  %v2312 = vunpack.c.l.b16 %v1991
  %v2313 = vunpack.c.h.b16 %v1991
  %v2314 = vunpack.c.l.b16 %v1992
  %v2315 = vunpack.c.h.b16 %v1992
  %v2316 = vunpack.c.l.b16 %v1993
  %v2317 = vunpack.c.h.b16 %v1993
  %v2318 = vunpack.c.l.b16 %v1994
  %v2319 = vunpack.c.h.b16 %v1994
  %v2320 = vunpack.c.l.b16 %v1995
  %v2321 = vunpack.c.h.b16 %v1995
  %v2322 = vunpack.c.l.b16 %v1996
  %v2323 = vunpack.c.h.b16 %v1996
  %v2324 = vunpack.c.l.b16 %v1997
  %v2325 = vunpack.c.h.b16 %v1997
  %v2326 = vunpack.c.l.b16 %v1998
  %v2327 = vunpack.c.h.b16 %v1998
  %v2328 = vunpack.c.l.b16 %v1999
  %v2329 = vunpack.c.h.b16 %v1999
  %v2330 = vunpack.c.l.b16 %v2000
  %v2331 = vunpack.c.h.b16 %v2000
  %v2332 = vunpack.c.l.b16 %v2001
  %v2333 = vunpack.c.h.b16 %v2001
  %v2334 = vunpack.c.l.b16 %v2002
  %v2335 = vunpack.c.h.b16 %v2002
  %v2336 = vunpack.c.l.b16 %v2003
  %v2337 = vunpack.c.h.b16 %v2003
  %v2338 = vunpack.c.l.b16 %v2004
  %v2339 = vunpack.c.h.b16 %v2004
  %v2340 = vunpack.c.l.b16 %v2005
  %v2341 = vunpack.c.h.b16 %v2005
  %v2342 = vunpack.c.l.b16 %v2006
  %v2343 = vunpack.c.h.b16 %v2006
  %v2344 = vunpack.c.l.b16 %v2007
  %v2345 = vunpack.c.h.b16 %v2007
  %v2346 = vunpack.c.l.b16 %v2008
  %v2347 = vunpack.c.h.b16 %v2008
  %v2348 = vunpack.c.l.b16 %v2009
  %v2349 = vunpack.c.h.b16 %v2009
  %v2350 = vunpack.c.l.b16 %v2010
  %v2351 = vunpack.c.h.b16 %v2010
  %v2352 = vunpack.c.l.b16 %v2011
  %v2353 = vunpack.c.h.b16 %v2011
  %v2354 = vunpack.c.l.b16 %v2012
  %v2355 = vunpack.c.h.b16 %v2012
  %v2356 = vunpack.c.l.b16 %v2013
  %v2357 = vunpack.c.h.b16 %v2013
  %v2358 = vunpack.c.l.b16 %v2014
  %v2359 = vunpack.c.h.b16 %v2014
  %v2360 = vunpack.c.l.b16 %v2015
  %v2361 = vunpack.c.h.b16 %v2015
  %v2362 = vunpack.c.l.b16 %v2016
  %v2363 = vunpack.c.h.b16 %v2016
  %v2364 = vunpack.c.l.b16 %v2017
  %v2365 = vunpack.c.h.b16 %v2017
  %v2366 = vunpack.c.l.b16 %v2018
  %v2367 = vunpack.c.h.b16 %v2018
  %v2368 = vunpack.c.l.b16 %v2019
  %v2369 = vunpack.c.h.b16 %v2019
  %v2370 = vunpack.c.l.b16 %v2020
  %v2371 = vunpack.c.h.b16 %v2020
  %v2372 = vunpack.c.l.b16 %v2021
  %v2373 = vunpack.c.h.b16 %v2021
  %v2374 = vunpack.c.l.b16 %v2022
  %v2375 = vunpack.c.h.b16 %v2022
  %v2376 = vunpack.c.l.b16 %v2023
  %v2377 = vunpack.c.h.b16 %v2023
  %v2378 = vunpack.c.l.b16 %v2024
  %v2379 = vunpack.c.h.b16 %v2024
  %v2380 = vunpack.c.l.b16 %v2025
  %v2381 = vunpack.c.h.b16 %v2025
  %v2382 = vunpack.c.l.b16 %v2026
  %v2383 = vunpack.c.h.b16 %v2026
  %v2384 = vunpack.c.l.b16 %v2027
  %v2385 = vunpack.c.h.b16 %v2027
  %v2386 = vunpack.c.l.b16 %v2028
  %v2387 = vunpack.c.h.b16 %v2028
  %v2388 = vunpack.c.l.b16 %v2029
  %v2389 = vunpack.c.h.b16 %v2029
  %v2390 = vunpack.c.l.b16 %v2030
  %v2391 = vunpack.c.h.b16 %v2030
  %v2392 = vunpack.c.l.b16 %v2031
  %v2393 = vunpack.c.h.b16 %v2031
  %v2394 = vunpack.c.l.b16 %v2032
  %v2395 = vunpack.c.h.b16 %v2032
  %v2396 = vunpack.c.l.b16 %v2033
  %v2397 = vunpack.c.h.b16 %v2033
  %v2398 = vunpack.c.l.b16 %v2034
  %v2399 = vunpack.c.h.b16 %v2034
  %v2400 = vunpack.c.l.b16 %v2035
  %v2401 = vunpack.c.h.b16 %v2035
  %v2402 = vunpack.c.l.b16 %v2036
  %v2403 = vunpack.c.h.b16 %v2036
  %v2404 = vunpack.c.l.b16 %v2037
  %v2405 = vunpack.c.h.b16 %v2037
  %v2406 = vunpack.c.l.b16 %v2038
  %v2407 = vunpack.c.h.b16 %v2038
  %v2408 = vunpack.c.l.b16 %v2039
  %v2409 = vunpack.c.h.b16 %v2039
  %v2410 = vunpack.c.l.b16 %v2040
  %v2411 = vunpack.c.h.b16 %v2040
  %v2412 = vunpack.c.l.b16 %v2041
  %v2413 = vunpack.c.h.b16 %v2041
  %v2414 = vunpack.c.l.b16 %v2042
  %v2415 = vunpack.c.h.b16 %v2042
  %v2416 = vunpack.c.l.b16 %v2043
  %v2417 = vunpack.c.h.b16 %v2043
  %v2418 = vunpack.c.l.b16 %v2044
  %v2419 = vunpack.c.h.b16 %v2044
  %v2420 = vunpack.c.l.b16 %v2045
  %v2421 = vunpack.c.h.b16 %v2045
  %v2422 = vunpack.c.l.b16 %v2046
  %v2423 = vunpack.c.h.b16 %v2046
  %v2424 = vunpack.c.l.b16 %v2047
  %v2425 = vunpack.c.h.b16 %v2047
  %v2426 = vunpack.c.l.b16 %v2048
  %v2427 = vunpack.c.h.b16 %v2048
  %v2428 = vunpack.c.l.b16 %v2049
  %v2429 = vunpack.c.h.b16 %v2049
  %v2430 = vunpack.c.l.b16 %v2050
  %v2431 = vunpack.c.h.b16 %v2050
  %v2432 = vunpack.c.l.b16 %v2051
  %v2433 = vunpack.c.h.b16 %v2051
  %v2434 = vunpack.c.l.b16 %v2052
  %v2435 = vunpack.c.h.b16 %v2052
  %v2436 = vunpack.c.l.b16 %v2053
  %v2437 = vunpack.c.h.b16 %v2053
  %v2438 = vpack.c.b16 %v2184, %v2182
  %v2439 = vpack.c.b16 %v2185, %v2183
  %v2440 = vpack.c.b16 %v2188, %v2186
  %v2441 = vpack.c.b16 %v2189, %v2187
  %v2442 = vpack.c.b16 %v2192, %v2190
  %v2443 = vpack.c.b16 %v2193, %v2191
  %v2444 = vpack.c.b16 %v2196, %v2194
  %v2445 = vpack.c.b16 %v2197, %v2195
  %v2446 = vpack.c.b16 %v2200, %v2198
  %v2447 = vpack.c.b16 %v2201, %v2199
  %v2448 = vpack.c.b16 %v2204, %v2202
  %v2449 = vpack.c.b16 %v2205, %v2203
  %v2450 = vpack.c.b16 %v2208, %v2206
  %v2451 = vpack.c.b16 %v2209, %v2207
  %v2452 = vpack.c.b16 %v2212, %v2210
  %v2453 = vpack.c.b16 %v2213, %v2211
  %v2454 = vpack.c.b16 %v2216, %v2214
  %v2455 = vpack.c.b16 %v2217, %v2215
  %v2456 = vpack.c.b16 %v2220, %v2218
  %v2457 = vpack.c.b16 %v2221, %v2219
  %v2458 = vpack.c.b16 %v2224, %v2222
  %v2459 = vpack.c.b16 %v2225, %v2223
  %v2460 = vpack.c.b16 %v2228, %v2226
  %v2461 = vpack.c.b16 %v2229, %v2227
  %v2462 = vpack.c.b16 %v2232, %v2230
  %v2463 = vpack.c.b16 %v2233, %v2231
  %v2464 = vpack.c.b16 %v2236, %v2234
  %v2465 = vpack.c.b16 %v2237, %v2235
  %v2466 = vpack.c.b16 %v2240, %v2238
  %v2467 = vpack.c.b16 %v2241, %v2239
  %v2468 = vpack.c.b16 %v2244, %v2242
  %v2469 = vpack.c.b16 %v2245, %v2243
  %v2470 = vpack.c.b16 %v2248, %v2246
  %v2471 = vpack.c.b16 %v2249, %v2247
  %v2472 = vpack.c.b16 %v2252, %v2250
  %v2473 = vpack.c.b16 %v2253, %v2251
  %v2474 = vpack.c.b16 %v2256, %v2254
  %v2475 = vpack.c.b16 %v2257, %v2255
  %v2476 = vpack.c.b16 %v2260, %v2258
  %v2477 = vpack.c.b16 %v2261, %v2259
  %v2478 = vpack.c.b16 %v2264, %v2262
  %v2479 = vpack.c.b16 %v2265, %v2263
  %v2480 = vpack.c.b16 %v2268, %v2266
  %v2481 = vpack.c.b16 %v2269, %v2267
  %v2482 = vpack.c.b16 %v2272, %v2270
  %v2483 = vpack.c.b16 %v2273, %v2271
  %v2484 = vpack.c.b16 %v2276, %v2274
  %v2485 = vpack.c.b16 %v2277, %v2275
  %v2486 = vpack.c.b16 %v2280, %v2278
  %v2487 = vpack.c.b16 %v2281, %v2279
  %v2488 = vpack.c.b16 %v2284, %v2282
  %v2489 = vpack.c.b16 %v2285, %v2283
  %v2490 = vpack.c.b16 %v2288, %v2286
  %v2491 = vpack.c.b16 %v2289, %v2287
  %v2492 = vpack.c.b16 %v2292, %v2290
  %v2493 = vpack.c.b16 %v2293, %v2291
  %v2494 = vpack.c.b16 %v2296, %v2294
  %v2495 = vpack.c.b16 %v2297, %v2295
  %v2496 = vpack.c.b16 %v2300, %v2298
  %v2497 = vpack.c.b16 %v2301, %v2299
  %v2498 = vpack.c.b16 %v2304, %v2302
  %v2499 = vpack.c.b16 %v2305, %v2303
  %v2500 = vpack.c.b16 %v2308, %v2306
  %v2501 = vpack.c.b16 %v2309, %v2307
  %v2502 = vpack.c.b16 %v2312, %v2310
  %v2503 = vpack.c.b16 %v2313, %v2311
  %v2504 = vpack.c.b16 %v2316, %v2314
  %v2505 = vpack.c.b16 %v2317, %v2315
  %v2506 = vpack.c.b16 %v2320, %v2318
  %v2507 = vpack.c.b16 %v2321, %v2319
  %v2508 = vpack.c.b16 %v2324, %v2322
  %v2509 = vpack.c.b16 %v2325, %v2323
  %v2510 = vpack.c.b16 %v2328, %v2326
  %v2511 = vpack.c.b16 %v2329, %v2327
  %v2512 = vpack.c.b16 %v2332, %v2330
  %v2513 = vpack.c.b16 %v2333, %v2331
  %v2514 = vpack.c.b16 %v2336, %v2334
  %v2515 = vpack.c.b16 %v2337, %v2335
  %v2516 = vpack.c.b16 %v2340, %v2338
  %v2517 = vpack.c.b16 %v2341, %v2339
  %v2518 = vpack.c.b16 %v2344, %v2342
  %v2519 = vpack.c.b16 %v2345, %v2343
  %v2520 = vpack.c.b16 %v2348, %v2346
  %v2521 = vpack.c.b16 %v2349, %v2347
  %v2522 = vpack.c.b16 %v2352, %v2350
  %v2523 = vpack.c.b16 %v2353, %v2351
  %v2524 = vpack.c.b16 %v2356, %v2354
  %v2525 = vpack.c.b16 %v2357, %v2355
  %v2526 = vpack.c.b16 %v2360, %v2358
  %v2527 = vpack.c.b16 %v2361, %v2359
  %v2528 = vpack.c.b16 %v2364, %v2362
  %v2529 = vpack.c.b16 %v2365, %v2363
  %v2530 = vpack.c.b16 %v2368, %v2366
  %v2531 = vpack.c.b16 %v2369, %v2367
  %v2532 = vpack.c.b16 %v2372, %v2370
  %v2533 = vpack.c.b16 %v2373, %v2371
  %v2534 = vpack.c.b16 %v2376, %v2374
  %v2535 = vpack.c.b16 %v2377, %v2375
  %v2536 = vpack.c.b16 %v2380, %v2378
  %v2537 = vpack.c.b16 %v2381, %v2379
  %v2538 = vpack.c.b16 %v2384, %v2382
  %v2539 = vpack.c.b16 %v2385, %v2383
  %v2540 = vpack.c.b16 %v2388, %v2386
  %v2541 = vpack.c.b16 %v2389, %v2387
  %v2542 = vpack.c.b16 %v2392, %v2390
  %v2543 = vpack.c.b16 %v2393, %v2391
  %v2544 = vpack.c.b16 %v2396, %v2394
  %v2545 = vpack.c.b16 %v2397, %v2395
  %v2546 = vpack.c.b16 %v2400, %v2398
  %v2547 = vpack.c.b16 %v2401, %v2399
  %v2548 = vpack.c.b16 %v2404, %v2402
  %v2549 = vpack.c.b16 %v2405, %v2403
  %v2550 = vpack.c.b16 %v2408, %v2406
  %v2551 = vpack.c.b16 %v2409, %v2407
  %v2552 = vpack.c.b16 %v2412, %v2410
  %v2553 = vpack.c.b16 %v2413, %v2411
  %v2554 = vpack.c.b16 %v2416, %v2414
  %v2555 = vpack.c.b16 %v2417, %v2415
  %v2556 = vpack.c.b16 %v2420, %v2418
  %v2557 = vpack.c.b16 %v2421, %v2419
  %v2558 = vpack.c.b16 %v2424, %v2422
  %v2559 = vpack.c.b16 %v2425, %v2423
  %v2560 = vpack.c.b16 %v2428, %v2426
  %v2561 = vpack.c.b16 %v2429, %v2427
  %v2562 = vpack.c.b16 %v2432, %v2430
  %v2563 = vpack.c.b16 %v2433, %v2431
  %v2564 = vpack.c.b16 %v2436, %v2434
  %v2565 = vpack.c.b16 %v2437, %v2435
  %2694 = vmatprep.subr.bf16.mxu0 %v2453
  %2695 = vmatpush1.bf16.msra.mxu0 %v2452
  %2696 = vmatprep.subr.bf16.mxu0 %v2451
  %2697 = vmatpush1.bf16.msra.mxu0 %v2450
  %2698 = vmatprep.subr.bf16.mxu0 %v2449
  %2699 = vmatpush1.bf16.msra.mxu0 %v2448
  %2700 = vmatprep.subr.bf16.mxu0 %v2447
  %2701 = vmatpush1.bf16.msra.mxu0 %v2446
  %2702 = vmatprep.subr.bf16.mxu0 %v2445
  %2703 = vmatpush1.bf16.msra.mxu0 %v2444
  %2704 = vmatprep.subr.bf16.mxu0 %v2443
  %2705 = vmatpush1.bf16.msra.mxu0 %v2442
  %2706 = vmatprep.subr.bf16.mxu0 %v2441
  %2707 = vmatpush1.bf16.msra.mxu0 %v2440
  %2708 = vmatprep.subr.bf16.mxu0 %v2439
  %2709 = vmatpush1.bf16.msra.mxu0 %v2438
  %2710 = vmatprep.subr.bf16.mxu0 %v2469
  %2711 = vmatpush2.bf16.msra.mxu0 %v2468
  %2712 = vmatprep.subr.bf16.mxu0 %v2467
  %2713 = vmatpush2.bf16.msra.mxu0 %v2466
  %2714 = vmatprep.subr.bf16.mxu0 %v2465
  %2715 = vmatpush2.bf16.msra.mxu0 %v2464
  %2716 = vmatprep.subr.bf16.mxu0 %v2463
  %2717 = vmatpush2.bf16.msra.mxu0 %v2462
  %2718 = vmatprep.subr.bf16.mxu0 %v2461
  %2719 = vmatpush2.bf16.msra.mxu0 %v2460
  %2720 = vmatprep.subr.bf16.mxu0 %v2459
  %2721 = vmatpush2.bf16.msra.mxu0 %v2458
  %2722 = vmatprep.subr.bf16.mxu0 %v2457
  %2723 = vmatpush2.bf16.msra.mxu0 %v2456
  %2724 = vmatprep.subr.bf16.mxu0 %v2455
  %2725 = vmatpush2.bf16.msra.mxu0 %v2454
  %2726 = vmatprep.mubr.bf16.mxu0 %v1919
  %2727 = vmatmul.mubr.bf16.gmra.mxu0 %v1918
  %v2728 = vpop.f32.mrf.mxu0
  %v2729 = vadd.f32 0.0, %v2728
  %v2730 = vpop.f32.mrf.mxu0
  %v2731 = vadd.f32 0.0, %v2730
  %v2732 = vpop.f32.mrf.mxu0
  %v2733 = vadd.f32 0.0, %v2732
  %v2734 = vpop.f32.mrf.mxu0
  %v2735 = vadd.f32 0.0, %v2734
  %2736 = vdwg.mxu0
  %2737 = vmatprep.subr.bf16.mxu0 %v2485
  %2738 = vmatpush1.bf16.msra.mxu0 %v2484
  %2739 = vmatprep.subr.bf16.mxu0 %v2483
  %2740 = vmatpush1.bf16.msra.mxu0 %v2482
  %2741 = vmatprep.subr.bf16.mxu0 %v2481
  %2742 = vmatpush1.bf16.msra.mxu0 %v2480
  %2743 = vmatprep.subr.bf16.mxu0 %v2479
  %2744 = vmatpush1.bf16.msra.mxu0 %v2478
  %2745 = vmatprep.subr.bf16.mxu0 %v2477
  %2746 = vmatpush1.bf16.msra.mxu0 %v2476
  %2747 = vmatprep.subr.bf16.mxu0 %v2475
  %2748 = vmatpush1.bf16.msra.mxu0 %v2474
  %2749 = vmatprep.subr.bf16.mxu0 %v2473
  %2750 = vmatpush1.bf16.msra.mxu0 %v2472
  %2751 = vmatprep.subr.bf16.mxu0 %v2471
  %2752 = vmatpush1.bf16.msra.mxu0 %v2470
  %2753 = vmatprep.subr.bf16.mxu0 %v2501
  %2754 = vmatpush2.bf16.msra.mxu0 %v2500
  %2755 = vmatprep.subr.bf16.mxu0 %v2499
  %2756 = vmatpush2.bf16.msra.mxu0 %v2498
  %2757 = vmatprep.subr.bf16.mxu0 %v2497
  %2758 = vmatpush2.bf16.msra.mxu0 %v2496
  %2759 = vmatprep.subr.bf16.mxu0 %v2495
  %2760 = vmatpush2.bf16.msra.mxu0 %v2494
  %2761 = vmatprep.subr.bf16.mxu0 %v2493
  %2762 = vmatpush2.bf16.msra.mxu0 %v2492
  %2763 = vmatprep.subr.bf16.mxu0 %v2491
  %2764 = vmatpush2.bf16.msra.mxu0 %v2490
  %2765 = vmatprep.subr.bf16.mxu0 %v2489
  %2766 = vmatpush2.bf16.msra.mxu0 %v2488
  %2767 = vmatprep.subr.bf16.mxu0 %v2487
  %2768 = vmatpush2.bf16.msra.mxu0 %v2486
  %2769 = vmatprep.mubr.bf16.mxu0 %v1921
  %2770 = vmatmul.mubr.bf16.gmra.mxu0 %v1920
  %v2771 = vpop.f32.mrf.mxu0
  %v2772 = vadd.f32 %v2729, %v2771
  %v2773 = vpop.f32.mrf.mxu0
  %v2774 = vadd.f32 %v2731, %v2773
  %v2775 = vpop.f32.mrf.mxu0
  %v2776 = vadd.f32 %v2733, %v2775
  %v2777 = vpop.f32.mrf.mxu0
  %v2778 = vadd.f32 %v2735, %v2777
  %2779 = vdwg.mxu0
  %2780 = vmatprep.subr.bf16.mxu0 %v2517
  %2781 = vmatpush1.bf16.msra.mxu0 %v2516
  %2782 = vmatprep.subr.bf16.mxu0 %v2515
  %2783 = vmatpush1.bf16.msra.mxu0 %v2514
  %2784 = vmatprep.subr.bf16.mxu0 %v2513
  %2785 = vmatpush1.bf16.msra.mxu0 %v2512
  %2786 = vmatprep.subr.bf16.mxu0 %v2511
  %2787 = vmatpush1.bf16.msra.mxu0 %v2510
  %2788 = vmatprep.subr.bf16.mxu0 %v2509
  %2789 = vmatpush1.bf16.msra.mxu0 %v2508
  %2790 = vmatprep.subr.bf16.mxu0 %v2507
  %2791 = vmatpush1.bf16.msra.mxu0 %v2506
  %2792 = vmatprep.subr.bf16.mxu0 %v2505
  %2793 = vmatpush1.bf16.msra.mxu0 %v2504
  %2794 = vmatprep.subr.bf16.mxu0 %v2503
  %2795 = vmatpush1.bf16.msra.mxu0 %v2502
  %2796 = vmatprep.subr.bf16.mxu0 %v2533
  %2797 = vmatpush2.bf16.msra.mxu0 %v2532
  %2798 = vmatprep.subr.bf16.mxu0 %v2531
  %2799 = vmatpush2.bf16.msra.mxu0 %v2530
  %2800 = vmatprep.subr.bf16.mxu0 %v2529
  %2801 = vmatpush2.bf16.msra.mxu0 %v2528
  %2802 = vmatprep.subr.bf16.mxu0 %v2527
  %2803 = vmatpush2.bf16.msra.mxu0 %v2526
  %2804 = vmatprep.subr.bf16.mxu0 %v2525
  %2805 = vmatpush2.bf16.msra.mxu0 %v2524
  %2806 = vmatprep.subr.bf16.mxu0 %v2523
  %2807 = vmatpush2.bf16.msra.mxu0 %v2522
  %2808 = vmatprep.subr.bf16.mxu0 %v2521
  %2809 = vmatpush2.bf16.msra.mxu0 %v2520
  %2810 = vmatprep.subr.bf16.mxu0 %v2519
  %2811 = vmatpush2.bf16.msra.mxu0 %v2518
  %2812 = vmatprep.mubr.bf16.mxu0 %v1923
  %2813 = vmatmul.mubr.bf16.gmra.mxu0 %v1922
  %v2814 = vpop.f32.mrf.mxu0
  %v2815 = vadd.f32 %v2772, %v2814
  %v2816 = vpop.f32.mrf.mxu0
  %v2817 = vadd.f32 %v2774, %v2816
  %v2818 = vpop.f32.mrf.mxu0
  %v2819 = vadd.f32 %v2776, %v2818
  %v2820 = vpop.f32.mrf.mxu0
  %v2821 = vadd.f32 %v2778, %v2820
  %2822 = vdwg.mxu0
  %2823 = vmatprep.subr.bf16.mxu0 %v2549
  %2824 = vmatpush1.bf16.msra.mxu0 %v2548
  %2825 = vmatprep.subr.bf16.mxu0 %v2547
  %2826 = vmatpush1.bf16.msra.mxu0 %v2546
  %2827 = vmatprep.subr.bf16.mxu0 %v2545
  %2828 = vmatpush1.bf16.msra.mxu0 %v2544
  %2829 = vmatprep.subr.bf16.mxu0 %v2543
  %2830 = vmatpush1.bf16.msra.mxu0 %v2542
  %2831 = vmatprep.subr.bf16.mxu0 %v2541
  %2832 = vmatpush1.bf16.msra.mxu0 %v2540
  %2833 = vmatprep.subr.bf16.mxu0 %v2539
  %2834 = vmatpush1.bf16.msra.mxu0 %v2538
  %2835 = vmatprep.subr.bf16.mxu0 %v2537
  %2836 = vmatpush1.bf16.msra.mxu0 %v2536
  %2837 = vmatprep.subr.bf16.mxu0 %v2535
  %2838 = vmatpush1.bf16.msra.mxu0 %v2534
  %2839 = vmatprep.subr.bf16.mxu0 %v2565
  %2840 = vmatpush2.bf16.msra.mxu0 %v2564
  %2841 = vmatprep.subr.bf16.mxu0 %v2563
  %2842 = vmatpush2.bf16.msra.mxu0 %v2562
  %2843 = vmatprep.subr.bf16.mxu0 %v2561
  %2844 = vmatpush2.bf16.msra.mxu0 %v2560
  %2845 = vmatprep.subr.bf16.mxu0 %v2559
  %2846 = vmatpush2.bf16.msra.mxu0 %v2558
  %2847 = vmatprep.subr.bf16.mxu0 %v2557
  %2848 = vmatpush2.bf16.msra.mxu0 %v2556
  %2849 = vmatprep.subr.bf16.mxu0 %v2555
  %2850 = vmatpush2.bf16.msra.mxu0 %v2554
  %2851 = vmatprep.subr.bf16.mxu0 %v2553
  %2852 = vmatpush2.bf16.msra.mxu0 %v2552
  %2853 = vmatprep.subr.bf16.mxu0 %v2551
  %2854 = vmatpush2.bf16.msra.mxu0 %v2550
  %2855 = vmatprep.mubr.bf16.mxu0 %v1925
  %2856 = vmatmul.mubr.bf16.gmra.mxu0 %v1924
  %v2857 = vpop.f32.mrf.mxu0
  %v2858 = vadd.f32 %v2815, %v2857
  %v2859 = vpop.f32.mrf.mxu0
  %v2860 = vadd.f32 %v2817, %v2859
  %v2861 = vpop.f32.mrf.mxu0
  %v2862 = vadd.f32 %v2819, %v2861
  %v2863 = vpop.f32.mrf.mxu0
  %v2864 = vadd.f32 %v2821, %v2863
  %2865 = vdwg.mxu0
  %2866 = vst [vmem:[#allocation2] sm:$0xff] %v2858
  %2867 = vst [vmem:[#allocation2 + $0x8] sm:$0xff] %v2860
  %2868 = vst [vmem:[#allocation2 + $0x40] sm:$0xff] %v2862
  %2869 = vst [vmem:[#allocation2 + $0x48] sm:$0xff] %v2864
  %2874 = vrot.lane.b32.xlu0 %v2858, 127
  %v2875 = vpop.permute.xlu0 %2874
  %2876 = vrot.lane.b32.xlu0 %v2860, 127
  %v2877 = vpop.permute.xlu0 %2876
  %2878 = vrot.lane.b32.xlu0 %v2862, 127
  %v2879 = vpop.permute.xlu0 %2878
  %2880 = vrot.lane.b32.xlu0 %v2864, 127
  %v2881 = vpop.permute.xlu0 %2880
  %v2882 = vsel %vm88, %v2875, %v2877
  %v2883 = vsel %vm88, %v2879, %v2881
  %v2890 = vsel %vm88, %v2877, %v2875
  %v2891 = vsel %vm88, %v2881, %v2879
  %2892 = vst [vmem:[#allocation2 + $0x80] sm:$0xff] %v2882
  %2893 = vst [vmem:[#allocation2 + $0x88] sm:$0xff] %v2890
  %2894 = vst [vmem:[#allocation2 + $0xc0] sm:$0xff] %v2883
  %2895 = vst [vmem:[#allocation2 + $0xc8] sm:$0xff] %v2891
  %2896 = vrot.lane.b32.xlu0 %v2858, 126
  %v2897 = vpop.permute.xlu0 %2896
  %2898 = vrot.lane.b32.xlu0 %v2860, 126
  %v2899 = vpop.permute.xlu0 %2898
  %2900 = vrot.lane.b32.xlu0 %v2862, 126
  %v2901 = vpop.permute.xlu0 %2900
  %2902 = vrot.lane.b32.xlu0 %v2864, 126
  %v2903 = vpop.permute.xlu0 %2902
  %v2904 = vsel %vm130, %v2897, %v2899
  %v2905 = vsel %vm130, %v2901, %v2903
  %v2912 = vsel %vm130, %v2899, %v2897
  %v2913 = vsel %vm130, %v2903, %v2901
  %2914 = vst [vmem:[#allocation2 + $0x100] sm:$0xff] %v2904
  %2915 = vst [vmem:[#allocation2 + $0x108] sm:$0xff] %v2912
  %2916 = vst [vmem:[#allocation2 + $0x140] sm:$0xff] %v2905
  %2917 = vst [vmem:[#allocation2 + $0x148] sm:$0xff] %v2913
  %2918 = vrot.lane.b32.xlu0 %v2858, 125
  %v2919 = vpop.permute.xlu0 %2918
  %2920 = vrot.lane.b32.xlu0 %v2860, 125
  %v2921 = vpop.permute.xlu0 %2920
  %2922 = vrot.lane.b32.xlu0 %v2862, 125
  %v2923 = vpop.permute.xlu0 %2922
  %2924 = vrot.lane.b32.xlu0 %v2864, 125
  %v2925 = vpop.permute.xlu0 %2924
  %v2926 = vsel %vm172, %v2919, %v2921
  %v2927 = vsel %vm172, %v2923, %v2925
  %v2934 = vsel %vm172, %v2921, %v2919
  %v2935 = vsel %vm172, %v2925, %v2923
  %2936 = vst [vmem:[#allocation2 + $0x180] sm:$0xff] %v2926
  %2937 = vst [vmem:[#allocation2 + $0x188] sm:$0xff] %v2934
  %2938 = vst [vmem:[#allocation2 + $0x1c0] sm:$0xff] %v2927
  %2939 = vst [vmem:[#allocation2 + $0x1c8] sm:$0xff] %v2935
  %2940 = vrot.lane.b32.xlu0 %v2858, 124
  %v2941 = vpop.permute.xlu0 %2940
  %2942 = vrot.lane.b32.xlu0 %v2860, 124
  %v2943 = vpop.permute.xlu0 %2942
  %2944 = vrot.lane.b32.xlu0 %v2862, 124
  %v2945 = vpop.permute.xlu0 %2944
  %2946 = vrot.lane.b32.xlu0 %v2864, 124
  %v2947 = vpop.permute.xlu0 %2946
  %v2948 = vsel %vm214, %v2941, %v2943
  %v2949 = vsel %vm214, %v2945, %v2947
  %v2956 = vsel %vm214, %v2943, %v2941
  %v2957 = vsel %vm214, %v2947, %v2945
  %2958 = vst [vmem:[#allocation2 + $0x200] sm:$0xff] %v2948
  %2959 = vst [vmem:[#allocation2 + $0x208] sm:$0xff] %v2956
  %2960 = vst [vmem:[#allocation2 + $0x240] sm:$0xff] %v2949
  %2961 = vst [vmem:[#allocation2 + $0x248] sm:$0xff] %v2957
  %2962 = vrot.lane.b32.xlu0 %v2858, 123
  %v2963 = vpop.permute.xlu0 %2962
  %2964 = vrot.lane.b32.xlu0 %v2860, 123
  %v2965 = vpop.permute.xlu0 %2964
  %2966 = vrot.lane.b32.xlu0 %v2862, 123
  %v2967 = vpop.permute.xlu0 %2966
  %2968 = vrot.lane.b32.xlu0 %v2864, 123
  %v2969 = vpop.permute.xlu0 %2968
  %v2970 = vsel %vm256, %v2963, %v2965
  %v2971 = vsel %vm256, %v2967, %v2969
  %v2978 = vsel %vm256, %v2965, %v2963
  %v2979 = vsel %vm256, %v2969, %v2967
  %2980 = vst [vmem:[#allocation2 + $0x280] sm:$0xff] %v2970
  %2981 = vst [vmem:[#allocation2 + $0x288] sm:$0xff] %v2978
  %2982 = vst [vmem:[#allocation2 + $0x2c0] sm:$0xff] %v2971
  %2983 = vst [vmem:[#allocation2 + $0x2c8] sm:$0xff] %v2979
  %2984 = vrot.lane.b32.xlu0 %v2858, 122
  %v2985 = vpop.permute.xlu0 %2984
  %2986 = vrot.lane.b32.xlu0 %v2860, 122
  %v2987 = vpop.permute.xlu0 %2986
  %2988 = vrot.lane.b32.xlu0 %v2862, 122
  %v2989 = vpop.permute.xlu0 %2988
  %2990 = vrot.lane.b32.xlu0 %v2864, 122
  %v2991 = vpop.permute.xlu0 %2990
  %v2992 = vsel %vm298, %v2985, %v2987
  %v2993 = vsel %vm298, %v2989, %v2991
  %v3000 = vsel %vm298, %v2987, %v2985
  %v3001 = vsel %vm298, %v2991, %v2989
  %3002 = vst [vmem:[#allocation2 + $0x300] sm:$0xff] %v2992
  %3003 = vst [vmem:[#allocation2 + $0x308] sm:$0xff] %v3000
  %3004 = vst [vmem:[#allocation2 + $0x340] sm:$0xff] %v2993
  %3005 = vst [vmem:[#allocation2 + $0x348] sm:$0xff] %v3001
  %3006 = vrot.lane.b32.xlu0 %v2858, 121
  %v3007 = vpop.permute.xlu0 %3006
  %3008 = vrot.lane.b32.xlu0 %v2860, 121
  %v3009 = vpop.permute.xlu0 %3008
  %3010 = vrot.lane.b32.xlu0 %v2862, 121
  %v3011 = vpop.permute.xlu0 %3010
  %3012 = vrot.lane.b32.xlu0 %v2864, 121
  %v3013 = vpop.permute.xlu0 %3012
  %v3014 = vsel %vm340, %v3007, %v3009
  %v3015 = vsel %vm340, %v3011, %v3013
  %v3022 = vsel %vm340, %v3009, %v3007
  %v3023 = vsel %vm340, %v3013, %v3011
  %3024 = vst [vmem:[#allocation2 + $0x380] sm:$0xff] %v3014
  %3025 = vst [vmem:[#allocation2 + $0x388] sm:$0xff] %v3022
  %3026 = vst [vmem:[#allocation2 + $0x3c0] sm:$0xff] %v3015
  %3027 = vst [vmem:[#allocation2 + $0x3c8] sm:$0xff] %v3023
  %3028 = vrot.lane.b32.xlu0 %v2858, 120
  %v3029 = vpop.permute.xlu0 %3028
  %3030 = vrot.lane.b32.xlu0 %v2860, 120
  %v3031 = vpop.permute.xlu0 %3030
  %3032 = vrot.lane.b32.xlu0 %v2862, 120
  %v3033 = vpop.permute.xlu0 %3032
  %3034 = vrot.lane.b32.xlu0 %v2864, 120
  %v3035 = vpop.permute.xlu0 %3034
  %v3036 = vsel %vm382, %v3029, %v3031
  %v3037 = vsel %vm382, %v3033, %v3035
  %v3044 = vsel %vm382, %v3031, %v3029
  %v3045 = vsel %vm382, %v3035, %v3033
  %3046 = vst [vmem:[#allocation2 + $0x400] sm:$0xff] %v3036
  %3047 = vst [vmem:[#allocation2 + $0x408] sm:$0xff] %v3044
  %3048 = vst [vmem:[#allocation2 + $0x440] sm:$0xff] %v3037
  %3049 = vst [vmem:[#allocation2 + $0x448] sm:$0xff] %v3045
  %3050 = vrot.lane.b32.xlu0 %v2858, 119
  %v3051 = vpop.permute.xlu0 %3050
  %3052 = vrot.lane.b32.xlu0 %v2860, 119
  %v3053 = vpop.permute.xlu0 %3052
  %3054 = vrot.lane.b32.xlu0 %v2862, 119
  %v3055 = vpop.permute.xlu0 %3054
  %3056 = vrot.lane.b32.xlu0 %v2864, 119
  %v3057 = vpop.permute.xlu0 %3056
  %v3058 = vsel %vm424, %v3051, %v3053
  %v3059 = vsel %vm424, %v3055, %v3057
  %v3066 = vsel %vm424, %v3053, %v3051
  %v3067 = vsel %vm424, %v3057, %v3055
  %3068 = vst [vmem:[#allocation2 + $0x480] sm:$0xff] %v3058
  %3069 = vst [vmem:[#allocation2 + $0x488] sm:$0xff] %v3066
  %3070 = vst [vmem:[#allocation2 + $0x4c0] sm:$0xff] %v3059
  %3071 = vst [vmem:[#allocation2 + $0x4c8] sm:$0xff] %v3067
  %v3072 = vld [vmem:[#allocation2] sm:$0xff]
  %v3073 = vld [vmem:[#allocation2 + $0x8] sm:$0xff]
  %v3074 = vld [vmem:[#allocation2 + $0x40] sm:$0xff]
  %v3075 = vld [vmem:[#allocation2 + $0x48] sm:$0xff]
  %v3076 = vld [vmem:[#allocation2 + $0x80] sm:$0xff]
  %v3077 = vld [vmem:[#allocation2 + $0x88] sm:$0xff]
  %v3078 = vld [vmem:[#allocation2 + $0xc0] sm:$0xff]
  %v3079 = vld [vmem:[#allocation2 + $0xc8] sm:$0xff]
  %v3080 = vld [vmem:[#allocation2 + $0x100] sm:$0xff]
  %v3081 = vld [vmem:[#allocation2 + $0x108] sm:$0xff]
  %v3082 = vld [vmem:[#allocation2 + $0x140] sm:$0xff]
  %v3083 = vld [vmem:[#allocation2 + $0x148] sm:$0xff]
  %v3084 = vld [vmem:[#allocation2 + $0x180] sm:$0xff]
  %v3085 = vld [vmem:[#allocation2 + $0x188] sm:$0xff]
  %v3086 = vld [vmem:[#allocation2 + $0x1c0] sm:$0xff]
  %v3087 = vld [vmem:[#allocation2 + $0x1c8] sm:$0xff]
  %v3088 = vld [vmem:[#allocation2 + $0x200] sm:$0xff]
  %v3089 = vld [vmem:[#allocation2 + $0x208] sm:$0xff]
  %v3090 = vld [vmem:[#allocation2 + $0x240] sm:$0xff]
  %v3091 = vld [vmem:[#allocation2 + $0x248] sm:$0xff]
  %v3092 = vld [vmem:[#allocation2 + $0x280] sm:$0xff]
  %v3093 = vld [vmem:[#allocation2 + $0x288] sm:$0xff]
  %v3094 = vld [vmem:[#allocation2 + $0x2c0] sm:$0xff]
  %v3095 = vld [vmem:[#allocation2 + $0x2c8] sm:$0xff]
  %v3096 = vld [vmem:[#allocation2 + $0x300] sm:$0xff]
  %v3097 = vld [vmem:[#allocation2 + $0x308] sm:$0xff]
  %v3098 = vld [vmem:[#allocation2 + $0x340] sm:$0xff]
  %v3099 = vld [vmem:[#allocation2 + $0x348] sm:$0xff]
  %v3100 = vld [vmem:[#allocation2 + $0x380] sm:$0xff]
  %v3101 = vld [vmem:[#allocation2 + $0x388] sm:$0xff]
  %v3102 = vld [vmem:[#allocation2 + $0x3c0] sm:$0xff]
  %v3103 = vld [vmem:[#allocation2 + $0x3c8] sm:$0xff]
  %v3104 = vld [vmem:[#allocation2 + $0x400] sm:$0xff]
  %v3105 = vld [vmem:[#allocation2 + $0x408] sm:$0xff]
  %v3106 = vld [vmem:[#allocation2 + $0x440] sm:$0xff]
  %v3107 = vld [vmem:[#allocation2 + $0x448] sm:$0xff]
  %v3108 = vld [vmem:[#allocation2 + $0x480] sm:$0xff]
  %v3109 = vld [vmem:[#allocation2 + $0x488] sm:$0xff]
  %v3110 = vld [vmem:[#allocation2 + $0x4c0] sm:$0xff]
  %v3111 = vld [vmem:[#allocation2 + $0x4c8] sm:$0xff]
  %v3112 = vld [vmem:[%s6] sm:$0xff]
  %v3113 = vld [vmem:[%s6 + $0x8] sm:$0xff]
  %v3114 = vld [vmem:[%s6 + $0x10] sm:$0xff]
  %v3115 = vld [vmem:[%s6 + $0x18] sm:$0xff]
  %v3116 = vld [vmem:[%s6 + $0x20] sm:$0xff]
  %v3117 = vld [vmem:[%s6 + $0x28] sm:$0xff]
  %v3118 = vld [vmem:[%s6 + $0x30] sm:$0xff]
  %v3119 = vld [vmem:[%s6 + $0x38] sm:$0xff]
  %v3120 = vld [vmem:[%s7] sm:$0xff]
  %v3121 = vld [vmem:[%s7 + $0x8] sm:$0xff]
  %v3122 = vld [vmem:[%s7 + $0x10] sm:$0xff]
  %v3123 = vld [vmem:[%s7 + $0x18] sm:$0xff]
  %3125 = vset.pattern.permute.xlu0 0
  %3126 = vperm.xlu0 %3125, %v3120
  %v3127 = vpop.permute.xlu0 %3126
  %3130 = vset.pattern.permute.xlu0 0
  %3131 = vperm.xlu0 %3130, %v3121
  %v3132 = vpop.permute.xlu0 %3131
  %3135 = vset.pattern.permute.xlu0 0
  %3136 = vperm.xlu0 %3135, %v3122
  %v3137 = vpop.permute.xlu0 %3136
  %3140 = vset.pattern.permute.xlu0 0
  %3141 = vperm.xlu0 %3140, %v3123
  %v3142 = vpop.permute.xlu0 %3141
  %vm3144 = vcmask 261120
  %v3146 = vsel %vm3144, %v3113, 0
  %v3149 = vsel %vm3144, %v3115, 0
  %v3152 = vsel %vm3144, %v3117, 0
  %v3155 = vsel %vm3144, %v3119, 0
  %3157 = vmatprep.subr.mxu0 %v3103
  %3158 = vmatpush1.msra.mxu0 %v3102
  %3159 = vmatprep.subr.mxu0 %v3101
  %3160 = vmatpush1.msra.mxu0 %v3100
  %3161 = vmatprep.subr.mxu0 %v3099
  %3162 = vmatpush1.msra.mxu0 %v3098
  %3163 = vmatprep.subr.mxu0 %v3097
  %3164 = vmatpush1.msra.mxu0 %v3096
  %3165 = vmatprep.subr.mxu0 %v3095
  %3166 = vmatpush1.msra.mxu0 %v3094
  %3167 = vmatprep.subr.mxu0 %v3093
  %3168 = vmatpush1.msra.mxu0 %v3092
  %3169 = vmatprep.subr.mxu0 %v3091
  %3170 = vmatpush1.msra.mxu0 %v3090
  %3171 = vmatprep.subr.mxu0 %v3089
  %3172 = vmatpush1.msra.mxu0 %v3088
  %3173 = vmatprep.subr.mxu0 %v3087
  %3174 = vmatpush1.msra.mxu0 %v3086
  %3175 = vmatprep.subr.mxu0 %v3085
  %3176 = vmatpush1.msra.mxu0 %v3084
  %3177 = vmatprep.subr.mxu0 %v3083
  %3178 = vmatpush1.msra.mxu0 %v3082
  %3179 = vmatprep.subr.mxu0 %v3081
  %3180 = vmatpush1.msra.mxu0 %v3080
  %3181 = vmatprep.subr.mxu0 %v3079
  %3182 = vmatpush1.msra.mxu0 %v3078
  %3183 = vmatprep.subr.mxu0 %v3077
  %3184 = vmatpush1.msra.mxu0 %v3076
  %3185 = vmatprep.subr.mxu0 %v3075
  %3186 = vmatpush1.msra.mxu0 %v3074
  %3187 = vmatprep.subr.mxu0 %v3073
  %3188 = vmatpush1.msra.mxu0 %v3072
  %3189 = vmatprep.subr.mxu0 0.0
  %3190 = vmatpush2.msra.mxu0 0.0
  %3191 = vmatprep.subr.mxu0 0.0
  %3192 = vmatpush2.msra.mxu0 0.0
  %3193 = vmatprep.subr.mxu0 0.0
  %3194 = vmatpush2.msra.mxu0 0.0
  %3195 = vmatprep.subr.mxu0 0.0
  %3196 = vmatpush2.msra.mxu0 0.0
  %3197 = vmatprep.subr.mxu0 0.0
  %3198 = vmatpush2.msra.mxu0 0.0
  %3199 = vmatprep.subr.mxu0 0.0
  %3200 = vmatpush2.msra.mxu0 0.0
  %3201 = vmatprep.subr.mxu0 0.0
  %3202 = vmatpush2.msra.mxu0 0.0
  %3203 = vmatprep.subr.mxu0 0.0
  %3204 = vmatpush2.msra.mxu0 0.0
  %3205 = vmatprep.subr.mxu0 0.0
  %3206 = vmatpush2.msra.mxu0 0.0
  %3207 = vmatprep.subr.mxu0 0.0
  %3208 = vmatpush2.msra.mxu0 0.0
  %3209 = vmatprep.subr.mxu0 0.0
  %3210 = vmatpush2.msra.mxu0 0.0
  %3211 = vmatprep.subr.mxu0 0.0
  %3212 = vmatpush2.msra.mxu0 0.0
  %3213 = vmatprep.subr.mxu0 %v3111
  %3214 = vmatpush2.msra.mxu0 %v3110
  %3215 = vmatprep.subr.mxu0 %v3109
  %3216 = vmatpush2.msra.mxu0 %v3108
  %3217 = vmatprep.subr.mxu0 %v3107
  %3218 = vmatpush2.msra.mxu0 %v3106
  %3219 = vmatprep.subr.mxu0 %v3105
  %3220 = vmatpush2.msra.mxu0 %v3104
  %3221 = vmatprep.mubr.f32.mxu0 %v3146
  %3222 = vmatmul.mubr.f32.gmra.mxu0 %v3112
  %v3223 = vpop.f32.mrf.mxu0
  %v3224 = vadd.f32 %v3127, %v3223
  %v3225 = vpop.f32.mrf.mxu0
  %v3226 = vadd.f32 %v3127, %v3225
  %3227 = vmatprep.mubr.f32.mxu0 %v3149
  %3228 = vmatmul.mubr.f32.gmra.mxu0 %v3114
  %v3229 = vpop.f32.mrf.mxu0
  %v3230 = vadd.f32 %v3132, %v3229
  %v3231 = vpop.f32.mrf.mxu0
  %v3232 = vadd.f32 %v3132, %v3231
  %3233 = vmatprep.mubr.f32.mxu0 %v3152
  %3234 = vmatmul.mubr.f32.gmra.mxu0 %v3116
  %v3235 = vpop.f32.mrf.mxu0
  %v3236 = vadd.f32 %v3137, %v3235
  %v3237 = vpop.f32.mrf.mxu0
  %v3238 = vadd.f32 %v3137, %v3237
  %3239 = vmatprep.mubr.f32.mxu0 %v3155
  %3240 = vmatmul.mubr.f32.gmra.mxu0 %v3118
  %v3241 = vpop.f32.mrf.mxu0
  %v3242 = vadd.f32 %v3142, %v3241
  %v3243 = vpop.f32.mrf.mxu0
  %v3244 = vadd.f32 %v3142, %v3243
  %3245 = vdwg.mxu0
  %vm3246 = vcmp.gt.f32.partialorder %v3224, 0.0
  %vm3247 = vcmp.gt.f32.partialorder %v3226, 0.0
  %vm3248 = vcmp.gt.f32.partialorder %v3230, 0.0
  %vm3249 = vcmp.gt.f32.partialorder %v3232, 0.0
  %vm3250 = vcmp.gt.f32.partialorder %v3236, 0.0
  %vm3251 = vcmp.gt.f32.partialorder %v3238, 0.0
  %vm3252 = vcmp.gt.f32.partialorder %v3242, 0.0
  %vm3253 = vcmp.gt.f32.partialorder %v3244, 0.0
  %v3254 = vmul.f32 %v3224, 1.442695
  %v3255 = vpow.pop %v3254
  %v3256 = vmul.f32 %v3226, 1.442695
  %v3257 = vpow.pop %v3256
  %v3258 = vmul.f32 %v3230, 1.442695
  %v3259 = vpow.pop %v3258
  %v3260 = vmul.f32 %v3232, 1.442695
  %v3261 = vpow.pop %v3260
  %v3262 = vmul.f32 %v3236, 1.442695
  %v3263 = vpow.pop %v3262
  %v3264 = vmul.f32 %v3238, 1.442695
  %v3265 = vpow.pop %v3264
  %v3266 = vmul.f32 %v3242, 1.442695
  %v3267 = vpow.pop %v3266
  %v3268 = vmul.f32 %v3244, 1.442695
  %v3269 = vpow.pop %v3268
  %v3270 = vsub.f32 %v3255, 1.0
  %v3271 = vsub.f32 %v3257, 1.0
  %v3272 = vsub.f32 %v3259, 1.0
  %v3273 = vsub.f32 %v3261, 1.0
  %v3274 = vsub.f32 %v3263, 1.0
  %v3275 = vsub.f32 %v3265, 1.0
  %v3276 = vsub.f32 %v3267, 1.0
  %v3277 = vsub.f32 %v3269, 1.0
  %v3278 = vsel %vm3246, %v3224, %v3270
  %v3279 = vsel %vm3247, %v3226, %v3271
  %v3280 = vsel %vm3248, %v3230, %v3272
  %v3281 = vsel %vm3249, %v3232, %v3273
  %v3282 = vsel %vm3250, %v3236, %v3274
  %v3283 = vsel %vm3251, %v3238, %v3275
  %v3284 = vsel %vm3252, %v3242, %v3276
  %v3285 = vsel %vm3253, %v3244, %v3277
  %3294 = vrot.lane.b32.xlu0 %v3278, 127
  %v3295 = vpop.permute.xlu0 %3294
  %3296 = vrot.lane.b32.xlu0 %v3279, 127
  %v3297 = vpop.permute.xlu0 %3296
  %3298 = vrot.lane.b32.xlu0 %v3280, 127
  %v3299 = vpop.permute.xlu0 %3298
  %3300 = vrot.lane.b32.xlu0 %v3281, 127
  %v3301 = vpop.permute.xlu0 %3300
  %3302 = vrot.lane.b32.xlu0 %v3282, 127
  %v3303 = vpop.permute.xlu0 %3302
  %3304 = vrot.lane.b32.xlu0 %v3283, 127
  %v3305 = vpop.permute.xlu0 %3304
  %3306 = vrot.lane.b32.xlu0 %v3284, 127
  %v3307 = vpop.permute.xlu0 %3306
  %3308 = vrot.lane.b32.xlu0 %v3285, 127
  %v3309 = vpop.permute.xlu0 %3308
  %v3310 = vsel %vm88, %v3295, %v3297
  %v3311 = vsel %vm88, %v3299, %v3301
  %v3312 = vsel %vm88, %v3303, %v3305
  %v3313 = vsel %vm88, %v3307, %v3309
  %v3326 = vsel %vm88, %v3297, %v3295
  %v3327 = vsel %vm88, %v3301, %v3299
  %v3328 = vsel %vm88, %v3305, %v3303
  %v3329 = vsel %vm88, %v3309, %v3307
  %v3330 = vmax.f32 %v3278, %v3310
  %v3331 = vmax.f32 %v3279, %v3326
  %v3332 = vmax.f32 %v3280, %v3311
  %v3333 = vmax.f32 %v3281, %v3327
  %v3334 = vmax.f32 %v3282, %v3312
  %v3335 = vmax.f32 %v3283, %v3328
  %v3336 = vmax.f32 %v3284, %v3313
  %v3337 = vmax.f32 %v3285, %v3329
  %3338 = vrot.lane.b32.xlu0 %v3278, 126
  %v3339 = vpop.permute.xlu0 %3338
  %3340 = vrot.lane.b32.xlu0 %v3279, 126
  %v3341 = vpop.permute.xlu0 %3340
  %3342 = vrot.lane.b32.xlu0 %v3280, 126
  %v3343 = vpop.permute.xlu0 %3342
  %3344 = vrot.lane.b32.xlu0 %v3281, 126
  %v3345 = vpop.permute.xlu0 %3344
  %3346 = vrot.lane.b32.xlu0 %v3282, 126
  %v3347 = vpop.permute.xlu0 %3346
  %3348 = vrot.lane.b32.xlu0 %v3283, 126
  %v3349 = vpop.permute.xlu0 %3348
  %3350 = vrot.lane.b32.xlu0 %v3284, 126
  %v3351 = vpop.permute.xlu0 %3350
  %3352 = vrot.lane.b32.xlu0 %v3285, 126
  %v3353 = vpop.permute.xlu0 %3352
  %v3354 = vsel %vm130, %v3339, %v3341
  %v3355 = vsel %vm130, %v3343, %v3345
  %v3356 = vsel %vm130, %v3347, %v3349
  %v3357 = vsel %vm130, %v3351, %v3353
  %v3370 = vsel %vm130, %v3341, %v3339
  %v3371 = vsel %vm130, %v3345, %v3343
  %v3372 = vsel %vm130, %v3349, %v3347
  %v3373 = vsel %vm130, %v3353, %v3351
  %v3374 = vmax.f32 %v3330, %v3354
  %v3375 = vmax.f32 %v3331, %v3370
  %v3376 = vmax.f32 %v3332, %v3355
  %v3377 = vmax.f32 %v3333, %v3371
  %v3378 = vmax.f32 %v3334, %v3356
  %v3379 = vmax.f32 %v3335, %v3372
  %v3380 = vmax.f32 %v3336, %v3357
  %v3381 = vmax.f32 %v3337, %v3373
  %v3382 = vpack.c.bf16 %v3376, %v3374
  %v3383 = vpack.c.bf16 %v3377, %v3375
  %v3384 = vpack.c.bf16 %v3380, %v3378
  %v3385 = vpack.c.bf16 %v3381, %v3379
  %v3386 = vld [vmem:[%s8] sm:$0xff]
  %v3387 = vld [vmem:[%s8 + $0x8] sm:$0xff]
  %v3388 = vld [vmem:[%s8 + $0x10] sm:$0xff]
  %v3389 = vld [vmem:[%s8 + $0x18] sm:$0xff]
  %v3390 = vld [vmem:[%s8 + $0x20] sm:$0xff]
  %v3391 = vld [vmem:[%s8 + $0x28] sm:$0xff]
  %v3392 = vld [vmem:[%s8 + $0x30] sm:$0xff]
  %v3393 = vld [vmem:[%s8 + $0x38] sm:$0xff]
  %v3394 = vld [vmem:[%s8 + $0x40] sm:$0xff]
  %v3395 = vld [vmem:[%s8 + $0x48] sm:$0xff]
  %v3396 = vld [vmem:[%s8 + $0x50] sm:$0xff]
  %v3397 = vld [vmem:[%s8 + $0x58] sm:$0xff]
  %v3398 = vld [vmem:[%s8 + $0x60] sm:$0xff]
  %v3399 = vld [vmem:[%s8 + $0x68] sm:$0xff]
  %v3400 = vld [vmem:[%s8 + $0x70] sm:$0xff]
  %v3401 = vld [vmem:[%s8 + $0x78] sm:$0xff]
  %v3402 = vld [vmem:[%s8 + $0x80] sm:$0xff]
  %v3403 = vld [vmem:[%s8 + $0x88] sm:$0xff]
  %v3404 = vld [vmem:[%s8 + $0x90] sm:$0xff]
  %v3405 = vld [vmem:[%s8 + $0x98] sm:$0xff]
  %v3406 = vld [vmem:[%s8 + $0xa0] sm:$0xff]
  %v3407 = vld [vmem:[%s8 + $0xa8] sm:$0xff]
  %v3408 = vld [vmem:[%s8 + $0xb0] sm:$0xff]
  %v3409 = vld [vmem:[%s8 + $0xb8] sm:$0xff]
  %v3410 = vld [vmem:[%s8 + $0xc0] sm:$0xff]
  %v3411 = vld [vmem:[%s8 + $0xc8] sm:$0xff]
  %v3412 = vld [vmem:[%s8 + $0xd0] sm:$0xff]
  %v3413 = vld [vmem:[%s8 + $0xd8] sm:$0xff]
  %v3414 = vld [vmem:[%s8 + $0xe0] sm:$0xff]
  %v3415 = vld [vmem:[%s8 + $0xe8] sm:$0xff]
  %v3416 = vld [vmem:[%s8 + $0xf0] sm:$0xff]
  %v3417 = vld [vmem:[%s8 + $0xf8] sm:$0xff]
  %v3450 = vunpack.c.l.b16 %v3386
  %v3451 = vunpack.c.h.b16 %v3386
  %v3452 = vunpack.c.l.b16 %v3387
  %v3453 = vunpack.c.h.b16 %v3387
  %v3454 = vunpack.c.l.b16 %v3388
  %v3455 = vunpack.c.h.b16 %v3388
  %v3456 = vunpack.c.l.b16 %v3389
  %v3457 = vunpack.c.h.b16 %v3389
  %v3458 = vunpack.c.l.b16 %v3390
  %v3459 = vunpack.c.h.b16 %v3390
  %v3460 = vunpack.c.l.b16 %v3391
  %v3461 = vunpack.c.h.b16 %v3391
  %v3462 = vunpack.c.l.b16 %v3392
  %v3463 = vunpack.c.h.b16 %v3392
  %v3464 = vunpack.c.l.b16 %v3393
  %v3465 = vunpack.c.h.b16 %v3393
  %v3466 = vunpack.c.l.b16 %v3394
  %v3467 = vunpack.c.h.b16 %v3394
  %v3468 = vunpack.c.l.b16 %v3395
  %v3469 = vunpack.c.h.b16 %v3395
  %v3470 = vunpack.c.l.b16 %v3396
  %v3471 = vunpack.c.h.b16 %v3396
  %v3472 = vunpack.c.l.b16 %v3397
  %v3473 = vunpack.c.h.b16 %v3397
  %v3474 = vunpack.c.l.b16 %v3398
  %v3475 = vunpack.c.h.b16 %v3398
  %v3476 = vunpack.c.l.b16 %v3399
  %v3477 = vunpack.c.h.b16 %v3399
  %v3478 = vunpack.c.l.b16 %v3400
  %v3479 = vunpack.c.h.b16 %v3400
  %v3480 = vunpack.c.l.b16 %v3401
  %v3481 = vunpack.c.h.b16 %v3401
  %v3482 = vunpack.c.l.b16 %v3402
  %v3483 = vunpack.c.h.b16 %v3402
  %v3484 = vunpack.c.l.b16 %v3403
  %v3485 = vunpack.c.h.b16 %v3403
  %v3486 = vunpack.c.l.b16 %v3404
  %v3487 = vunpack.c.h.b16 %v3404
  %v3488 = vunpack.c.l.b16 %v3405
  %v3489 = vunpack.c.h.b16 %v3405
  %v3490 = vunpack.c.l.b16 %v3406
  %v3491 = vunpack.c.h.b16 %v3406
  %v3492 = vunpack.c.l.b16 %v3407
  %v3493 = vunpack.c.h.b16 %v3407
  %v3494 = vunpack.c.l.b16 %v3408
  %v3495 = vunpack.c.h.b16 %v3408
  %v3496 = vunpack.c.l.b16 %v3409
  %v3497 = vunpack.c.h.b16 %v3409
  %v3498 = vunpack.c.l.b16 %v3410
  %v3499 = vunpack.c.h.b16 %v3410
  %v3500 = vunpack.c.l.b16 %v3411
  %v3501 = vunpack.c.h.b16 %v3411
  %v3502 = vunpack.c.l.b16 %v3412
  %v3503 = vunpack.c.h.b16 %v3412
  %v3504 = vunpack.c.l.b16 %v3413
  %v3505 = vunpack.c.h.b16 %v3413
  %v3506 = vunpack.c.l.b16 %v3414
  %v3507 = vunpack.c.h.b16 %v3414
  %v3508 = vunpack.c.l.b16 %v3415
  %v3509 = vunpack.c.h.b16 %v3415
  %v3510 = vunpack.c.l.b16 %v3416
  %v3511 = vunpack.c.h.b16 %v3416
  %v3512 = vunpack.c.l.b16 %v3417
  %v3513 = vunpack.c.h.b16 %v3417
  %v3514 = vpack.c.b16 %v3452, %v3450
  %v3515 = vpack.c.b16 %v3453, %v3451
  %v3516 = vpack.c.b16 %v3456, %v3454
  %v3517 = vpack.c.b16 %v3457, %v3455
  %v3518 = vpack.c.b16 %v3460, %v3458
  %v3519 = vpack.c.b16 %v3461, %v3459
  %v3520 = vpack.c.b16 %v3464, %v3462
  %v3521 = vpack.c.b16 %v3465, %v3463
  %v3522 = vpack.c.b16 %v3468, %v3466
  %v3523 = vpack.c.b16 %v3469, %v3467
  %v3524 = vpack.c.b16 %v3472, %v3470
  %v3525 = vpack.c.b16 %v3473, %v3471
  %v3526 = vpack.c.b16 %v3476, %v3474
  %v3527 = vpack.c.b16 %v3477, %v3475
  %v3528 = vpack.c.b16 %v3480, %v3478
  %v3529 = vpack.c.b16 %v3481, %v3479
  %v3530 = vpack.c.b16 %v3484, %v3482
  %v3531 = vpack.c.b16 %v3485, %v3483
  %v3532 = vpack.c.b16 %v3488, %v3486
  %v3533 = vpack.c.b16 %v3489, %v3487
  %v3534 = vpack.c.b16 %v3492, %v3490
  %v3535 = vpack.c.b16 %v3493, %v3491
  %v3536 = vpack.c.b16 %v3496, %v3494
  %v3537 = vpack.c.b16 %v3497, %v3495
  %v3538 = vpack.c.b16 %v3500, %v3498
  %v3539 = vpack.c.b16 %v3501, %v3499
  %v3540 = vpack.c.b16 %v3504, %v3502
  %v3541 = vpack.c.b16 %v3505, %v3503
  %v3542 = vpack.c.b16 %v3508, %v3506
  %v3543 = vpack.c.b16 %v3509, %v3507
  %v3544 = vpack.c.b16 %v3512, %v3510
  %v3545 = vpack.c.b16 %v3513, %v3511
  %3578 = vmatprep.subr.bf16.mxu0 %v3529
  %3579 = vmatpush1.bf16.msra.mxu0 %v3528
  %3580 = vmatprep.subr.bf16.mxu0 %v3527
  %3581 = vmatpush1.bf16.msra.mxu0 %v3526
  %3582 = vmatprep.subr.bf16.mxu0 %v3525
  %3583 = vmatpush1.bf16.msra.mxu0 %v3524
  %3584 = vmatprep.subr.bf16.mxu0 %v3523
  %3585 = vmatpush1.bf16.msra.mxu0 %v3522
  %3586 = vmatprep.subr.bf16.mxu0 %v3521
  %3587 = vmatpush1.bf16.msra.mxu0 %v3520
  %3588 = vmatprep.subr.bf16.mxu0 %v3519
  %3589 = vmatpush1.bf16.msra.mxu0 %v3518
  %3590 = vmatprep.subr.bf16.mxu0 %v3517
  %3591 = vmatpush1.bf16.msra.mxu0 %v3516
  %3592 = vmatprep.subr.bf16.mxu0 %v3515
  %3593 = vmatpush1.bf16.msra.mxu0 %v3514
  %3594 = vmatprep.subr.bf16.mxu0 %v3545
  %3595 = vmatpush2.bf16.msra.mxu0 %v3544
  %3596 = vmatprep.subr.bf16.mxu0 %v3543
  %3597 = vmatpush2.bf16.msra.mxu0 %v3542
  %3598 = vmatprep.subr.bf16.mxu0 %v3541
  %3599 = vmatpush2.bf16.msra.mxu0 %v3540
  %3600 = vmatprep.subr.bf16.mxu0 %v3539
  %3601 = vmatpush2.bf16.msra.mxu0 %v3538
  %3602 = vmatprep.subr.bf16.mxu0 %v3537
  %3603 = vmatpush2.bf16.msra.mxu0 %v3536
  %3604 = vmatprep.subr.bf16.mxu0 %v3535
  %3605 = vmatpush2.bf16.msra.mxu0 %v3534
  %3606 = vmatprep.subr.bf16.mxu0 %v3533
  %3607 = vmatpush2.bf16.msra.mxu0 %v3532
  %3608 = vmatprep.subr.bf16.mxu0 %v3531
  %3609 = vmatpush2.bf16.msra.mxu0 %v3530
  %3610 = vmatprep.mubr.bf16.mxu0 %v3383
  %3611 = vmatmul.mubr.bf16.gmra.mxu0 %v3382
  %v3612 = vpop.f32.mrf.mxu0
  %v3613 = vadd.f32 0.0, %v3612
  %v3614 = vpop.f32.mrf.mxu0
  %v3615 = vadd.f32 0.0, %v3614
  %v3616 = vpop.f32.mrf.mxu0
  %v3617 = vadd.f32 0.0, %v3616
  %v3618 = vpop.f32.mrf.mxu0
  %v3619 = vadd.f32 0.0, %v3618
  %3620 = vmatprep.mubr.bf16.mxu0 %v3385
  %3621 = vmatmul.mubr.bf16.gmra.mxu0 %v3384
  %v3622 = vpop.f32.mrf.mxu0
  %v3623 = vadd.f32 0.0, %v3622
  %v3624 = vpop.f32.mrf.mxu0
  %v3625 = vadd.f32 0.0, %v3624
  %v3626 = vpop.f32.mrf.mxu0
  %v3627 = vadd.f32 0.0, %v3626
  %v3628 = vpop.f32.mrf.mxu0
  %v3629 = vadd.f32 0.0, %v3628
  %3630 = vdwg.mxu0
  %3631 = vst [vmem:[#allocation2] sm:$0xff] %v3613
  %3632 = vst [vmem:[#allocation2 + $0x8] sm:$0xff] %v3615
  %3633 = vst [vmem:[#allocation2 + $0x40] sm:$0xff] %v3617
  %3634 = vst [vmem:[#allocation2 + $0x48] sm:$0xff] %v3619
  %3635 = vst [vmem:[#allocation2 + $0x80] sm:$0xff] %v3623
  %3636 = vst [vmem:[#allocation2 + $0x88] sm:$0xff] %v3625
  %3637 = vst [vmem:[#allocation2 + $0xc0] sm:$0xff] %v3627
  %3638 = vst [vmem:[#allocation2 + $0xc8] sm:$0xff] %v3629
  %3647 = vrot.lane.b32.xlu0 %v3613, 127
  %v3648 = vpop.permute.xlu0 %3647
  %3649 = vrot.lane.b32.xlu0 %v3615, 127
  %v3650 = vpop.permute.xlu0 %3649
  %3651 = vrot.lane.b32.xlu0 %v3617, 127
  %v3652 = vpop.permute.xlu0 %3651
  %3653 = vrot.lane.b32.xlu0 %v3619, 127
  %v3654 = vpop.permute.xlu0 %3653
  %3655 = vrot.lane.b32.xlu0 %v3623, 127
  %v3656 = vpop.permute.xlu0 %3655
  %3657 = vrot.lane.b32.xlu0 %v3625, 127
  %v3658 = vpop.permute.xlu0 %3657
  %3659 = vrot.lane.b32.xlu0 %v3627, 127
  %v3660 = vpop.permute.xlu0 %3659
  %3661 = vrot.lane.b32.xlu0 %v3629, 127
  %v3662 = vpop.permute.xlu0 %3661
  %v3663 = vsel %vm88, %v3648, %v3650
  %v3664 = vsel %vm88, %v3652, %v3654
  %v3665 = vsel %vm88, %v3656, %v3658
  %v3666 = vsel %vm88, %v3660, %v3662
  %v3679 = vsel %vm88, %v3650, %v3648
  %v3680 = vsel %vm88, %v3654, %v3652
  %v3681 = vsel %vm88, %v3658, %v3656
  %v3682 = vsel %vm88, %v3662, %v3660
  %3683 = vst [vmem:[#allocation2 + $0x100] sm:$0xff] %v3663
  %3684 = vst [vmem:[#allocation2 + $0x108] sm:$0xff] %v3679
  %3685 = vst [vmem:[#allocation2 + $0x140] sm:$0xff] %v3664
  %3686 = vst [vmem:[#allocation2 + $0x148] sm:$0xff] %v3680
  %3687 = vst [vmem:[#allocation2 + $0x180] sm:$0xff] %v3665
  %3688 = vst [vmem:[#allocation2 + $0x188] sm:$0xff] %v3681
  %3689 = vst [vmem:[#allocation2 + $0x1c0] sm:$0xff] %v3666
  %3690 = vst [vmem:[#allocation2 + $0x1c8] sm:$0xff] %v3682
  %3691 = vrot.lane.b32.xlu0 %v3613, 126
  %v3692 = vpop.permute.xlu0 %3691
  %3693 = vrot.lane.b32.xlu0 %v3615, 126
  %v3694 = vpop.permute.xlu0 %3693
  %3695 = vrot.lane.b32.xlu0 %v3617, 126
  %v3696 = vpop.permute.xlu0 %3695
  %3697 = vrot.lane.b32.xlu0 %v3619, 126
  %v3698 = vpop.permute.xlu0 %3697
  %3699 = vrot.lane.b32.xlu0 %v3623, 126
  %v3700 = vpop.permute.xlu0 %3699
  %3701 = vrot.lane.b32.xlu0 %v3625, 126
  %v3702 = vpop.permute.xlu0 %3701
  %3703 = vrot.lane.b32.xlu0 %v3627, 126
  %v3704 = vpop.permute.xlu0 %3703
  %3705 = vrot.lane.b32.xlu0 %v3629, 126
  %v3706 = vpop.permute.xlu0 %3705
  %v3707 = vsel %vm130, %v3692, %v3694
  %v3708 = vsel %vm130, %v3696, %v3698
  %v3709 = vsel %vm130, %v3700, %v3702
  %v3710 = vsel %vm130, %v3704, %v3706
  %v3723 = vsel %vm130, %v3694, %v3692
  %v3724 = vsel %vm130, %v3698, %v3696
  %v3725 = vsel %vm130, %v3702, %v3700
  %v3726 = vsel %vm130, %v3706, %v3704
  %3727 = vst [vmem:[#allocation2 + $0x200] sm:$0xff] %v3707
  %3728 = vst [vmem:[#allocation2 + $0x208] sm:$0xff] %v3723
  %3729 = vst [vmem:[#allocation2 + $0x240] sm:$0xff] %v3708
  %3730 = vst [vmem:[#allocation2 + $0x248] sm:$0xff] %v3724
  %3731 = vst [vmem:[#allocation2 + $0x280] sm:$0xff] %v3709
  %3732 = vst [vmem:[#allocation2 + $0x288] sm:$0xff] %v3725
  %3733 = vst [vmem:[#allocation2 + $0x2c0] sm:$0xff] %v3710
  %3734 = vst [vmem:[#allocation2 + $0x2c8] sm:$0xff] %v3726
  %3735 = vrot.lane.b32.xlu0 %v3613, 125
  %v3736 = vpop.permute.xlu0 %3735
  %3737 = vrot.lane.b32.xlu0 %v3615, 125
  %v3738 = vpop.permute.xlu0 %3737
  %3739 = vrot.lane.b32.xlu0 %v3617, 125
  %v3740 = vpop.permute.xlu0 %3739
  %3741 = vrot.lane.b32.xlu0 %v3619, 125
  %v3742 = vpop.permute.xlu0 %3741
  %3743 = vrot.lane.b32.xlu0 %v3623, 125
  %v3744 = vpop.permute.xlu0 %3743
  %3745 = vrot.lane.b32.xlu0 %v3625, 125
  %v3746 = vpop.permute.xlu0 %3745
  %3747 = vrot.lane.b32.xlu0 %v3627, 125
  %v3748 = vpop.permute.xlu0 %3747
  %3749 = vrot.lane.b32.xlu0 %v3629, 125
  %v3750 = vpop.permute.xlu0 %3749
  %v3751 = vsel %vm172, %v3736, %v3738
  %v3752 = vsel %vm172, %v3740, %v3742
  %v3753 = vsel %vm172, %v3744, %v3746
  %v3754 = vsel %vm172, %v3748, %v3750
  %v3767 = vsel %vm172, %v3738, %v3736
  %v3768 = vsel %vm172, %v3742, %v3740
  %v3769 = vsel %vm172, %v3746, %v3744
  %v3770 = vsel %vm172, %v3750, %v3748
  %3771 = vst [vmem:[#allocation2 + $0x300] sm:$0xff] %v3751
  %3772 = vst [vmem:[#allocation2 + $0x308] sm:$0xff] %v3767
  %3773 = vst [vmem:[#allocation2 + $0x340] sm:$0xff] %v3752
  %3774 = vst [vmem:[#allocation2 + $0x348] sm:$0xff] %v3768
  %3775 = vst [vmem:[#allocation2 + $0x380] sm:$0xff] %v3753
  %3776 = vst [vmem:[#allocation2 + $0x388] sm:$0xff] %v3769
  %3777 = vst [vmem:[#allocation2 + $0x3c0] sm:$0xff] %v3754
  %3778 = vst [vmem:[#allocation2 + $0x3c8] sm:$0xff] %v3770
  %3779 = vrot.lane.b32.xlu0 %v3613, 124
  %v3780 = vpop.permute.xlu0 %3779
  %3781 = vrot.lane.b32.xlu0 %v3615, 124
  %v3782 = vpop.permute.xlu0 %3781
  %3783 = vrot.lane.b32.xlu0 %v3617, 124
  %v3784 = vpop.permute.xlu0 %3783
  %3785 = vrot.lane.b32.xlu0 %v3619, 124
  %v3786 = vpop.permute.xlu0 %3785
  %3787 = vrot.lane.b32.xlu0 %v3623, 124
  %v3788 = vpop.permute.xlu0 %3787
  %3789 = vrot.lane.b32.xlu0 %v3625, 124
  %v3790 = vpop.permute.xlu0 %3789
  %3791 = vrot.lane.b32.xlu0 %v3627, 124
  %v3792 = vpop.permute.xlu0 %3791
  %3793 = vrot.lane.b32.xlu0 %v3629, 124
  %v3794 = vpop.permute.xlu0 %3793
  %v3795 = vsel %vm214, %v3780, %v3782
  %v3796 = vsel %vm214, %v3784, %v3786
  %v3797 = vsel %vm214, %v3788, %v3790
  %v3798 = vsel %vm214, %v3792, %v3794
  %v3811 = vsel %vm214, %v3782, %v3780
  %v3812 = vsel %vm214, %v3786, %v3784
  %v3813 = vsel %vm214, %v3790, %v3788
  %v3814 = vsel %vm214, %v3794, %v3792
  %3815 = vst [vmem:[#allocation2 + $0x400] sm:$0xff] %v3795
  %3816 = vst [vmem:[#allocation2 + $0x408] sm:$0xff] %v3811
  %3817 = vst [vmem:[#allocation2 + $0x440] sm:$0xff] %v3796
  %3818 = vst [vmem:[#allocation2 + $0x448] sm:$0xff] %v3812
  %3819 = vst [vmem:[#allocation2 + $0x480] sm:$0xff] %v3797
  %3820 = vst [vmem:[#allocation2 + $0x488] sm:$0xff] %v3813
  %3821 = vst [vmem:[#allocation2 + $0x4c0] sm:$0xff] %v3798
  %3822 = vst [vmem:[#allocation2 + $0x4c8] sm:$0xff] %v3814
  %3823 = vrot.lane.b32.xlu0 %v3613, 123
  %v3824 = vpop.permute.xlu0 %3823
  %3825 = vrot.lane.b32.xlu0 %v3615, 123
  %v3826 = vpop.permute.xlu0 %3825
  %3827 = vrot.lane.b32.xlu0 %v3617, 123
  %v3828 = vpop.permute.xlu0 %3827
  %3829 = vrot.lane.b32.xlu0 %v3619, 123
  %v3830 = vpop.permute.xlu0 %3829
  %3831 = vrot.lane.b32.xlu0 %v3623, 123
  %v3832 = vpop.permute.xlu0 %3831
  %3833 = vrot.lane.b32.xlu0 %v3625, 123
  %v3834 = vpop.permute.xlu0 %3833
  %3835 = vrot.lane.b32.xlu0 %v3627, 123
  %v3836 = vpop.permute.xlu0 %3835
  %3837 = vrot.lane.b32.xlu0 %v3629, 123
  %v3838 = vpop.permute.xlu0 %3837
  %v3839 = vsel %vm256, %v3824, %v3826
  %v3840 = vsel %vm256, %v3828, %v3830
  %v3841 = vsel %vm256, %v3832, %v3834
  %v3842 = vsel %vm256, %v3836, %v3838
  %v3855 = vsel %vm256, %v3826, %v3824
  %v3856 = vsel %vm256, %v3830, %v3828
  %v3857 = vsel %vm256, %v3834, %v3832
  %v3858 = vsel %vm256, %v3838, %v3836
  %3859 = vst [vmem:[#allocation2 + $0x500] sm:$0xff] %v3839
  %3860 = vst [vmem:[#allocation2 + $0x508] sm:$0xff] %v3855
  %3861 = vst [vmem:[#allocation2 + $0x540] sm:$0xff] %v3840
  %3862 = vst [vmem:[#allocation2 + $0x548] sm:$0xff] %v3856
  %3863 = vst [vmem:[#allocation2 + $0x580] sm:$0xff] %v3841
  %3864 = vst [vmem:[#allocation2 + $0x588] sm:$0xff] %v3857
  %3865 = vst [vmem:[#allocation2 + $0x5c0] sm:$0xff] %v3842
  %3866 = vst [vmem:[#allocation2 + $0x5c8] sm:$0xff] %v3858
  %3867 = vrot.lane.b32.xlu0 %v3613, 122
  %v3868 = vpop.permute.xlu0 %3867
  %3869 = vrot.lane.b32.xlu0 %v3615, 122
  %v3870 = vpop.permute.xlu0 %3869
  %3871 = vrot.lane.b32.xlu0 %v3617, 122
  %v3872 = vpop.permute.xlu0 %3871
  %3873 = vrot.lane.b32.xlu0 %v3619, 122
  %v3874 = vpop.permute.xlu0 %3873
  %3875 = vrot.lane.b32.xlu0 %v3623, 122
  %v3876 = vpop.permute.xlu0 %3875
  %3877 = vrot.lane.b32.xlu0 %v3625, 122
  %v3878 = vpop.permute.xlu0 %3877
  %3879 = vrot.lane.b32.xlu0 %v3627, 122
  %v3880 = vpop.permute.xlu0 %3879
  %3881 = vrot.lane.b32.xlu0 %v3629, 122
  %v3882 = vpop.permute.xlu0 %3881
  %v3883 = vsel %vm298, %v3868, %v3870
  %v3884 = vsel %vm298, %v3872, %v3874
  %v3885 = vsel %vm298, %v3876, %v3878
  %v3886 = vsel %vm298, %v3880, %v3882
  %v3899 = vsel %vm298, %v3870, %v3868
  %v3900 = vsel %vm298, %v3874, %v3872
  %v3901 = vsel %vm298, %v3878, %v3876
  %v3902 = vsel %vm298, %v3882, %v3880
  %3903 = vst [vmem:[#allocation2 + $0x600] sm:$0xff] %v3883
  %3904 = vst [vmem:[#allocation2 + $0x608] sm:$0xff] %v3899
  %3905 = vst [vmem:[#allocation2 + $0x640] sm:$0xff] %v3884
  %3906 = vst [vmem:[#allocation2 + $0x648] sm:$0xff] %v3900
  %3907 = vst [vmem:[#allocation2 + $0x680] sm:$0xff] %v3885
  %3908 = vst [vmem:[#allocation2 + $0x688] sm:$0xff] %v3901
  %3909 = vst [vmem:[#allocation2 + $0x6c0] sm:$0xff] %v3886
  %3910 = vst [vmem:[#allocation2 + $0x6c8] sm:$0xff] %v3902
  %3911 = vrot.lane.b32.xlu0 %v3613, 121
  %v3912 = vpop.permute.xlu0 %3911
  %3913 = vrot.lane.b32.xlu0 %v3615, 121
  %v3914 = vpop.permute.xlu0 %3913
  %3915 = vrot.lane.b32.xlu0 %v3617, 121
  %v3916 = vpop.permute.xlu0 %3915
  %3917 = vrot.lane.b32.xlu0 %v3619, 121
  %v3918 = vpop.permute.xlu0 %3917
  %3919 = vrot.lane.b32.xlu0 %v3623, 121
  %v3920 = vpop.permute.xlu0 %3919
  %3921 = vrot.lane.b32.xlu0 %v3625, 121
  %v3922 = vpop.permute.xlu0 %3921
  %3923 = vrot.lane.b32.xlu0 %v3627, 121
  %v3924 = vpop.permute.xlu0 %3923
  %3925 = vrot.lane.b32.xlu0 %v3629, 121
  %v3926 = vpop.permute.xlu0 %3925
  %v3927 = vsel %vm340, %v3912, %v3914
  %v3928 = vsel %vm340, %v3916, %v3918
  %v3929 = vsel %vm340, %v3920, %v3922
  %v3930 = vsel %vm340, %v3924, %v3926
  %v3943 = vsel %vm340, %v3914, %v3912
  %v3944 = vsel %vm340, %v3918, %v3916
  %v3945 = vsel %vm340, %v3922, %v3920
  %v3946 = vsel %vm340, %v3926, %v3924
  %3947 = vst [vmem:[#allocation2 + $0x700] sm:$0xff] %v3927
  %3948 = vst [vmem:[#allocation2 + $0x708] sm:$0xff] %v3943
  %3949 = vst [vmem:[#allocation2 + $0x740] sm:$0xff] %v3928
  %3950 = vst [vmem:[#allocation2 + $0x748] sm:$0xff] %v3944
  %3951 = vst [vmem:[#allocation2 + $0x780] sm:$0xff] %v3929
  %3952 = vst [vmem:[#allocation2 + $0x788] sm:$0xff] %v3945
  %3953 = vst [vmem:[#allocation2 + $0x7c0] sm:$0xff] %v3930
  %3954 = vst [vmem:[#allocation2 + $0x7c8] sm:$0xff] %v3946
  %3955 = vrot.lane.b32.xlu0 %v3613, 120
  %v3956 = vpop.permute.xlu0 %3955
  %3957 = vrot.lane.b32.xlu0 %v3615, 120
  %v3958 = vpop.permute.xlu0 %3957
  %3959 = vrot.lane.b32.xlu0 %v3617, 120
  %v3960 = vpop.permute.xlu0 %3959
  %3961 = vrot.lane.b32.xlu0 %v3619, 120
  %v3962 = vpop.permute.xlu0 %3961
  %3963 = vrot.lane.b32.xlu0 %v3623, 120
  %v3964 = vpop.permute.xlu0 %3963
  %3965 = vrot.lane.b32.xlu0 %v3625, 120
  %v3966 = vpop.permute.xlu0 %3965
  %3967 = vrot.lane.b32.xlu0 %v3627, 120
  %v3968 = vpop.permute.xlu0 %3967
  %3969 = vrot.lane.b32.xlu0 %v3629, 120
  %v3970 = vpop.permute.xlu0 %3969
  %v3971 = vsel %vm382, %v3956, %v3958
  %v3972 = vsel %vm382, %v3960, %v3962
  %v3973 = vsel %vm382, %v3964, %v3966
  %v3974 = vsel %vm382, %v3968, %v3970
  %v3987 = vsel %vm382, %v3958, %v3956
  %v3988 = vsel %vm382, %v3962, %v3960
  %v3989 = vsel %vm382, %v3966, %v3964
  %v3990 = vsel %vm382, %v3970, %v3968
  %3991 = vst [vmem:[#allocation2 + $0x800] sm:$0xff] %v3971
  %3992 = vst [vmem:[#allocation2 + $0x808] sm:$0xff] %v3987
  %3993 = vst [vmem:[#allocation2 + $0x840] sm:$0xff] %v3972
  %3994 = vst [vmem:[#allocation2 + $0x848] sm:$0xff] %v3988
  %3995 = vst [vmem:[#allocation2 + $0x880] sm:$0xff] %v3973
  %3996 = vst [vmem:[#allocation2 + $0x888] sm:$0xff] %v3989
  %3997 = vst [vmem:[#allocation2 + $0x8c0] sm:$0xff] %v3974
  %3998 = vst [vmem:[#allocation2 + $0x8c8] sm:$0xff] %v3990
  %3999 = vrot.lane.b32.xlu0 %v3613, 119
  %v4000 = vpop.permute.xlu0 %3999
  %4001 = vrot.lane.b32.xlu0 %v3615, 119
  %v4002 = vpop.permute.xlu0 %4001
  %4003 = vrot.lane.b32.xlu0 %v3617, 119
  %v4004 = vpop.permute.xlu0 %4003
  %4005 = vrot.lane.b32.xlu0 %v3619, 119
  %v4006 = vpop.permute.xlu0 %4005
  %4007 = vrot.lane.b32.xlu0 %v3623, 119
  %v4008 = vpop.permute.xlu0 %4007
  %4009 = vrot.lane.b32.xlu0 %v3625, 119
  %v4010 = vpop.permute.xlu0 %4009
  %4011 = vrot.lane.b32.xlu0 %v3627, 119
  %v4012 = vpop.permute.xlu0 %4011
  %4013 = vrot.lane.b32.xlu0 %v3629, 119
  %v4014 = vpop.permute.xlu0 %4013
  %v4015 = vsel %vm424, %v4000, %v4002
  %v4016 = vsel %vm424, %v4004, %v4006
  %v4017 = vsel %vm424, %v4008, %v4010
  %v4018 = vsel %vm424, %v4012, %v4014
  %v4031 = vsel %vm424, %v4002, %v4000
  %v4032 = vsel %vm424, %v4006, %v4004
  %v4033 = vsel %vm424, %v4010, %v4008
  %v4034 = vsel %vm424, %v4014, %v4012
  %4035 = vst [vmem:[#allocation2 + $0x900] sm:$0xff] %v4015
  %4036 = vst [vmem:[#allocation2 + $0x908] sm:$0xff] %v4031
  %4037 = vst [vmem:[#allocation2 + $0x940] sm:$0xff] %v4016
  %4038 = vst [vmem:[#allocation2 + $0x948] sm:$0xff] %v4032
  %4039 = vst [vmem:[#allocation2 + $0x980] sm:$0xff] %v4017
  %4040 = vst [vmem:[#allocation2 + $0x988] sm:$0xff] %v4033
  %4041 = vst [vmem:[#allocation2 + $0x9c0] sm:$0xff] %v4018
  %4042 = vst [vmem:[#allocation2 + $0x9c8] sm:$0xff] %v4034
  %v4043 = vld [vmem:[#allocation2] sm:$0xff]
  %v4044 = vld [vmem:[#allocation2 + $0x8] sm:$0xff]
  %v4045 = vld [vmem:[#allocation2 + $0x40] sm:$0xff]
  %v4046 = vld [vmem:[#allocation2 + $0x48] sm:$0xff]
  %v4047 = vld [vmem:[#allocation2 + $0x80] sm:$0xff]
  %v4048 = vld [vmem:[#allocation2 + $0x88] sm:$0xff]
  %v4049 = vld [vmem:[#allocation2 + $0xc0] sm:$0xff]
  %v4050 = vld [vmem:[#allocation2 + $0xc8] sm:$0xff]
  %v4051 = vld [vmem:[#allocation2 + $0x100] sm:$0xff]
  %v4052 = vld [vmem:[#allocation2 + $0x108] sm:$0xff]
  %v4053 = vld [vmem:[#allocation2 + $0x140] sm:$0xff]
  %v4054 = vld [vmem:[#allocation2 + $0x148] sm:$0xff]
  %v4055 = vld [vmem:[#allocation2 + $0x180] sm:$0xff]
  %v4056 = vld [vmem:[#allocation2 + $0x188] sm:$0xff]
  %v4057 = vld [vmem:[#allocation2 + $0x1c0] sm:$0xff]
  %v4058 = vld [vmem:[#allocation2 + $0x1c8] sm:$0xff]
  %v4059 = vld [vmem:[#allocation2 + $0x200] sm:$0xff]
  %v4060 = vld [vmem:[#allocation2 + $0x208] sm:$0xff]
  %v4061 = vld [vmem:[#allocation2 + $0x240] sm:$0xff]
  %v4062 = vld [vmem:[#allocation2 + $0x248] sm:$0xff]
  %v4063 = vld [vmem:[#allocation2 + $0x280] sm:$0xff]
  %v4064 = vld [vmem:[#allocation2 + $0x288] sm:$0xff]
  %v4065 = vld [vmem:[#allocation2 + $0x2c0] sm:$0xff]
  %v4066 = vld [vmem:[#allocation2 + $0x2c8] sm:$0xff]
  %v4067 = vld [vmem:[#allocation2 + $0x300] sm:$0xff]
  %v4068 = vld [vmem:[#allocation2 + $0x308] sm:$0xff]
  %v4069 = vld [vmem:[#allocation2 + $0x340] sm:$0xff]
  %v4070 = vld [vmem:[#allocation2 + $0x348] sm:$0xff]
  %v4071 = vld [vmem:[#allocation2 + $0x380] sm:$0xff]
  %v4072 = vld [vmem:[#allocation2 + $0x388] sm:$0xff]
  %v4073 = vld [vmem:[#allocation2 + $0x3c0] sm:$0xff]
  %v4074 = vld [vmem:[#allocation2 + $0x3c8] sm:$0xff]
  %v4075 = vld [vmem:[#allocation2 + $0x400] sm:$0xff]
  %v4076 = vld [vmem:[#allocation2 + $0x408] sm:$0xff]
  %v4077 = vld [vmem:[#allocation2 + $0x440] sm:$0xff]
  %v4078 = vld [vmem:[#allocation2 + $0x448] sm:$0xff]
  %v4079 = vld [vmem:[#allocation2 + $0x480] sm:$0xff]
  %v4080 = vld [vmem:[#allocation2 + $0x488] sm:$0xff]
  %v4081 = vld [vmem:[#allocation2 + $0x4c0] sm:$0xff]
  %v4082 = vld [vmem:[#allocation2 + $0x4c8] sm:$0xff]
  %v4083 = vld [vmem:[#allocation2 + $0x500] sm:$0xff]
  %v4084 = vld [vmem:[#allocation2 + $0x508] sm:$0xff]
  %v4085 = vld [vmem:[#allocation2 + $0x540] sm:$0xff]
  %v4086 = vld [vmem:[#allocation2 + $0x548] sm:$0xff]
  %v4087 = vld [vmem:[#allocation2 + $0x580] sm:$0xff]
  %v4088 = vld [vmem:[#allocation2 + $0x588] sm:$0xff]
  %v4089 = vld [vmem:[#allocation2 + $0x5c0] sm:$0xff]
  %v4090 = vld [vmem:[#allocation2 + $0x5c8] sm:$0xff]
  %v4091 = vld [vmem:[#allocation2 + $0x600] sm:$0xff]
  %v4092 = vld [vmem:[#allocation2 + $0x608] sm:$0xff]
  %v4093 = vld [vmem:[#allocation2 + $0x640] sm:$0xff]
  %v4094 = vld [vmem:[#allocation2 + $0x648] sm:$0xff]
  %v4095 = vld [vmem:[#allocation2 + $0x680] sm:$0xff]
  %v4096 = vld [vmem:[#allocation2 + $0x688] sm:$0xff]
  %v4097 = vld [vmem:[#allocation2 + $0x6c0] sm:$0xff]
  %v4098 = vld [vmem:[#allocation2 + $0x6c8] sm:$0xff]
  %v4099 = vld [vmem:[#allocation2 + $0x700] sm:$0xff]
  %v4100 = vld [vmem:[#allocation2 + $0x708] sm:$0xff]
  %v4101 = vld [vmem:[#allocation2 + $0x740] sm:$0xff]
  %v4102 = vld [vmem:[#allocation2 + $0x748] sm:$0xff]
  %v4103 = vld [vmem:[#allocation2 + $0x780] sm:$0xff]
  %v4104 = vld [vmem:[#allocation2 + $0x788] sm:$0xff]
  %v4105 = vld [vmem:[#allocation2 + $0x7c0] sm:$0xff]
  %v4106 = vld [vmem:[#allocation2 + $0x7c8] sm:$0xff]
  %v4107 = vld [vmem:[#allocation2 + $0x800] sm:$0xff]
  %v4108 = vld [vmem:[#allocation2 + $0x808] sm:$0xff]
  %v4109 = vld [vmem:[#allocation2 + $0x840] sm:$0xff]
  %v4110 = vld [vmem:[#allocation2 + $0x848] sm:$0xff]
  %v4111 = vld [vmem:[#allocation2 + $0x880] sm:$0xff]
  %v4112 = vld [vmem:[#allocation2 + $0x888] sm:$0xff]
  %v4113 = vld [vmem:[#allocation2 + $0x8c0] sm:$0xff]
  %v4114 = vld [vmem:[#allocation2 + $0x8c8] sm:$0xff]
  %v4115 = vld [vmem:[#allocation2 + $0x900] sm:$0xff]
  %v4116 = vld [vmem:[#allocation2 + $0x908] sm:$0xff]
  %v4117 = vld [vmem:[#allocation2 + $0x940] sm:$0xff]
  %v4118 = vld [vmem:[#allocation2 + $0x948] sm:$0xff]
  %v4119 = vld [vmem:[#allocation2 + $0x980] sm:$0xff]
  %v4120 = vld [vmem:[#allocation2 + $0x988] sm:$0xff]
  %v4121 = vld [vmem:[#allocation2 + $0x9c0] sm:$0xff]
  %v4122 = vld [vmem:[#allocation2 + $0x9c8] sm:$0xff]
  %v4123 = vld [vmem:[%s9] sm:$0xff]
  %v4124 = vld [vmem:[%s9 + $0x8] sm:$0xff]
  %v4125 = vld [vmem:[%s9 + $0x10] sm:$0xff]
  %v4126 = vld [vmem:[%s9 + $0x18] sm:$0xff]
  %v4127 = vld [vmem:[%s9 + $0x20] sm:$0xff]
  %v4128 = vld [vmem:[%s9 + $0x28] sm:$0xff]
  %v4129 = vld [vmem:[%s9 + $0x30] sm:$0xff]
  %v4130 = vld [vmem:[%s9 + $0x38] sm:$0xff]
  %v4131 = vld [vmem:[%s9 + $0x40] sm:$0xff]
  %v4132 = vld [vmem:[%s9 + $0x48] sm:$0xff]
  %v4133 = vld [vmem:[%s9 + $0x50] sm:$0xff]
  %v4134 = vld [vmem:[%s9 + $0x58] sm:$0xff]
  %v4135 = vld [vmem:[%s9 + $0x60] sm:$0xff]
  %v4136 = vld [vmem:[%s9 + $0x68] sm:$0xff]
  %v4137 = vld [vmem:[%s9 + $0x70] sm:$0xff]
  %v4138 = vld [vmem:[%s9 + $0x78] sm:$0xff]
  %v4139 = vld [vmem:[%s9 + $0x80] sm:$0xff]
  %v4140 = vld [vmem:[%s9 + $0x88] sm:$0xff]
  %v4141 = vld [vmem:[%s9 + $0x90] sm:$0xff]
  %v4142 = vld [vmem:[%s9 + $0x98] sm:$0xff]
  %v4143 = vld [vmem:[%s9 + $0xa0] sm:$0xff]
  %v4144 = vld [vmem:[%s9 + $0xa8] sm:$0xff]
  %v4145 = vld [vmem:[%s9 + $0xb0] sm:$0xff]
  %v4146 = vld [vmem:[%s9 + $0xb8] sm:$0xff]
  %v4147 = vld [vmem:[%s10] sm:$0xff]
  %v4148 = vld [vmem:[%s10 + $0x8] sm:$0xff]
  %v4149 = vld [vmem:[%s10 + $0x10] sm:$0xff]
  %v4150 = vld [vmem:[%s10 + $0x18] sm:$0xff]
  %v4151 = vld [vmem:[%s10 + $0x20] sm:$0xff]
  %v4152 = vld [vmem:[%s10 + $0x28] sm:$0xff]
  %v4153 = vld [vmem:[%s10 + $0x30] sm:$0xff]
  %v4154 = vld [vmem:[%s10 + $0x38] sm:$0xff]
  %4156 = vset.pattern.permute.xlu0 0
  %4157 = vperm.xlu0 %4156, %v4147
  %v4158 = vpop.permute.xlu0 %4157
  %4161 = vset.pattern.permute.xlu0 0
  %4162 = vperm.xlu0 %4161, %v4148
  %v4163 = vpop.permute.xlu0 %4162
  %4166 = vset.pattern.permute.xlu0 0
  %4167 = vperm.xlu0 %4166, %v4149
  %v4168 = vpop.permute.xlu0 %4167
  %4171 = vset.pattern.permute.xlu0 0
  %4172 = vperm.xlu0 %4171, %v4150
  %v4173 = vpop.permute.xlu0 %4172
  %4176 = vset.pattern.permute.xlu0 0
  %4177 = vperm.xlu0 %4176, %v4151
  %v4178 = vpop.permute.xlu0 %4177
  %4181 = vset.pattern.permute.xlu0 0
  %4182 = vperm.xlu0 %4181, %v4152
  %v4183 = vpop.permute.xlu0 %4182
  %4186 = vset.pattern.permute.xlu0 0
  %4187 = vperm.xlu0 %4186, %v4153
  %v4188 = vpop.permute.xlu0 %4187
  %4191 = vset.pattern.permute.xlu0 0
  %4192 = vperm.xlu0 %4191, %v4154
  %v4193 = vpop.permute.xlu0 %4192
  %vm4195 = vcmask 523264
  %v4197 = vsel %vm4195, %v4125, 0
  %v4200 = vsel %vm4195, %v4128, 0
  %v4203 = vsel %vm4195, %v4131, 0
  %v4206 = vsel %vm4195, %v4134, 0
  %v4209 = vsel %vm4195, %v4137, 0
  %v4212 = vsel %vm4195, %v4140, 0
  %v4215 = vsel %vm4195, %v4143, 0
  %v4218 = vsel %vm4195, %v4146, 0
  %4220 = vmatprep.subr.mxu0 %v4074
  %4221 = vmatpush1.msra.mxu0 %v4073
  %4222 = vmatprep.subr.mxu0 %v4072
  %4223 = vmatpush1.msra.mxu0 %v4071
  %4224 = vmatprep.subr.mxu0 %v4070
  %4225 = vmatpush1.msra.mxu0 %v4069
  %4226 = vmatprep.subr.mxu0 %v4068
  %4227 = vmatpush1.msra.mxu0 %v4067
  %4228 = vmatprep.subr.mxu0 %v4066
  %4229 = vmatpush1.msra.mxu0 %v4065
  %4230 = vmatprep.subr.mxu0 %v4064
  %4231 = vmatpush1.msra.mxu0 %v4063
  %4232 = vmatprep.subr.mxu0 %v4062
  %4233 = vmatpush1.msra.mxu0 %v4061
  %4234 = vmatprep.subr.mxu0 %v4060
  %4235 = vmatpush1.msra.mxu0 %v4059
  %4236 = vmatprep.subr.mxu0 %v4058
  %4237 = vmatpush1.msra.mxu0 %v4057
  %4238 = vmatprep.subr.mxu0 %v4056
  %4239 = vmatpush1.msra.mxu0 %v4055
  %4240 = vmatprep.subr.mxu0 %v4054
  %4241 = vmatpush1.msra.mxu0 %v4053
  %4242 = vmatprep.subr.mxu0 %v4052
  %4243 = vmatpush1.msra.mxu0 %v4051
  %4244 = vmatprep.subr.mxu0 %v4050
  %4245 = vmatpush1.msra.mxu0 %v4049
  %4246 = vmatprep.subr.mxu0 %v4048
  %4247 = vmatpush1.msra.mxu0 %v4047
  %4248 = vmatprep.subr.mxu0 %v4046
  %4249 = vmatpush1.msra.mxu0 %v4045
  %4250 = vmatprep.subr.mxu0 %v4044
  %4251 = vmatpush1.msra.mxu0 %v4043
  %4252 = vmatprep.subr.mxu0 %v4106
  %4253 = vmatpush2.msra.mxu0 %v4105
  %4254 = vmatprep.subr.mxu0 %v4104
  %4255 = vmatpush2.msra.mxu0 %v4103
  %4256 = vmatprep.subr.mxu0 %v4102
  %4257 = vmatpush2.msra.mxu0 %v4101
  %4258 = vmatprep.subr.mxu0 %v4100
  %4259 = vmatpush2.msra.mxu0 %v4099
  %4260 = vmatprep.subr.mxu0 %v4098
  %4261 = vmatpush2.msra.mxu0 %v4097
  %4262 = vmatprep.subr.mxu0 %v4096
  %4263 = vmatpush2.msra.mxu0 %v4095
  %4264 = vmatprep.subr.mxu0 %v4094
  %4265 = vmatpush2.msra.mxu0 %v4093
  %4266 = vmatprep.subr.mxu0 %v4092
  %4267 = vmatpush2.msra.mxu0 %v4091
  %4268 = vmatprep.subr.mxu0 %v4090
  %4269 = vmatpush2.msra.mxu0 %v4089
  %4270 = vmatprep.subr.mxu0 %v4088
  %4271 = vmatpush2.msra.mxu0 %v4087
  %4272 = vmatprep.subr.mxu0 %v4086
  %4273 = vmatpush2.msra.mxu0 %v4085
  %4274 = vmatprep.subr.mxu0 %v4084
  %4275 = vmatpush2.msra.mxu0 %v4083
  %4276 = vmatprep.subr.mxu0 %v4082
  %4277 = vmatpush2.msra.mxu0 %v4081
  %4278 = vmatprep.subr.mxu0 %v4080
  %4279 = vmatpush2.msra.mxu0 %v4079
  %4280 = vmatprep.subr.mxu0 %v4078
  %4281 = vmatpush2.msra.mxu0 %v4077
  %4282 = vmatprep.subr.mxu0 %v4076
  %4283 = vmatpush2.msra.mxu0 %v4075
  %4284 = vmatprep.mubr.f32.mxu0 %v4124
  %4285 = vmatmul.mubr.f32.gmra.mxu0 %v4123
  %v4286 = vpop.f32.mrf.mxu0
  %v4287 = vadd.f32 %v4158, %v4286
  %v4288 = vpop.f32.mrf.mxu0
  %v4289 = vadd.f32 %v4158, %v4288
  %4290 = vmatprep.mubr.f32.mxu0 %v4127
  %4291 = vmatmul.mubr.f32.gmra.mxu0 %v4126
  %v4292 = vpop.f32.mrf.mxu0
  %v4293 = vadd.f32 %v4163, %v4292
  %v4294 = vpop.f32.mrf.mxu0
  %v4295 = vadd.f32 %v4163, %v4294
  %4296 = vmatprep.mubr.f32.mxu0 %v4130
  %4297 = vmatmul.mubr.f32.gmra.mxu0 %v4129
  %v4298 = vpop.f32.mrf.mxu0
  %v4299 = vadd.f32 %v4168, %v4298
  %v4300 = vpop.f32.mrf.mxu0
  %v4301 = vadd.f32 %v4168, %v4300
  %4302 = vmatprep.mubr.f32.mxu0 %v4133
  %4303 = vmatmul.mubr.f32.gmra.mxu0 %v4132
  %v4304 = vpop.f32.mrf.mxu0
  %v4305 = vadd.f32 %v4173, %v4304
  %v4306 = vpop.f32.mrf.mxu0
  %v4307 = vadd.f32 %v4173, %v4306
  %4308 = vmatprep.mubr.f32.mxu0 %v4136
  %4309 = vmatmul.mubr.f32.gmra.mxu0 %v4135
  %v4310 = vpop.f32.mrf.mxu0
  %v4311 = vadd.f32 %v4178, %v4310
  %v4312 = vpop.f32.mrf.mxu0
  %v4313 = vadd.f32 %v4178, %v4312
  %4314 = vmatprep.mubr.f32.mxu0 %v4139
  %4315 = vmatmul.mubr.f32.gmra.mxu0 %v4138
  %v4316 = vpop.f32.mrf.mxu0
  %v4317 = vadd.f32 %v4183, %v4316
  %v4318 = vpop.f32.mrf.mxu0
  %v4319 = vadd.f32 %v4183, %v4318
  %4320 = vmatprep.mubr.f32.mxu0 %v4142
  %4321 = vmatmul.mubr.f32.gmra.mxu0 %v4141
  %v4322 = vpop.f32.mrf.mxu0
  %v4323 = vadd.f32 %v4188, %v4322
  %v4324 = vpop.f32.mrf.mxu0
  %v4325 = vadd.f32 %v4188, %v4324
  %4326 = vmatprep.mubr.f32.mxu0 %v4145
  %4327 = vmatmul.mubr.f32.gmra.mxu0 %v4144
  %v4328 = vpop.f32.mrf.mxu0
  %v4329 = vadd.f32 %v4193, %v4328
  %v4330 = vpop.f32.mrf.mxu0
  %v4331 = vadd.f32 %v4193, %v4330
  %4332 = vdwg.mxu0
  %4333 = vmatprep.subr.mxu0 0.0
  %4334 = vmatpush1.msra.mxu0 0.0
  %4335 = vmatprep.subr.mxu0 0.0
  %4336 = vmatpush1.msra.mxu0 0.0
  %4337 = vmatprep.subr.mxu0 0.0
  %4338 = vmatpush1.msra.mxu0 0.0
  %4339 = vmatprep.subr.mxu0 0.0
  %4340 = vmatpush1.msra.mxu0 0.0
  %4341 = vmatprep.subr.mxu0 0.0
  %4342 = vmatpush1.msra.mxu0 0.0
  %4343 = vmatprep.subr.mxu0 0.0
  %4344 = vmatpush1.msra.mxu0 0.0
  %4345 = vmatprep.subr.mxu0 0.0
  %4346 = vmatpush1.msra.mxu0 0.0
  %4347 = vmatprep.subr.mxu0 0.0
  %4348 = vmatpush1.msra.mxu0 0.0
  %4349 = vmatprep.subr.mxu0 %v4122
  %4350 = vmatpush1.msra.mxu0 %v4121
  %4351 = vmatprep.subr.mxu0 %v4120
  %4352 = vmatpush1.msra.mxu0 %v4119
  %4353 = vmatprep.subr.mxu0 %v4118
  %4354 = vmatpush1.msra.mxu0 %v4117
  %4355 = vmatprep.subr.mxu0 %v4116
  %4356 = vmatpush1.msra.mxu0 %v4115
  %4357 = vmatprep.subr.mxu0 %v4114
  %4358 = vmatpush1.msra.mxu0 %v4113
  %4359 = vmatprep.subr.mxu0 %v4112
  %4360 = vmatpush1.msra.mxu0 %v4111
  %4361 = vmatprep.subr.mxu0 %v4110
  %4362 = vmatpush1.msra.mxu0 %v4109
  %4363 = vmatprep.subr.mxu0 %v4108
  %4364 = vmatpush1.msra.mxu0 %v4107
  %4365 = vmatprep.subr.mxu0 0.0
  %4366 = vmatpush2.msra.mxu0 0.0
  %4367 = vmatprep.subr.mxu0 0.0
  %4368 = vmatpush2.msra.mxu0 0.0
  %4369 = vmatprep.subr.mxu0 0.0
  %4370 = vmatpush2.msra.mxu0 0.0
  %4371 = vmatprep.subr.mxu0 0.0
  %4372 = vmatpush2.msra.mxu0 0.0
  %4373 = vmatprep.subr.mxu0 0.0
  %4374 = vmatpush2.msra.mxu0 0.0
  %4375 = vmatprep.subr.mxu0 0.0
  %4376 = vmatpush2.msra.mxu0 0.0
  %4377 = vmatprep.subr.mxu0 0.0
  %4378 = vmatpush2.msra.mxu0 0.0
  %4379 = vmatprep.subr.mxu0 0.0
  %4380 = vmatpush2.msra.mxu0 0.0
  %4381 = vmatprep.subr.mxu0 0.0
  %4382 = vmatpush2.msra.mxu0 0.0
  %4383 = vmatprep.subr.mxu0 0.0
  %4384 = vmatpush2.msra.mxu0 0.0
  %4385 = vmatprep.subr.mxu0 0.0
  %4386 = vmatpush2.msra.mxu0 0.0
  %4387 = vmatprep.subr.mxu0 0.0
  %4388 = vmatpush2.msra.mxu0 0.0
  %4389 = vmatprep.subr.mxu0 0.0
  %4390 = vmatpush2.msra.mxu0 0.0
  %4391 = vmatprep.subr.mxu0 0.0
  %4392 = vmatpush2.msra.mxu0 0.0
  %4393 = vmatprep.subr.mxu0 0.0
  %4394 = vmatpush2.msra.mxu0 0.0
  %4395 = vmatprep.subr.mxu0 0.0
  %4396 = vmatpush2.msra.mxu0 0.0
  %4397 = vmatprep.mubr.f32.mxu0 0.0
  %4398 = vmatmul.mubr.f32.gmra.mxu0 %v4197
  %v4399 = vpop.f32.mrf.mxu0
  %v4400 = vadd.f32 %v4287, %v4399
  %v4401 = vpop.f32.mrf.mxu0
  %v4402 = vadd.f32 %v4289, %v4401
  %4403 = vmatprep.mubr.f32.mxu0 0.0
  %4404 = vmatmul.mubr.f32.gmra.mxu0 %v4200
  %v4405 = vpop.f32.mrf.mxu0
  %v4406 = vadd.f32 %v4293, %v4405
  %v4407 = vpop.f32.mrf.mxu0
  %v4408 = vadd.f32 %v4295, %v4407
  %4409 = vmatprep.mubr.f32.mxu0 0.0
  %4410 = vmatmul.mubr.f32.gmra.mxu0 %v4203
  %v4411 = vpop.f32.mrf.mxu0
  %v4412 = vadd.f32 %v4299, %v4411
  %v4413 = vpop.f32.mrf.mxu0
  %v4414 = vadd.f32 %v4301, %v4413
  %4415 = vmatprep.mubr.f32.mxu0 0.0
  %4416 = vmatmul.mubr.f32.gmra.mxu0 %v4206
  %v4417 = vpop.f32.mrf.mxu0
  %v4418 = vadd.f32 %v4305, %v4417
  %v4419 = vpop.f32.mrf.mxu0
  %v4420 = vadd.f32 %v4307, %v4419
  %4421 = vmatprep.mubr.f32.mxu0 0.0
  %4422 = vmatmul.mubr.f32.gmra.mxu0 %v4209
  %v4423 = vpop.f32.mrf.mxu0
  %v4424 = vadd.f32 %v4311, %v4423
  %v4425 = vpop.f32.mrf.mxu0
  %v4426 = vadd.f32 %v4313, %v4425
  %4427 = vmatprep.mubr.f32.mxu0 0.0
  %4428 = vmatmul.mubr.f32.gmra.mxu0 %v4212
  %v4429 = vpop.f32.mrf.mxu0
  %v4430 = vadd.f32 %v4317, %v4429
  %v4431 = vpop.f32.mrf.mxu0
  %v4432 = vadd.f32 %v4319, %v4431
  %4433 = vmatprep.mubr.f32.mxu0 0.0
  %4434 = vmatmul.mubr.f32.gmra.mxu0 %v4215
  %v4435 = vpop.f32.mrf.mxu0
  %v4436 = vadd.f32 %v4323, %v4435
  %v4437 = vpop.f32.mrf.mxu0
  %v4438 = vadd.f32 %v4325, %v4437
  %4439 = vmatprep.mubr.f32.mxu0 0.0
  %4440 = vmatmul.mubr.f32.gmra.mxu0 %v4218
  %v4441 = vpop.f32.mrf.mxu0
  %v4442 = vadd.f32 %v4329, %v4441
  %v4443 = vpop.f32.mrf.mxu0
  %v4444 = vadd.f32 %v4331, %v4443
  %4445 = vdwg.mxu0
  %vm4446 = vcmp.gt.f32.partialorder %v4400, 0.0
  %vm4447 = vcmp.gt.f32.partialorder %v4402, 0.0
  %vm4448 = vcmp.gt.f32.partialorder %v4406, 0.0
  %vm4449 = vcmp.gt.f32.partialorder %v4408, 0.0
  %vm4450 = vcmp.gt.f32.partialorder %v4412, 0.0
  %vm4451 = vcmp.gt.f32.partialorder %v4414, 0.0
  %vm4452 = vcmp.gt.f32.partialorder %v4418, 0.0
  %vm4453 = vcmp.gt.f32.partialorder %v4420, 0.0
  %vm4454 = vcmp.gt.f32.partialorder %v4424, 0.0
  %vm4455 = vcmp.gt.f32.partialorder %v4426, 0.0
  %vm4456 = vcmp.gt.f32.partialorder %v4430, 0.0
  %vm4457 = vcmp.gt.f32.partialorder %v4432, 0.0
  %vm4458 = vcmp.gt.f32.partialorder %v4436, 0.0
  %vm4459 = vcmp.gt.f32.partialorder %v4438, 0.0
  %vm4460 = vcmp.gt.f32.partialorder %v4442, 0.0
  %vm4461 = vcmp.gt.f32.partialorder %v4444, 0.0
  %v4462 = vmul.f32 %v4400, 1.442695
  %v4463 = vpow.pop %v4462
  %v4464 = vmul.f32 %v4402, 1.442695
  %v4465 = vpow.pop %v4464
  %v4466 = vmul.f32 %v4406, 1.442695
  %v4467 = vpow.pop %v4466
  %v4468 = vmul.f32 %v4408, 1.442695
  %v4469 = vpow.pop %v4468
  %v4470 = vmul.f32 %v4412, 1.442695
  %v4471 = vpow.pop %v4470
  %v4472 = vmul.f32 %v4414, 1.442695
  %v4473 = vpow.pop %v4472
  %v4474 = vmul.f32 %v4418, 1.442695
  %v4475 = vpow.pop %v4474
  %v4476 = vmul.f32 %v4420, 1.442695
  %v4477 = vpow.pop %v4476
  %v4478 = vmul.f32 %v4424, 1.442695
  %v4479 = vpow.pop %v4478
  %v4480 = vmul.f32 %v4426, 1.442695
  %v4481 = vpow.pop %v4480
  %v4482 = vmul.f32 %v4430, 1.442695
  %v4483 = vpow.pop %v4482
  %v4484 = vmul.f32 %v4432, 1.442695
  %v4485 = vpow.pop %v4484
  %v4486 = vmul.f32 %v4436, 1.442695
  %v4487 = vpow.pop %v4486
  %v4488 = vmul.f32 %v4438, 1.442695
  %v4489 = vpow.pop %v4488
  %v4490 = vmul.f32 %v4442, 1.442695
  %v4491 = vpow.pop %v4490
  %v4492 = vmul.f32 %v4444, 1.442695
  %v4493 = vpow.pop %v4492
  %v4494 = vsub.f32 %v4463, 1.0
  %v4495 = vsub.f32 %v4465, 1.0
  %v4496 = vsub.f32 %v4467, 1.0
  %v4497 = vsub.f32 %v4469, 1.0
  %v4498 = vsub.f32 %v4471, 1.0
  %v4499 = vsub.f32 %v4473, 1.0
  %v4500 = vsub.f32 %v4475, 1.0
  %v4501 = vsub.f32 %v4477, 1.0
  %v4502 = vsub.f32 %v4479, 1.0
  %v4503 = vsub.f32 %v4481, 1.0
  %v4504 = vsub.f32 %v4483, 1.0
  %v4505 = vsub.f32 %v4485, 1.0
  %v4506 = vsub.f32 %v4487, 1.0
  %v4507 = vsub.f32 %v4489, 1.0
  %v4508 = vsub.f32 %v4491, 1.0
  %v4509 = vsub.f32 %v4493, 1.0
  %v4510 = vsel %vm4446, %v4400, %v4494
  %v4511 = vsel %vm4447, %v4402, %v4495
  %v4512 = vsel %vm4448, %v4406, %v4496
  %v4513 = vsel %vm4449, %v4408, %v4497
  %v4514 = vsel %vm4450, %v4412, %v4498
  %v4515 = vsel %vm4451, %v4414, %v4499
  %v4516 = vsel %vm4452, %v4418, %v4500
  %v4517 = vsel %vm4453, %v4420, %v4501
  %v4518 = vsel %vm4454, %v4424, %v4502
  %v4519 = vsel %vm4455, %v4426, %v4503
  %v4520 = vsel %vm4456, %v4430, %v4504
  %v4521 = vsel %vm4457, %v4432, %v4505
  %v4522 = vsel %vm4458, %v4436, %v4506
  %v4523 = vsel %vm4459, %v4438, %v4507
  %v4524 = vsel %vm4460, %v4442, %v4508
  %v4525 = vsel %vm4461, %v4444, %v4509
  %4542 = vrot.lane.b32.xlu0 %v4510, 127
  %v4543 = vpop.permute.xlu0 %4542
  %4544 = vrot.lane.b32.xlu0 %v4511, 127
  %v4545 = vpop.permute.xlu0 %4544
  %4546 = vrot.lane.b32.xlu0 %v4512, 127
  %v4547 = vpop.permute.xlu0 %4546
  %4548 = vrot.lane.b32.xlu0 %v4513, 127
  %v4549 = vpop.permute.xlu0 %4548
  %4550 = vrot.lane.b32.xlu0 %v4514, 127
  %v4551 = vpop.permute.xlu0 %4550
  %4552 = vrot.lane.b32.xlu0 %v4515, 127
  %v4553 = vpop.permute.xlu0 %4552
  %4554 = vrot.lane.b32.xlu0 %v4516, 127
  %v4555 = vpop.permute.xlu0 %4554
  %4556 = vrot.lane.b32.xlu0 %v4517, 127
  %v4557 = vpop.permute.xlu0 %4556
  %4558 = vrot.lane.b32.xlu0 %v4518, 127
  %v4559 = vpop.permute.xlu0 %4558
  %4560 = vrot.lane.b32.xlu0 %v4519, 127
  %v4561 = vpop.permute.xlu0 %4560
  %4562 = vrot.lane.b32.xlu0 %v4520, 127
  %v4563 = vpop.permute.xlu0 %4562
  %4564 = vrot.lane.b32.xlu0 %v4521, 127
  %v4565 = vpop.permute.xlu0 %4564
  %4566 = vrot.lane.b32.xlu0 %v4522, 127
  %v4567 = vpop.permute.xlu0 %4566
  %4568 = vrot.lane.b32.xlu0 %v4523, 127
  %v4569 = vpop.permute.xlu0 %4568
  %4570 = vrot.lane.b32.xlu0 %v4524, 127
  %v4571 = vpop.permute.xlu0 %4570
  %4572 = vrot.lane.b32.xlu0 %v4525, 127
  %v4573 = vpop.permute.xlu0 %4572
  %v4574 = vsel %vm88, %v4543, %v4545
  %v4575 = vsel %vm88, %v4547, %v4549
  %v4576 = vsel %vm88, %v4551, %v4553
  %v4577 = vsel %vm88, %v4555, %v4557
  %v4578 = vsel %vm88, %v4559, %v4561
  %v4579 = vsel %vm88, %v4563, %v4565
  %v4580 = vsel %vm88, %v4567, %v4569
  %v4581 = vsel %vm88, %v4571, %v4573
  %v4606 = vsel %vm88, %v4545, %v4543
  %v4607 = vsel %vm88, %v4549, %v4547
  %v4608 = vsel %vm88, %v4553, %v4551
  %v4609 = vsel %vm88, %v4557, %v4555
  %v4610 = vsel %vm88, %v4561, %v4559
  %v4611 = vsel %vm88, %v4565, %v4563
  %v4612 = vsel %vm88, %v4569, %v4567
  %v4613 = vsel %vm88, %v4573, %v4571
  %v4614 = vmax.f32 %v4510, %v4574
  %v4615 = vmax.f32 %v4511, %v4606
  %v4616 = vmax.f32 %v4512, %v4575
  %v4617 = vmax.f32 %v4513, %v4607
  %v4618 = vmax.f32 %v4514, %v4576
  %v4619 = vmax.f32 %v4515, %v4608
  %v4620 = vmax.f32 %v4516, %v4577
  %v4621 = vmax.f32 %v4517, %v4609
  %v4622 = vmax.f32 %v4518, %v4578
  %v4623 = vmax.f32 %v4519, %v4610
  %v4624 = vmax.f32 %v4520, %v4579
  %v4625 = vmax.f32 %v4521, %v4611
  %v4626 = vmax.f32 %v4522, %v4580
  %v4627 = vmax.f32 %v4523, %v4612
  %v4628 = vmax.f32 %v4524, %v4581
  %v4629 = vmax.f32 %v4525, %v4613
  %4630 = vrot.lane.b32.xlu0 %v4510, 126
  %v4631 = vpop.permute.xlu0 %4630
  %4632 = vrot.lane.b32.xlu0 %v4511, 126
  %v4633 = vpop.permute.xlu0 %4632
  %4634 = vrot.lane.b32.xlu0 %v4512, 126
  %v4635 = vpop.permute.xlu0 %4634
  %4636 = vrot.lane.b32.xlu0 %v4513, 126
  %v4637 = vpop.permute.xlu0 %4636
  %4638 = vrot.lane.b32.xlu0 %v4514, 126
  %v4639 = vpop.permute.xlu0 %4638
  %4640 = vrot.lane.b32.xlu0 %v4515, 126
  %v4641 = vpop.permute.xlu0 %4640
  %4642 = vrot.lane.b32.xlu0 %v4516, 126
  %v4643 = vpop.permute.xlu0 %4642
  %4644 = vrot.lane.b32.xlu0 %v4517, 126
  %v4645 = vpop.permute.xlu0 %4644
  %4646 = vrot.lane.b32.xlu0 %v4518, 126
  %v4647 = vpop.permute.xlu0 %4646
  %4648 = vrot.lane.b32.xlu0 %v4519, 126
  %v4649 = vpop.permute.xlu0 %4648
  %4650 = vrot.lane.b32.xlu0 %v4520, 126
  %v4651 = vpop.permute.xlu0 %4650
  %4652 = vrot.lane.b32.xlu0 %v4521, 126
  %v4653 = vpop.permute.xlu0 %4652
  %4654 = vrot.lane.b32.xlu0 %v4522, 126
  %v4655 = vpop.permute.xlu0 %4654
  %4656 = vrot.lane.b32.xlu0 %v4523, 126
  %v4657 = vpop.permute.xlu0 %4656
  %4658 = vrot.lane.b32.xlu0 %v4524, 126
  %v4659 = vpop.permute.xlu0 %4658
  %4660 = vrot.lane.b32.xlu0 %v4525, 126
  %v4661 = vpop.permute.xlu0 %4660
  %v4662 = vsel %vm130, %v4631, %v4633
  %v4663 = vsel %vm130, %v4635, %v4637
  %v4664 = vsel %vm130, %v4639, %v4641
  %v4665 = vsel %vm130, %v4643, %v4645
  %v4666 = vsel %vm130, %v4647, %v4649
  %v4667 = vsel %vm130, %v4651, %v4653
  %v4668 = vsel %vm130, %v4655, %v4657
  %v4669 = vsel %vm130, %v4659, %v4661
  %v4694 = vsel %vm130, %v4633, %v4631
  %v4695 = vsel %vm130, %v4637, %v4635
  %v4696 = vsel %vm130, %v4641, %v4639
  %v4697 = vsel %vm130, %v4645, %v4643
  %v4698 = vsel %vm130, %v4649, %v4647
  %v4699 = vsel %vm130, %v4653, %v4651
  %v4700 = vsel %vm130, %v4657, %v4655
  %v4701 = vsel %vm130, %v4661, %v4659
  %v4702 = vmax.f32 %v4614, %v4662
  %v4703 = vmax.f32 %v4615, %v4694
  %v4704 = vmax.f32 %v4616, %v4663
  %v4705 = vmax.f32 %v4617, %v4695
  %v4706 = vmax.f32 %v4618, %v4664
  %v4707 = vmax.f32 %v4619, %v4696
  %v4708 = vmax.f32 %v4620, %v4665
  %v4709 = vmax.f32 %v4621, %v4697
  %v4710 = vmax.f32 %v4622, %v4666
  %v4711 = vmax.f32 %v4623, %v4698
  %v4712 = vmax.f32 %v4624, %v4667
  %v4713 = vmax.f32 %v4625, %v4699
  %v4714 = vmax.f32 %v4626, %v4668
  %v4715 = vmax.f32 %v4627, %v4700
  %v4716 = vmax.f32 %v4628, %v4669
  %v4717 = vmax.f32 %v4629, %v4701
  %v4718 = vpack.c.bf16 %v4704, %v4702
  %v4719 = vpack.c.bf16 %v4705, %v4703
  %v4720 = vpack.c.bf16 %v4708, %v4706
  %v4721 = vpack.c.bf16 %v4709, %v4707
  %v4722 = vpack.c.bf16 %v4712, %v4710
  %v4723 = vpack.c.bf16 %v4713, %v4711
  %v4724 = vpack.c.bf16 %v4716, %v4714
  %v4725 = vpack.c.bf16 %v4717, %v4715
  %v4726 = vld [vmem:[%s11] sm:$0xff]
  %v4727 = vld [vmem:[%s11 + $0x8] sm:$0xff]
  %v4728 = vld [vmem:[%s11 + $0x10] sm:$0xff]
  %v4729 = vld [vmem:[%s11 + $0x18] sm:$0xff]
  %v4730 = vld [vmem:[%s11 + $0x20] sm:$0xff]
  %v4731 = vld [vmem:[%s11 + $0x28] sm:$0xff]
  %v4732 = vld [vmem:[%s11 + $0x30] sm:$0xff]
  %v4733 = vld [vmem:[%s11 + $0x38] sm:$0xff]
  %v4734 = vld [vmem:[%s11 + $0x40] sm:$0xff]
  %v4735 = vld [vmem:[%s11 + $0x48] sm:$0xff]
  %v4736 = vld [vmem:[%s11 + $0x50] sm:$0xff]
  %v4737 = vld [vmem:[%s11 + $0x58] sm:$0xff]
  %v4738 = vld [vmem:[%s11 + $0x60] sm:$0xff]
  %v4739 = vld [vmem:[%s11 + $0x68] sm:$0xff]
  %v4740 = vld [vmem:[%s11 + $0x70] sm:$0xff]
  %v4741 = vld [vmem:[%s11 + $0x78] sm:$0xff]
  %v4742 = vld [vmem:[%s11 + $0x80] sm:$0xff]
  %v4743 = vld [vmem:[%s11 + $0x88] sm:$0xff]
  %v4744 = vld [vmem:[%s11 + $0x90] sm:$0xff]
  %v4745 = vld [vmem:[%s11 + $0x98] sm:$0xff]
  %v4746 = vld [vmem:[%s11 + $0xa0] sm:$0xff]
  %v4747 = vld [vmem:[%s11 + $0xa8] sm:$0xff]
  %v4748 = vld [vmem:[%s11 + $0xb0] sm:$0xff]
  %v4749 = vld [vmem:[%s11 + $0xb8] sm:$0xff]
  %v4750 = vld [vmem:[%s11 + $0xc0] sm:$0xff]
  %v4751 = vld [vmem:[%s11 + $0xc8] sm:$0xff]
  %v4752 = vld [vmem:[%s11 + $0xd0] sm:$0xff]
  %v4753 = vld [vmem:[%s11 + $0xd8] sm:$0xff]
  %v4754 = vld [vmem:[%s11 + $0xe0] sm:$0xff]
  %v4755 = vld [vmem:[%s11 + $0xe8] sm:$0xff]
  %v4756 = vld [vmem:[%s11 + $0xf0] sm:$0xff]
  %v4757 = vld [vmem:[%s11 + $0xf8] sm:$0xff]
  %v4790 = vunpack.c.l.b16 %v4726
  %v4791 = vunpack.c.h.b16 %v4726
  %v4792 = vunpack.c.l.b16 %v4727
  %v4793 = vunpack.c.h.b16 %v4727
  %v4794 = vunpack.c.l.b16 %v4728
  %v4795 = vunpack.c.h.b16 %v4728
  %v4796 = vunpack.c.l.b16 %v4729
  %v4797 = vunpack.c.h.b16 %v4729
  %v4798 = vunpack.c.l.b16 %v4730
  %v4799 = vunpack.c.h.b16 %v4730
  %v4800 = vunpack.c.l.b16 %v4731
  %v4801 = vunpack.c.h.b16 %v4731
  %v4802 = vunpack.c.l.b16 %v4732
  %v4803 = vunpack.c.h.b16 %v4732
  %v4804 = vunpack.c.l.b16 %v4733
  %v4805 = vunpack.c.h.b16 %v4733
  %v4806 = vunpack.c.l.b16 %v4734
  %v4807 = vunpack.c.h.b16 %v4734
  %v4808 = vunpack.c.l.b16 %v4735
  %v4809 = vunpack.c.h.b16 %v4735
  %v4810 = vunpack.c.l.b16 %v4736
  %v4811 = vunpack.c.h.b16 %v4736
  %v4812 = vunpack.c.l.b16 %v4737
  %v4813 = vunpack.c.h.b16 %v4737
  %v4814 = vunpack.c.l.b16 %v4738
  %v4815 = vunpack.c.h.b16 %v4738
  %v4816 = vunpack.c.l.b16 %v4739
  %v4817 = vunpack.c.h.b16 %v4739
  %v4818 = vunpack.c.l.b16 %v4740
  %v4819 = vunpack.c.h.b16 %v4740
  %v4820 = vunpack.c.l.b16 %v4741
  %v4821 = vunpack.c.h.b16 %v4741
  %v4822 = vunpack.c.l.b16 %v4742
  %v4823 = vunpack.c.h.b16 %v4742
  %v4824 = vunpack.c.l.b16 %v4743
  %v4825 = vunpack.c.h.b16 %v4743
  %v4826 = vunpack.c.l.b16 %v4744
  %v4827 = vunpack.c.h.b16 %v4744
  %v4828 = vunpack.c.l.b16 %v4745
  %v4829 = vunpack.c.h.b16 %v4745
  %v4830 = vunpack.c.l.b16 %v4746
  %v4831 = vunpack.c.h.b16 %v4746
  %v4832 = vunpack.c.l.b16 %v4747
  %v4833 = vunpack.c.h.b16 %v4747
  %v4834 = vunpack.c.l.b16 %v4748
  %v4835 = vunpack.c.h.b16 %v4748
  %v4836 = vunpack.c.l.b16 %v4749
  %v4837 = vunpack.c.h.b16 %v4749
  %v4838 = vunpack.c.l.b16 %v4750
  %v4839 = vunpack.c.h.b16 %v4750
  %v4840 = vunpack.c.l.b16 %v4751
  %v4841 = vunpack.c.h.b16 %v4751
  %v4842 = vunpack.c.l.b16 %v4752
  %v4843 = vunpack.c.h.b16 %v4752
  %v4844 = vunpack.c.l.b16 %v4753
  %v4845 = vunpack.c.h.b16 %v4753
  %v4846 = vunpack.c.l.b16 %v4754
  %v4847 = vunpack.c.h.b16 %v4754
  %v4848 = vunpack.c.l.b16 %v4755
  %v4849 = vunpack.c.h.b16 %v4755
  %v4850 = vunpack.c.l.b16 %v4756
  %v4851 = vunpack.c.h.b16 %v4756
  %v4852 = vunpack.c.l.b16 %v4757
  %v4853 = vunpack.c.h.b16 %v4757
  %v4854 = vpack.c.b16 %v4792, %v4790
  %v4855 = vpack.c.b16 %v4793, %v4791
  %v4856 = vpack.c.b16 %v4796, %v4794
  %v4857 = vpack.c.b16 %v4797, %v4795
  %v4858 = vpack.c.b16 %v4800, %v4798
  %v4859 = vpack.c.b16 %v4801, %v4799
  %v4860 = vpack.c.b16 %v4804, %v4802
  %v4861 = vpack.c.b16 %v4805, %v4803
  %v4862 = vpack.c.b16 %v4808, %v4806
  %v4863 = vpack.c.b16 %v4809, %v4807
  %v4864 = vpack.c.b16 %v4812, %v4810
  %v4865 = vpack.c.b16 %v4813, %v4811
  %v4866 = vpack.c.b16 %v4816, %v4814
  %v4867 = vpack.c.b16 %v4817, %v4815
  %v4868 = vpack.c.b16 %v4820, %v4818
  %v4869 = vpack.c.b16 %v4821, %v4819
  %v4870 = vpack.c.b16 %v4824, %v4822
  %v4871 = vpack.c.b16 %v4825, %v4823
  %v4872 = vpack.c.b16 %v4828, %v4826
  %v4873 = vpack.c.b16 %v4829, %v4827
  %v4874 = vpack.c.b16 %v4832, %v4830
  %v4875 = vpack.c.b16 %v4833, %v4831
  %v4876 = vpack.c.b16 %v4836, %v4834
  %v4877 = vpack.c.b16 %v4837, %v4835
  %v4878 = vpack.c.b16 %v4840, %v4838
  %v4879 = vpack.c.b16 %v4841, %v4839
  %v4880 = vpack.c.b16 %v4844, %v4842
  %v4881 = vpack.c.b16 %v4845, %v4843
  %v4882 = vpack.c.b16 %v4848, %v4846
  %v4883 = vpack.c.b16 %v4849, %v4847
  %v4884 = vpack.c.b16 %v4852, %v4850
  %v4885 = vpack.c.b16 %v4853, %v4851
  %4918 = vmatprep.subr.bf16.mxu0 %v4869
  %4919 = vmatpush1.bf16.msra.mxu0 %v4868
  %4920 = vmatprep.subr.bf16.mxu0 %v4867
  %4921 = vmatpush1.bf16.msra.mxu0 %v4866
  %4922 = vmatprep.subr.bf16.mxu0 %v4865
  %4923 = vmatpush1.bf16.msra.mxu0 %v4864
  %4924 = vmatprep.subr.bf16.mxu0 %v4863
  %4925 = vmatpush1.bf16.msra.mxu0 %v4862
  %4926 = vmatprep.subr.bf16.mxu0 %v4861
  %4927 = vmatpush1.bf16.msra.mxu0 %v4860
  %4928 = vmatprep.subr.bf16.mxu0 %v4859
  %4929 = vmatpush1.bf16.msra.mxu0 %v4858
  %4930 = vmatprep.subr.bf16.mxu0 %v4857
  %4931 = vmatpush1.bf16.msra.mxu0 %v4856
  %4932 = vmatprep.subr.bf16.mxu0 %v4855
  %4933 = vmatpush1.bf16.msra.mxu0 %v4854
  %4934 = vmatprep.subr.bf16.mxu0 %v4885
  %4935 = vmatpush2.bf16.msra.mxu0 %v4884
  %4936 = vmatprep.subr.bf16.mxu0 %v4883
  %4937 = vmatpush2.bf16.msra.mxu0 %v4882
  %4938 = vmatprep.subr.bf16.mxu0 %v4881
  %4939 = vmatpush2.bf16.msra.mxu0 %v4880
  %4940 = vmatprep.subr.bf16.mxu0 %v4879
  %4941 = vmatpush2.bf16.msra.mxu0 %v4878
  %4942 = vmatprep.subr.bf16.mxu0 %v4877
  %4943 = vmatpush2.bf16.msra.mxu0 %v4876
  %4944 = vmatprep.subr.bf16.mxu0 %v4875
  %4945 = vmatpush2.bf16.msra.mxu0 %v4874
  %4946 = vmatprep.subr.bf16.mxu0 %v4873
  %4947 = vmatpush2.bf16.msra.mxu0 %v4872
  %4948 = vmatprep.subr.bf16.mxu0 %v4871
  %4949 = vmatpush2.bf16.msra.mxu0 %v4870
  %4950 = vmatprep.mubr.bf16.mxu0 %v4719
  %4951 = vmatmul.mubr.bf16.gmra.mxu0 %v4718
  %v4952 = vpop.f32.mrf.mxu0
  %v4953 = vadd.f32 0.0, %v4952
  %v4954 = vpop.f32.mrf.mxu0
  %v4955 = vadd.f32 0.0, %v4954
  %v4956 = vpop.f32.mrf.mxu0
  %v4957 = vadd.f32 0.0, %v4956
  %v4958 = vpop.f32.mrf.mxu0
  %v4959 = vadd.f32 0.0, %v4958
  %4960 = vmatprep.mubr.bf16.mxu0 %v4721
  %4961 = vmatmul.mubr.bf16.gmra.mxu0 %v4720
  %v4962 = vpop.f32.mrf.mxu0
  %v4963 = vadd.f32 0.0, %v4962
  %v4964 = vpop.f32.mrf.mxu0
  %v4965 = vadd.f32 0.0, %v4964
  %v4966 = vpop.f32.mrf.mxu0
  %v4967 = vadd.f32 0.0, %v4966
  %v4968 = vpop.f32.mrf.mxu0
  %v4969 = vadd.f32 0.0, %v4968
  %4970 = vmatprep.mubr.bf16.mxu0 %v4723
  %4971 = vmatmul.mubr.bf16.gmra.mxu0 %v4722
  %v4972 = vpop.f32.mrf.mxu0
  %v4973 = vadd.f32 0.0, %v4972
  %v4974 = vpop.f32.mrf.mxu0
  %v4975 = vadd.f32 0.0, %v4974
  %v4976 = vpop.f32.mrf.mxu0
  %v4977 = vadd.f32 0.0, %v4976
  %v4978 = vpop.f32.mrf.mxu0
  %v4979 = vadd.f32 0.0, %v4978
  %4980 = vmatprep.mubr.bf16.mxu0 %v4725
  %4981 = vmatmul.mubr.bf16.gmra.mxu0 %v4724
  %v4982 = vpop.f32.mrf.mxu0
  %v4983 = vadd.f32 0.0, %v4982
  %v4984 = vpop.f32.mrf.mxu0
  %v4985 = vadd.f32 0.0, %v4984
  %v4986 = vpop.f32.mrf.mxu0
  %v4987 = vadd.f32 0.0, %v4986
  %v4988 = vpop.f32.mrf.mxu0
  %v4989 = vadd.f32 0.0, %v4988
  %4990 = vdwg.mxu0
  %v4991 = vld [vmem:[%s12] sm:$0xf]
  %v4992 = vpack.c.bf16 %v4957, %v4953
  %v4993 = vpack.c.bf16 %v4959, %v4955
  %v4994 = vpack.c.bf16 %v4967, %v4963
  %v4995 = vpack.c.bf16 %v4969, %v4965
  %v4996 = vpack.c.bf16 %v4977, %v4973
  %v4997 = vpack.c.bf16 %v4979, %v4975
  %v4998 = vpack.c.bf16 %v4987, %v4983
  %v4999 = vpack.c.bf16 %v4989, %v4985
  %v5001 = vsel %vm4195, %v4991, 0
  %5003 = vmatprep.subr.bf16.mxu0 0
  %5004 = vmatpush1.bf16.msra.mxu0 0
  %5005 = vmatprep.subr.bf16.mxu0 0
  %5006 = vmatpush1.bf16.msra.mxu0 0
  %5007 = vmatprep.subr.bf16.mxu0 0
  %5008 = vmatpush1.bf16.msra.mxu0 0
  %5009 = vmatprep.subr.bf16.mxu0 0
  %5010 = vmatpush1.bf16.msra.mxu0 0
  %5011 = vmatprep.subr.bf16.mxu0 %v4999
  %5012 = vmatpush1.bf16.msra.mxu0 %v4998
  %5013 = vmatprep.subr.bf16.mxu0 %v4997
  %5014 = vmatpush1.bf16.msra.mxu0 %v4996
  %5015 = vmatprep.subr.bf16.mxu0 %v4995
  %5016 = vmatpush1.bf16.msra.mxu0 %v4994
  %5017 = vmatprep.subr.bf16.mxu0 %v4993
  %5018 = vmatpush1.bf16.msra.mxu0 %v4992
  %5019 = vmatprep.subr.bf16.mxu0 0
  %5020 = vmatpush2.bf16.msra.mxu0 0
  %5021 = vmatprep.subr.bf16.mxu0 0
  %5022 = vmatpush2.bf16.msra.mxu0 0
  %5023 = vmatprep.subr.bf16.mxu0 0
  %5024 = vmatpush2.bf16.msra.mxu0 0
  %5025 = vmatprep.subr.bf16.mxu0 0
  %5026 = vmatpush2.bf16.msra.mxu0 0
  %5027 = vmatprep.subr.bf16.mxu0 0
  %5028 = vmatpush2.bf16.msra.mxu0 0
  %5029 = vmatprep.subr.bf16.mxu0 0
  %5030 = vmatpush2.bf16.msra.mxu0 0
  %5031 = vmatprep.subr.bf16.mxu0 0
  %5032 = vmatpush2.bf16.msra.mxu0 0
  %5033 = vmatprep.subr.bf16.mxu0 0
  %5034 = vmatpush2.bf16.msra.mxu0 0
  %5035 = vmatprep.mubr.bf16.mxu0 0
  %5036 = vmatmul.mubr.bf16.gmra.mxu0 %v5001
  %v5037 = vpop.f32.mrf.mxu0
  %v5038 = vadd.f32 0.0, %v5037
  %v5039 = vpop.f32.mrf.mxu0
  %v5040 = vadd.f32 0.0, %v5039
  %v5041 = vpop.f32.mrf.mxu0
  %v5042 = vpop.f32.mrf.mxu0
  %5043 = vdwg.mxu0
  %v5044 = vpack.c.bf16 %v5038, %v5038
  %v5045 = vpack.c.bf16 %v5040, %v5040
  %v5046 = vld [vmem:[%s13] sm:$0xff]
  %v5047 = vld [vmem:[%s13 + $0x8] sm:$0xff]
  %v5048 = vld [vmem:[%s13 + $0x10] sm:$0xff]
  %v5049 = vld [vmem:[%s13 + $0x18] sm:$0xff]
  %v5050 = vld [vmem:[%s13 + $0x20] sm:$0xff]
  %v5051 = vld [vmem:[%s13 + $0x28] sm:$0xff]
  %v5052 = vld [vmem:[%s13 + $0x30] sm:$0xff]
  %v5053 = vld [vmem:[%s13 + $0x38] sm:$0xff]
  %v5054 = vld [vmem:[%s13 + $0x40] sm:$0xff]
  %v5055 = vld [vmem:[%s13 + $0x48] sm:$0xff]
  %v5056 = vld [vmem:[%s13 + $0x50] sm:$0xff]
  %v5057 = vld [vmem:[%s13 + $0x58] sm:$0xff]
  %v5058 = vld [vmem:[%s13 + $0x60] sm:$0xff]
  %v5059 = vld [vmem:[%s13 + $0x68] sm:$0xff]
  %v5060 = vld [vmem:[%s13 + $0x70] sm:$0xff]
  %v5061 = vld [vmem:[%s13 + $0x78] sm:$0xff]
  %v5062 = vld [vmem:[%s13 + $0x80] sm:$0xff]
  %v5063 = vld [vmem:[%s13 + $0x88] sm:$0xff]
  %v5064 = vld [vmem:[%s13 + $0x90] sm:$0xff]
  %v5065 = vld [vmem:[%s13 + $0x98] sm:$0xff]
  %v5066 = vld [vmem:[%s13 + $0xa0] sm:$0xff]
  %v5067 = vld [vmem:[%s13 + $0xa8] sm:$0xff]
  %v5068 = vld [vmem:[%s13 + $0xb0] sm:$0xff]
  %v5069 = vld [vmem:[%s13 + $0xb8] sm:$0xff]
  %v5070 = vld [vmem:[%s13 + $0xc0] sm:$0xff]
  %v5071 = vld [vmem:[%s13 + $0xc8] sm:$0xff]
  %v5072 = vld [vmem:[%s13 + $0xd0] sm:$0xff]
  %v5073 = vld [vmem:[%s13 + $0xd8] sm:$0xff]
  %v5074 = vld [vmem:[%s13 + $0xe0] sm:$0xff]
  %v5075 = vld [vmem:[%s13 + $0xe8] sm:$0xff]
  %v5076 = vld [vmem:[%s13 + $0xf0] sm:$0xff]
  %v5077 = vld [vmem:[%s13 + $0xf8] sm:$0xff]
  %v5110 = vunpack.c.l.b16 %v5046
  %v5111 = vunpack.c.h.b16 %v5046
  %v5112 = vunpack.c.l.b16 %v5047
  %v5113 = vunpack.c.h.b16 %v5047
  %v5114 = vunpack.c.l.b16 %v5048
  %v5115 = vunpack.c.h.b16 %v5048
  %v5116 = vunpack.c.l.b16 %v5049
  %v5117 = vunpack.c.h.b16 %v5049
  %v5118 = vunpack.c.l.b16 %v5050
  %v5119 = vunpack.c.h.b16 %v5050
  %v5120 = vunpack.c.l.b16 %v5051
  %v5121 = vunpack.c.h.b16 %v5051
  %v5122 = vunpack.c.l.b16 %v5052
  %v5123 = vunpack.c.h.b16 %v5052
  %v5124 = vunpack.c.l.b16 %v5053
  %v5125 = vunpack.c.h.b16 %v5053
  %v5126 = vunpack.c.l.b16 %v5054
  %v5127 = vunpack.c.h.b16 %v5054
  %v5128 = vunpack.c.l.b16 %v5055
  %v5129 = vunpack.c.h.b16 %v5055
  %v5130 = vunpack.c.l.b16 %v5056
  %v5131 = vunpack.c.h.b16 %v5056
  %v5132 = vunpack.c.l.b16 %v5057
  %v5133 = vunpack.c.h.b16 %v5057
  %v5134 = vunpack.c.l.b16 %v5058
  %v5135 = vunpack.c.h.b16 %v5058
  %v5136 = vunpack.c.l.b16 %v5059
  %v5137 = vunpack.c.h.b16 %v5059
  %v5138 = vunpack.c.l.b16 %v5060
  %v5139 = vunpack.c.h.b16 %v5060
  %v5140 = vunpack.c.l.b16 %v5061
  %v5141 = vunpack.c.h.b16 %v5061
  %v5142 = vunpack.c.l.b16 %v5062
  %v5143 = vunpack.c.h.b16 %v5062
  %v5144 = vunpack.c.l.b16 %v5063
  %v5145 = vunpack.c.h.b16 %v5063
  %v5146 = vunpack.c.l.b16 %v5064
  %v5147 = vunpack.c.h.b16 %v5064
  %v5148 = vunpack.c.l.b16 %v5065
  %v5149 = vunpack.c.h.b16 %v5065
  %v5150 = vunpack.c.l.b16 %v5066
  %v5151 = vunpack.c.h.b16 %v5066
  %v5152 = vunpack.c.l.b16 %v5067
  %v5153 = vunpack.c.h.b16 %v5067
  %v5154 = vunpack.c.l.b16 %v5068
  %v5155 = vunpack.c.h.b16 %v5068
  %v5156 = vunpack.c.l.b16 %v5069
  %v5157 = vunpack.c.h.b16 %v5069
  %v5158 = vunpack.c.l.b16 %v5070
  %v5159 = vunpack.c.h.b16 %v5070
  %v5160 = vunpack.c.l.b16 %v5071
  %v5161 = vunpack.c.h.b16 %v5071
  %v5162 = vunpack.c.l.b16 %v5072
  %v5163 = vunpack.c.h.b16 %v5072
  %v5164 = vunpack.c.l.b16 %v5073
  %v5165 = vunpack.c.h.b16 %v5073
  %v5166 = vunpack.c.l.b16 %v5074
  %v5167 = vunpack.c.h.b16 %v5074
  %v5168 = vunpack.c.l.b16 %v5075
  %v5169 = vunpack.c.h.b16 %v5075
  %v5170 = vunpack.c.l.b16 %v5076
  %v5171 = vunpack.c.h.b16 %v5076
  %v5172 = vunpack.c.l.b16 %v5077
  %v5173 = vunpack.c.h.b16 %v5077
  %v5174 = vpack.c.b16 %v5112, %v5110
  %v5175 = vpack.c.b16 %v5113, %v5111
  %v5176 = vpack.c.b16 %v5116, %v5114
  %v5177 = vpack.c.b16 %v5117, %v5115
  %v5178 = vpack.c.b16 %v5120, %v5118
  %v5179 = vpack.c.b16 %v5121, %v5119
  %v5180 = vpack.c.b16 %v5124, %v5122
  %v5181 = vpack.c.b16 %v5125, %v5123
  %v5182 = vpack.c.b16 %v5128, %v5126
  %v5183 = vpack.c.b16 %v5129, %v5127
  %v5184 = vpack.c.b16 %v5132, %v5130
  %v5185 = vpack.c.b16 %v5133, %v5131
  %v5186 = vpack.c.b16 %v5136, %v5134
  %v5187 = vpack.c.b16 %v5137, %v5135
  %v5188 = vpack.c.b16 %v5140, %v5138
  %v5189 = vpack.c.b16 %v5141, %v5139
  %v5190 = vpack.c.b16 %v5144, %v5142
  %v5191 = vpack.c.b16 %v5145, %v5143
  %v5192 = vpack.c.b16 %v5148, %v5146
  %v5193 = vpack.c.b16 %v5149, %v5147
  %v5194 = vpack.c.b16 %v5152, %v5150
  %v5195 = vpack.c.b16 %v5153, %v5151
  %v5196 = vpack.c.b16 %v5156, %v5154
  %v5197 = vpack.c.b16 %v5157, %v5155
  %v5198 = vpack.c.b16 %v5160, %v5158
  %v5199 = vpack.c.b16 %v5161, %v5159
  %v5200 = vpack.c.b16 %v5164, %v5162
  %v5201 = vpack.c.b16 %v5165, %v5163
  %v5202 = vpack.c.b16 %v5168, %v5166
  %v5203 = vpack.c.b16 %v5169, %v5167
  %v5204 = vpack.c.b16 %v5172, %v5170
  %v5205 = vpack.c.b16 %v5173, %v5171
  %5238 = vmatprep.subr.bf16.mxu0 %v5189
  %5239 = vmatpush1.bf16.msra.mxu0 %v5188
  %5240 = vmatprep.subr.bf16.mxu0 %v5187
  %5241 = vmatpush1.bf16.msra.mxu0 %v5186
  %5242 = vmatprep.subr.bf16.mxu0 %v5185
  %5243 = vmatpush1.bf16.msra.mxu0 %v5184
  %5244 = vmatprep.subr.bf16.mxu0 %v5183
  %5245 = vmatpush1.bf16.msra.mxu0 %v5182
  %5246 = vmatprep.subr.bf16.mxu0 %v5181
  %5247 = vmatpush1.bf16.msra.mxu0 %v5180
  %5248 = vmatprep.subr.bf16.mxu0 %v5179
  %5249 = vmatpush1.bf16.msra.mxu0 %v5178
  %5250 = vmatprep.subr.bf16.mxu0 %v5177
  %5251 = vmatpush1.bf16.msra.mxu0 %v5176
  %5252 = vmatprep.subr.bf16.mxu0 %v5175
  %5253 = vmatpush1.bf16.msra.mxu0 %v5174
  %5254 = vmatprep.subr.bf16.mxu0 %v5205
  %5255 = vmatpush2.bf16.msra.mxu0 %v5204
  %5256 = vmatprep.subr.bf16.mxu0 %v5203
  %5257 = vmatpush2.bf16.msra.mxu0 %v5202
  %5258 = vmatprep.subr.bf16.mxu0 %v5201
  %5259 = vmatpush2.bf16.msra.mxu0 %v5200
  %5260 = vmatprep.subr.bf16.mxu0 %v5199
  %5261 = vmatpush2.bf16.msra.mxu0 %v5198
  %5262 = vmatprep.subr.bf16.mxu0 %v5197
  %5263 = vmatpush2.bf16.msra.mxu0 %v5196
  %5264 = vmatprep.subr.bf16.mxu0 %v5195
  %5265 = vmatpush2.bf16.msra.mxu0 %v5194
  %5266 = vmatprep.subr.bf16.mxu0 %v5193
  %5267 = vmatpush2.bf16.msra.mxu0 %v5192
  %5268 = vmatprep.subr.bf16.mxu0 %v5191
  %5269 = vmatpush2.bf16.msra.mxu0 %v5190
  %5270 = vmatprep.mubr.bf16.mxu0 %v5045
  %5271 = vmatmul.mubr.bf16.gmra.mxu0 %v5044
  %v5272 = vpop.f32.mrf.mxu0
  %v5273 = vadd.f32 0.0, %v5272
  %v5274 = vpop.f32.mrf.mxu0
  %v5275 = vadd.f32 0.0, %v5274
  %v5276 = vpop.f32.mrf.mxu0
  %v5277 = vpop.f32.mrf.mxu0
  %5278 = vdwg.mxu0
  %v5279 = vmul.f32 %v5273, 0.01
  %v5280 = vmul.f32 %v5275, 0.01
  %5281 = vst [vmem:[%s14] sm:$0xff] %v5279
  %5282 = vst [vmem:[%s14 + $0x8] sm:$0xff] %v5280
  // Predicated region
  $region58: #{deep_model_forward.1} parent=0 // pred_check
    _
  $region59: #{deep_model_forward.1} parent=0 // pred_check_branch
    %5284 = sbr.rel (0) target = $region61
  $region60: #{deep_model_forward.1} parent=0 // pred_region
    _
  $region61: #{deep_model_forward.1} parent=0 // pred_fallthru
    _
  // Predicated region
  $region62: #{deep_model_forward.1} parent=0 // pred_check
    _
  $region63: #{deep_model_forward.1} parent=0 // pred_check_branch
    %5286 = sbr.rel (0) target = $region65
  $region64: #{deep_model_forward.1} parent=0 // pred_region
    _
  $region65: #{deep_model_forward.1} parent=0 // pred_fallthru
    _

</llo_original>
